<compile_context>
chip_gen: v5e
topology: v5e:2x2
jax: 0.10.0
libtpu: 0.0.40
codegen_flags: <defaults>
</compile_context>

<pallas_src>
import functools

import jax
import jax.numpy as jnp
from jax.experimental import pallas as pl
from jax.experimental.pallas import tpu as pltpu


# ----------------------------------------------------------------------------
# Static layout of the packed (1, P) f32 vector holding every bias / gamma /
# beta.  Each slot is rounded up to a 128-lane boundary so every in-kernel
# slice starts on a vreg lane boundary.
# ----------------------------------------------------------------------------

def _vec_layout(d_in, nhid):
    del nhid  # h1 bias slot is stored 128-wide (zero padded) regardless of nhid
    sizes = (
        ("e0b", 256), ("e0g", 256), ("e0bt", 256),
        ("e1b", 128), ("e1g", 128), ("e1bt", 128),
        ("h0b", 128), ("h0g", 128), ("h0bt", 128),
        ("h1b", 128),                       # [mean | logvar] bias, zero padded
        ("d0b", 64), ("d0g", 64), ("d0bt", 64),
        ("d1b", 128), ("d1g", 128), ("d1bt", 128),
        ("d2b", 256), ("d2g", 256), ("d2bt", 256),
        ("d3b", d_in),
    )
    layout, off = {}, 0
    for name, n in sizes:
        layout[name] = (off, n)
        off += -(-n // 128) * 128           # round each slot up to 128 lanes
    return layout, off


# ----------------------------------------------------------------------------
# Trace-time helpers (operate on values inside the kernel)
# ----------------------------------------------------------------------------

def _dot(x, w):
    # bf16 x bf16 -> f32 accumulation on the MXU
    return jnp.dot(x.astype(jnp.bfloat16), w, preferred_element_type=jnp.float32)


def _bn_relu(h, g, beta):
    # BatchNorm1d (training mode: biased batch statistics) + ReLU, all in f32
    mu = jnp.mean(h, axis=0, keepdims=True)
    var = jnp.mean((h - mu) ** 2, axis=0, keepdims=True)
    hn = (h - mu) * jax.lax.rsqrt(var + 1e-5)
    return jnp.maximum(hn * g + beta, 0.0)


# ----------------------------------------------------------------------------
# The single fused forward kernel
# ----------------------------------------------------------------------------

def _cvae_fused_kernel(
    layout,
    xf_ref, yid_ref, eps_ref, emb_ref, vec_ref,
    e0w_ref, e1w_ref, h0we_ref, h0wy_ref, h1w_ref,
    d0wz_ref, d0wy_ref, d1w_ref, d2w_ref, d3w_hbm_ref,
    xr_ref, stats_ref,
    d3w_vmem, d3w_sem,
):
    # Overlap the biggest weight DMA (d3w, 512 KB bf16) with encoder compute.
    d3w_copy = pltpu.make_async_copy(d3w_hbm_ref, d3w_vmem, d3w_sem)
    d3w_copy.start()

    def vec(name):
        off, n = layout[name]
        return vec_ref[:, off:off + n]      # static slice -> zero-cost view

    xf = xf_ref[...]
    eps = eps_ref[...]
    nhid = eps.shape[1]
    b = yid_ref.shape[0]
    nclass = emb_ref.shape[0]

    # ---- label embedding gather fused in-kernel as a one-hot matmul ----
    onehot = (jax.lax.broadcasted_iota(jnp.int32, (b, nclass), 1)
              == yid_ref[...]).astype(jnp.float32)
    y = jnp.dot(onehot, emb_ref[...], preferred_element_type=jnp.float32)

    # ---- encoder trunk: (Linear + BN + ReLU) x 2, all resident in VMEM ----
    e = _bn_relu(_dot(xf, e0w_ref[...]) + vec("e0b"), vec("e0g"), vec("e0bt"))
    e = _bn_relu(_dot(e, e1w_ref[...]) + vec("e1b"), vec("e1g"), vec("e1bt"))

    # ---- merged mean/logvar head; concat(e, y) replaced by split-K dots ----
    h = _dot(e, h0we_ref[...]) + _dot(y, h0wy_ref[...]) + vec("h0b")
    h = _bn_relu(h, vec("h0g"), vec("h0bt"))                         # (B, 128)
    stats = _dot(h, h1w_ref[...]) + vec("h1b")        # (B, 128) lane-dense slab
    mean = stats[:, :nhid]
    logvar = stats[:, nhid:2 * nhid]

    # ---- reparameterization (module semantics: sigma = 0.5 * exp(logvar)) ----
    z = mean + eps * (0.5 * jnp.exp(logvar))

    # ---- decoder; concat(z, y) replaced by split-K dots ----
    d = _dot(z, d0wz_ref[...]) + _dot(y, d0wy_ref[...]) + vec("d0b")
    d = _bn_relu(d, vec("d0g"), vec("d0bt"))                         # (B, 64)
    d = _bn_relu(_dot(d, d1w_ref[...]) + vec("d1b"), vec("d1g"), vec("d1bt"))
    d = _bn_relu(_dot(d, d2w_ref[...]) + vec("d2b"), vec("d2g"), vec("d2bt"))

    d3w_copy.wait()                                   # d3w now in VMEM scratch
    xr = jax.nn.sigmoid(_dot(d, d3w_vmem[...]) + vec("d3b"))         # (B, d_in)

    xr_ref[...] = xr.astype(xr_ref.dtype)
    stats_ref[...] = stats.astype(stats_ref.dtype)


_WEIGHT_ORDER = ("e0w", "e1w", "h0we", "h0wy", "h1w",
                 "d0wz", "d0wy", "d1w", "d2w", "d3w")


# ----------------------------------------------------------------------------
# Parameter construction (PyTorch-style default init, merged / packed / bf16)
# ----------------------------------------------------------------------------

def _init_linear(key, fan_in, fan_out):
    kw, kb = jax.random.split(key)
    bound = 1.0 / jnp.sqrt(fan_in)
    w = jax.random.uniform(kw, (fan_in, fan_out), jnp.float32, -bound, bound)
    b = jax.random.uniform(kb, (1, fan_out), jnp.float32, -bound, bound)
    return w, b


def init_cvae_params(key, shape, nclass, nhid=16, ncond=16):
    c, h, w = shape
    d_in = c * h * w
    keys = jax.random.split(key, 11)

    emb = jax.random.normal(keys[0], (nclass, ncond), jnp.float32)

    e0w, e0b = _init_linear(keys[1], d_in, 256)
    e1w, e1b = _init_linear(keys[2], 256, 128)
    m0w, m0b = _init_linear(keys[3], 128 + ncond, 64)
    m1w, m1b = _init_linear(keys[4], 64, nhid)
    l0w, l0b = _init_linear(keys[5], 128 + ncond, 64)
    l1w, l1b = _init_linear(keys[6], 64, nhid)
    d0w, d0b = _init_linear(keys[7], nhid + ncond, 64)
    d1w, d1b = _init_linear(keys[8], 64, 128)
    d2w, d2b = _init_linear(keys[9], 128, 256)
    d3w, d3b = _init_linear(keys[10], 256, d_in)

    # Merge mean/logvar stage 0 along N; split along K for (e, y).
    h0w = jnp.concatenate([m0w, l0w], axis=1)                # (128+ncond, 128)
    h0b = jnp.concatenate([m0b, l0b], axis=1)                # (1, 128)
    # Merge stage 1 block-diagonally, padded to 128 output lanes.
    h1w = jnp.zeros((128, 128), jnp.float32)
    h1w = h1w.at[:64, :nhid].set(m1w).at[64:, nhid:2 * nhid].set(l1w)
    h1b = jnp.zeros((1, 128), jnp.float32)
    h1b = h1b.at[:, :nhid].set(m1b).at[:, nhid:2 * nhid].set(l1b)

    # Pack every bias / BN-gamma / BN-beta into one flat f32 vector.
    layout, total = _vec_layout(d_in, nhid)
    vec = jnp.zeros((1, total), jnp.float32)

    def put(v, name, val):
        off, n = layout[name]
        return v.at[:, off:off + n].set(val.reshape(1, n))

    ones = lambda n: jnp.ones((1, n), jnp.float32)
    for name, val in (
        ("e0b", e0b), ("e0g", ones(256)),
        ("e1b", e1b), ("e1g", ones(128)),
        ("h0b", h0b), ("h0g", ones(128)),
        ("h1b", h1b),
        ("d0b", d0b), ("d0g", ones(64)),
        ("d1b", d1b), ("d1g", ones(128)),
        ("d2b", d2b), ("d2g", ones(256)),
        ("d3b", d3b),
    ):
        vec = put(vec, name, val)
    # BN betas stay at their zero init (vec is zero-filled).

    bf16 = lambda a: a.astype(jnp.bfloat16)
    return dict(
        emb=emb, vec=vec,
        e0w=bf16(e0w), e1w=bf16(e1w),
        h0we=bf16(h0w[:128]), h0wy=bf16(h0w[128:]),
        h1w=bf16(h1w),
        d0wz=bf16(d0w[:nhid]), d0wy=bf16(d0w[nhid:]),
        d1w=bf16(d1w), d2w=bf16(d2w), d3w=bf16(d3w),
    )


# ----------------------------------------------------------------------------
# Forward pass: ONE fused pallas_call (embedding gather is inside the kernel)
# ----------------------------------------------------------------------------

@functools.partial(jax.jit, static_argnames=("shape",))
def cvae_forward(params, x, y_idx, eps, shape):
    c, h, w = shape
    b = x.shape[0]
    d_in = c * h * w
    nhid = eps.shape[1]
    layout, _ = _vec_layout(d_in, nhid)

    xf = x.reshape(b, d_in)                          # flatten NCHW -> (B, C*H*W)
    yid = y_idx.reshape(b, 1).astype(jnp.int32)      # labels, gathered in-kernel

    inputs = (xf, yid, eps, params["emb"], params["vec"]) + tuple(
        params[n] for n in _WEIGHT_ORDER)

    in_specs = [pl.BlockSpec(memory_space=pltpu.MemorySpace.VMEM)
                for _ in range(len(inputs) - 1)]
    in_specs.append(pl.BlockSpec(memory_space=pl.ANY))   # d3w stays in HBM

    xr, stats = pl.pallas_call(
        functools.partial(_cvae_fused_kernel, layout),
        out_shape=(
            jax.ShapeDtypeStruct((b, d_in), jnp.float32),
            jax.ShapeDtypeStruct((b, 128), jnp.float32),   # lane-dense stats slab
        ),
        in_specs=in_specs,
        out_specs=(pl.BlockSpec(memory_space=pltpu.MemorySpace.VMEM),
                   pl.BlockSpec(memory_space=pltpu.MemorySpace.VMEM)),
        scratch_shapes=[
            pltpu.VMEM((256, d_in), jnp.bfloat16),   # d3w landing buffer
            pltpu.SemaphoreType.DMA,                 # its completion semaphore
        ],
        compiler_params=pltpu.CompilerParams(
            vmem_limit_bytes=8 * 1024 * 1024,        # true footprint ~1.5 MB
        ),
    )(*inputs)

    mean = stats[:, :nhid]
    logvar = stats[:, nhid:2 * nhid]
    return xr.reshape(b, c, h, w), mean, logvar


# ----------------------------------------------------------------------------
# Pure-JAX reference (same bf16 operand rounding, f32 accumulation)
# ----------------------------------------------------------------------------

def _ref_forward(params, x, y_idx, eps, shape):
    c, h, w = shape
    b = x.shape[0]
    d_in = c * h * w
    nhid = eps.shape[1]
    layout, _ = _vec_layout(d_in, nhid)
    p = params

    def v(name):
        off, n = layout[name]
        return p["vec"][:, off:off + n]

    y = p["emb"][y_idx]
    xf = x.reshape(b, d_in)
    e = _bn_relu(_dot(xf, p["e0w"]) + v("e0b"), v("e0g"), v("e0bt"))
    e = _bn_relu(_dot(e, p["e1w"]) + v("e1b"), v("e1g"), v("e1bt"))
    hh = _bn_relu(_dot(e, p["h0we"]) + _dot(y, p["h0wy"]) + v("h0b"),
                  v("h0g"), v("h0bt"))
    stats = _dot(hh, p["h1w"]) + v("h1b")
    mean, logvar = stats[:, :nhid], stats[:, nhid:2 * nhid]
    z = mean + eps * (0.5 * jnp.exp(logvar))
    d = _bn_relu(_dot(z, p["d0wz"]) + _dot(y, p["d0wy"]) + v("d0b"),
                 v("d0g"), v("d0bt"))
    d = _bn_relu(_dot(d, p["d1w"]) + v("d1b"), v("d1g"), v("d1bt"))
    d = _bn_relu(_dot(d, p["d2w"]) + v("d2b"), v("d2g"), v("d2bt"))
    xr = jax.nn.sigmoid(_dot(d, p["d3w"]) + v("d3b")).reshape(b, c, h, w)
    return xr, mean, logvar


# ----------------------------------------------------------------------------
# Demo
# ----------------------------------------------------------------------------

if __name__ == "__main__":
    key = jax.random.PRNGKey(0)
    k_param, k_x, k_eps = jax.random.split(key, 3)

    shape = (4, 16, 16)   # (C, H, W)
    nclass = 10
    nhid = 16
    ncond = 16
    batch = 2

    params = init_cvae_params(k_param, shape, nclass, nhid=nhid, ncond=ncond)

    x = jax.random.normal(k_x, (batch,) + shape, jnp.float32)     # NCHW input
    y_idx = jnp.array([1, 3], dtype=jnp.int32)                    # class labels
    eps = jax.random.normal(k_eps, (batch, nhid), jnp.float32)    # reparam noise

    x_hat, mean, logvar = cvae_forward(params, x, y_idx, eps, shape)
    jax.block_until_ready((x_hat, mean, logvar))

    assert x_hat.shape == (batch,) + shape
    assert mean.shape == (batch, nhid)
    assert logvar.shape == (batch, nhid)
    assert bool(jnp.all(jnp.isfinite(x_hat)))

    # Correctness check against a pure-JAX reference (same bf16 rounding).
    xr_r, mean_r, lv_r = _ref_forward(params, x, y_idx, eps, shape)
    err = max(float(jnp.max(jnp.abs(x_hat - xr_r))),
              float(jnp.max(jnp.abs(mean - mean_r))),
              float(jnp.max(jnp.abs(logvar - lv_r))))
    assert err < 5e-2, f"mismatch vs reference: max abs err {err}"

    print("KERNEL_OK")
</pallas_src>

<mosaic_0001>
module attributes {stable_mosaic.version = 11 : i64} {
  func.func @_cvae_fused_kernel(%arg0: memref<2x1024xf32, #tpu.memory_space<vmem>>, %arg1: memref<2x1xi32, #tpu.memory_space<vmem>>, %arg2: memref<2x16xf32, #tpu.memory_space<vmem>>, %arg3: memref<10x16xf32, #tpu.memory_space<vmem>>, %arg4: memref<1x4224xf32, #tpu.memory_space<vmem>>, %arg5: memref<1024x256xbf16, #tpu.memory_space<vmem>>, %arg6: memref<256x128xbf16, #tpu.memory_space<vmem>>, %arg7: memref<128x128xbf16, #tpu.memory_space<vmem>>, %arg8: memref<16x128xbf16, #tpu.memory_space<vmem>>, %arg9: memref<128x128xbf16, #tpu.memory_space<vmem>>, %arg10: memref<16x64xbf16, #tpu.memory_space<vmem>>, %arg11: memref<16x64xbf16, #tpu.memory_space<vmem>>, %arg12: memref<64x128xbf16, #tpu.memory_space<vmem>>, %arg13: memref<128x256xbf16, #tpu.memory_space<vmem>>, %arg14: memref<256x1024xbf16, #tpu.memory_space<any>>, %arg15: memref<2x1024xf32, #tpu.memory_space<vmem>>, %arg16: memref<2x128xf32, #tpu.memory_space<vmem>>, %arg17: memref<256x1024xbf16, #tpu.memory_space<vmem>>, %arg18: memref<!tpu.dma_semaphore, #tpu.memory_space<semaphore_mem>>) attributes {dimension_semantics = [], scalar_prefetch = 0 : i64, scratch_operands = 2 : i64, tpu.core_type = #tpu.core_type<tc>} {
    tpu.enqueue_dma source(%arg14 : memref<256x1024xbf16, #tpu.memory_space<any>>) target(%arg17 : memref<256x1024xbf16, #tpu.memory_space<vmem>>) target_semaphore(%arg18 : memref<!tpu.dma_semaphore, #tpu.memory_space<semaphore_mem>>)
    %c0 = arith.constant 0 : index
    %c0_0 = arith.constant 0 : index
    %0 = vector.load %arg0[%c0, %c0_0] : memref<2x1024xf32, #tpu.memory_space<vmem>>, vector<2x1024xf32>
    %c0_1 = arith.constant 0 : index
    %c0_2 = arith.constant 0 : index
    %1 = vector.load %arg2[%c0_1, %c0_2] : memref<2x16xf32, #tpu.memory_space<vmem>>, vector<2x16xf32>
    %2 = tpu.iota {dimensions = array<i32: 1>} : vector<2x10xi32>
    %c0_3 = arith.constant 0 : index
    %c0_4 = arith.constant 0 : index
    %3 = vector.load %arg1[%c0_3, %c0_4] : memref<2x1xi32, #tpu.memory_space<vmem>>, vector<2x1xi32>
    %4 = vector.broadcast %3 : vector<2x1xi32> to vector<2x10xi32>
    %5 = arith.cmpi eq, %2, %4 : vector<2x10xi32>
    %6 = arith.extui %5 : vector<2x10xi1> to vector<2x10xi32>
    %7 = arith.sitofp %6 : vector<2x10xi32> to vector<2x10xf32>
    %c0_5 = arith.constant 0 : index
    %c0_6 = arith.constant 0 : index
    %8 = vector.load %arg3[%c0_5, %c0_6] : memref<10x16xf32, #tpu.memory_space<vmem>>, vector<10x16xf32>
    %cst = arith.constant dense<0.000000e+00> : vector<2x16xf32>
    %9 = tpu.matmul %7, %8, %cst {dimension_numbers = #tpu.dot_dimension_numbers<[1], [0], [0], [1], [0, 0, 1, 1], [], []>} : vector<2x10xf32>, vector<10x16xf32>, vector<2x16xf32> -> vector<2x16xf32>
    %c0_7 = arith.constant 0 : index
    %c0_8 = arith.constant 0 : index
    %10 = vector.load %arg5[%c0_7, %c0_8] : memref<1024x256xbf16, #tpu.memory_space<vmem>>, vector<1024x256xbf16>
    %11 = arith.truncf %0 : vector<2x1024xf32> to vector<2x1024xbf16>
    %cst_9 = arith.constant dense<0.000000e+00> : vector<2x256xf32>
    %12 = tpu.matmul %11, %10, %cst_9 {dimension_numbers = #tpu.dot_dimension_numbers<[1], [0], [0], [1], [0, 0, 1, 1], [], []>} : vector<2x1024xbf16>, vector<1024x256xbf16>, vector<2x256xf32> -> vector<2x256xf32>
    %c0_10 = arith.constant 0 : index
    %c0_11 = arith.constant 0 : index
    %13 = vector.load %arg4[%c0_10, %c0_11] : memref<1x4224xf32, #tpu.memory_space<vmem>>, vector<1x256xf32>
    %14 = vector.broadcast %13 : vector<1x256xf32> to vector<2x256xf32>
    %15 = arith.addf %12, %14 : vector<2x256xf32>
    %c0_12 = arith.constant 0 : index
    %c256 = arith.constant 256 : index
    %16 = vector.load %arg4[%c0_12, %c256] : memref<1x4224xf32, #tpu.memory_space<vmem>>, vector<1x256xf32>
    %c0_13 = arith.constant 0 : index
    %c512 = arith.constant 512 : index
    %17 = vector.load %arg4[%c0_13, %c512] : memref<1x4224xf32, #tpu.memory_space<vmem>>, vector<1x256xf32>
    %cst_14 = arith.constant dense<0.000000e+00> : vector<256xf32>
    %18 = vector.multi_reduction <add>, %15, %cst_14 [0] : vector<2x256xf32> to vector<256xf32>
    %19 = vector.shape_cast %18 : vector<256xf32> to vector<1x256xf32>
    %cst_15 = arith.constant 2.000000e+00 : f32
    %20 = vector.broadcast %cst_15 : f32 to vector<1x256xf32>
    %21 = arith.divf %19, %20 : vector<1x256xf32>
    %22 = vector.broadcast %21 : vector<1x256xf32> to vector<2x256xf32>
    %23 = arith.subf %15, %22 : vector<2x256xf32>
    %24 = arith.mulf %23, %23 : vector<2x256xf32>
    %cst_16 = arith.constant dense<0.000000e+00> : vector<256xf32>
    %25 = vector.multi_reduction <add>, %24, %cst_16 [0] : vector<2x256xf32> to vector<256xf32>
    %26 = vector.shape_cast %25 : vector<256xf32> to vector<1x256xf32>
    %cst_17 = arith.constant 2.000000e+00 : f32
    %27 = vector.broadcast %cst_17 : f32 to vector<1x256xf32>
    %28 = arith.divf %26, %27 : vector<1x256xf32>
    %29 = vector.broadcast %21 : vector<1x256xf32> to vector<2x256xf32>
    %30 = arith.subf %15, %29 : vector<2x256xf32>
    %cst_18 = arith.constant 9.99999974E-6 : f32
    %31 = vector.broadcast %cst_18 : f32 to vector<1x256xf32>
    %32 = arith.addf %28, %31 : vector<1x256xf32>
    %33 = math.rsqrt %32 : vector<1x256xf32>
    %34 = vector.broadcast %33 : vector<1x256xf32> to vector<2x256xf32>
    %35 = arith.mulf %30, %34 : vector<2x256xf32>
    %36 = vector.broadcast %16 : vector<1x256xf32> to vector<2x256xf32>
    %37 = arith.mulf %35, %36 : vector<2x256xf32>
    %38 = vector.broadcast %17 : vector<1x256xf32> to vector<2x256xf32>
    %39 = arith.addf %37, %38 : vector<2x256xf32>
    %cst_19 = arith.constant 0.000000e+00 : f32
    %40 = vector.broadcast %cst_19 : f32 to vector<2x256xf32>
    %41 = arith.maximumf %39, %40 : vector<2x256xf32>
    %c0_20 = arith.constant 0 : index
    %c0_21 = arith.constant 0 : index
    %42 = vector.load %arg6[%c0_20, %c0_21] : memref<256x128xbf16, #tpu.memory_space<vmem>>, vector<256x128xbf16>
    %43 = arith.truncf %41 : vector<2x256xf32> to vector<2x256xbf16>
    %cst_22 = arith.constant dense<0.000000e+00> : vector<2x128xf32>
    %44 = tpu.matmul %43, %42, %cst_22 {dimension_numbers = #tpu.dot_dimension_numbers<[1], [0], [0], [1], [0, 0, 1, 1], [], []>} : vector<2x256xbf16>, vector<256x128xbf16>, vector<2x128xf32> -> vector<2x128xf32>
    %c0_23 = arith.constant 0 : index
    %c768 = arith.constant 768 : index
    %45 = vector.load %arg4[%c0_23, %c768] : memref<1x4224xf32, #tpu.memory_space<vmem>>, vector<1x128xf32>
    %46 = vector.broadcast %45 : vector<1x128xf32> to vector<2x128xf32>
    %47 = arith.addf %44, %46 : vector<2x128xf32>
    %c0_24 = arith.constant 0 : index
    %c896 = arith.constant 896 : index
    %48 = vector.load %arg4[%c0_24, %c896] : memref<1x4224xf32, #tpu.memory_space<vmem>>, vector<1x128xf32>
    %c0_25 = arith.constant 0 : index
    %c1024 = arith.constant 1024 : index
    %49 = vector.load %arg4[%c0_25, %c1024] : memref<1x4224xf32, #tpu.memory_space<vmem>>, vector<1x128xf32>
    %cst_26 = arith.constant dense<0.000000e+00> : vector<128xf32>
    %50 = vector.multi_reduction <add>, %47, %cst_26 [0] : vector<2x128xf32> to vector<128xf32>
    %51 = vector.shape_cast %50 : vector<128xf32> to vector<1x128xf32>
    %cst_27 = arith.constant 2.000000e+00 : f32
    %52 = vector.broadcast %cst_27 : f32 to vector<1x128xf32>
    %53 = arith.divf %51, %52 : vector<1x128xf32>
    %54 = vector.broadcast %53 : vector<1x128xf32> to vector<2x128xf32>
    %55 = arith.subf %47, %54 : vector<2x128xf32>
    %56 = arith.mulf %55, %55 : vector<2x128xf32>
    %cst_28 = arith.constant dense<0.000000e+00> : vector<128xf32>
    %57 = vector.multi_reduction <add>, %56, %cst_28 [0] : vector<2x128xf32> to vector<128xf32>
    %58 = vector.shape_cast %57 : vector<128xf32> to vector<1x128xf32>
    %cst_29 = arith.constant 2.000000e+00 : f32
    %59 = vector.broadcast %cst_29 : f32 to vector<1x128xf32>
    %60 = arith.divf %58, %59 : vector<1x128xf32>
    %61 = vector.broadcast %53 : vector<1x128xf32> to vector<2x128xf32>
    %62 = arith.subf %47, %61 : vector<2x128xf32>
    %cst_30 = arith.constant 9.99999974E-6 : f32
    %63 = vector.broadcast %cst_30 : f32 to vector<1x128xf32>
    %64 = arith.addf %60, %63 : vector<1x128xf32>
    %65 = math.rsqrt %64 : vector<1x128xf32>
    %66 = vector.broadcast %65 : vector<1x128xf32> to vector<2x128xf32>
    %67 = arith.mulf %62, %66 : vector<2x128xf32>
    %68 = vector.broadcast %48 : vector<1x128xf32> to vector<2x128xf32>
    %69 = arith.mulf %67, %68 : vector<2x128xf32>
    %70 = vector.broadcast %49 : vector<1x128xf32> to vector<2x128xf32>
    %71 = arith.addf %69, %70 : vector<2x128xf32>
    %cst_31 = arith.constant 0.000000e+00 : f32
    %72 = vector.broadcast %cst_31 : f32 to vector<2x128xf32>
    %73 = arith.maximumf %71, %72 : vector<2x128xf32>
    %c0_32 = arith.constant 0 : index
    %c0_33 = arith.constant 0 : index
    %74 = vector.load %arg7[%c0_32, %c0_33] : memref<128x128xbf16, #tpu.memory_space<vmem>>, vector<128x128xbf16>
    %75 = arith.truncf %73 : vector<2x128xf32> to vector<2x128xbf16>
    %cst_34 = arith.constant dense<0.000000e+00> : vector<2x128xf32>
    %76 = tpu.matmul %75, %74, %cst_34 {dimension_numbers = #tpu.dot_dimension_numbers<[1], [0], [0], [1], [0, 0, 1, 1], [], []>} : vector<2x128xbf16>, vector<128x128xbf16>, vector<2x128xf32> -> vector<2x128xf32>
    %c0_35 = arith.constant 0 : index
    %c0_36 = arith.constant 0 : index
    %77 = vector.load %arg8[%c0_35, %c0_36] : memref<16x128xbf16, #tpu.memory_space<vmem>>, vector<16x128xbf16>
    %78 = arith.truncf %9 : vector<2x16xf32> to vector<2x16xbf16>
    %cst_37 = arith.constant dense<0.000000e+00> : vector<2x128xf32>
    %79 = tpu.matmul %78, %77, %cst_37 {dimension_numbers = #tpu.dot_dimension_numbers<[1], [0], [0], [1], [0, 0, 1, 1], [], []>} : vector<2x16xbf16>, vector<16x128xbf16>, vector<2x128xf32> -> vector<2x128xf32>
    %80 = arith.addf %76, %79 : vector<2x128xf32>
    %c0_38 = arith.constant 0 : index
    %c1152 = arith.constant 1152 : index
    %81 = vector.load %arg4[%c0_38, %c1152] : memref<1x4224xf32, #tpu.memory_space<vmem>>, vector<1x128xf32>
    %82 = vector.broadcast %81 : vector<1x128xf32> to vector<2x128xf32>
    %83 = arith.addf %80, %82 : vector<2x128xf32>
    %c0_39 = arith.constant 0 : index
    %c1280 = arith.constant 1280 : index
    %84 = vector.load %arg4[%c0_39, %c1280] : memref<1x4224xf32, #tpu.memory_space<vmem>>, vector<1x128xf32>
    %c0_40 = arith.constant 0 : index
    %c1408 = arith.constant 1408 : index
    %85 = vector.load %arg4[%c0_40, %c1408] : memref<1x4224xf32, #tpu.memory_space<vmem>>, vector<1x128xf32>
    %cst_41 = arith.constant dense<0.000000e+00> : vector<128xf32>
    %86 = vector.multi_reduction <add>, %83, %cst_41 [0] : vector<2x128xf32> to vector<128xf32>
    %87 = vector.shape_cast %86 : vector<128xf32> to vector<1x128xf32>
    %cst_42 = arith.constant 2.000000e+00 : f32
    %88 = vector.broadcast %cst_42 : f32 to vector<1x128xf32>
    %89 = arith.divf %87, %88 : vector<1x128xf32>
    %90 = vector.broadcast %89 : vector<1x128xf32> to vector<2x128xf32>
    %91 = arith.subf %83, %90 : vector<2x128xf32>
    %92 = arith.mulf %91, %91 : vector<2x128xf32>
    %cst_43 = arith.constant dense<0.000000e+00> : vector<128xf32>
    %93 = vector.multi_reduction <add>, %92, %cst_43 [0] : vector<2x128xf32> to vector<128xf32>
    %94 = vector.shape_cast %93 : vector<128xf32> to vector<1x128xf32>
    %cst_44 = arith.constant 2.000000e+00 : f32
    %95 = vector.broadcast %cst_44 : f32 to vector<1x128xf32>
    %96 = arith.divf %94, %95 : vector<1x128xf32>
    %97 = vector.broadcast %89 : vector<1x128xf32> to vector<2x128xf32>
    %98 = arith.subf %83, %97 : vector<2x128xf32>
    %cst_45 = arith.constant 9.99999974E-6 : f32
    %99 = vector.broadcast %cst_45 : f32 to vector<1x128xf32>
    %100 = arith.addf %96, %99 : vector<1x128xf32>
    %101 = math.rsqrt %100 : vector<1x128xf32>
    %102 = vector.broadcast %101 : vector<1x128xf32> to vector<2x128xf32>
    %103 = arith.mulf %98, %102 : vector<2x128xf32>
    %104 = vector.broadcast %84 : vector<1x128xf32> to vector<2x128xf32>
    %105 = arith.mulf %103, %104 : vector<2x128xf32>
    %106 = vector.broadcast %85 : vector<1x128xf32> to vector<2x128xf32>
    %107 = arith.addf %105, %106 : vector<2x128xf32>
    %cst_46 = arith.constant 0.000000e+00 : f32
    %108 = vector.broadcast %cst_46 : f32 to vector<2x128xf32>
    %109 = arith.maximumf %107, %108 : vector<2x128xf32>
    %c0_47 = arith.constant 0 : index
    %c0_48 = arith.constant 0 : index
    %110 = vector.load %arg9[%c0_47, %c0_48] : memref<128x128xbf16, #tpu.memory_space<vmem>>, vector<128x128xbf16>
    %111 = arith.truncf %109 : vector<2x128xf32> to vector<2x128xbf16>
    %cst_49 = arith.constant dense<0.000000e+00> : vector<2x128xf32>
    %112 = tpu.matmul %111, %110, %cst_49 {dimension_numbers = #tpu.dot_dimension_numbers<[1], [0], [0], [1], [0, 0, 1, 1], [], []>} : vector<2x128xbf16>, vector<128x128xbf16>, vector<2x128xf32> -> vector<2x128xf32>
    %c0_50 = arith.constant 0 : index
    %c1536 = arith.constant 1536 : index
    %113 = vector.load %arg4[%c0_50, %c1536] : memref<1x4224xf32, #tpu.memory_space<vmem>>, vector<1x128xf32>
    %114 = vector.broadcast %113 : vector<1x128xf32> to vector<2x128xf32>
    %115 = arith.addf %112, %114 : vector<2x128xf32>
    %116 = vector.extract_strided_slice %115 {offsets = [0, 0], sizes = [2, 16], strides = [1, 1]} : vector<2x128xf32> to vector<2x16xf32>
    %117 = vector.extract_strided_slice %115 {offsets = [0, 16], sizes = [2, 16], strides = [1, 1]} : vector<2x128xf32> to vector<2x16xf32>
    %118 = math.exp %117 : vector<2x16xf32>
    %cst_51 = arith.constant 5.000000e-01 : f32
    %119 = vector.broadcast %cst_51 : f32 to vector<2x16xf32>
    %120 = arith.mulf %119, %118 : vector<2x16xf32>
    %121 = arith.mulf %1, %120 : vector<2x16xf32>
    %122 = arith.addf %116, %121 : vector<2x16xf32>
    %c0_52 = arith.constant 0 : index
    %c0_53 = arith.constant 0 : index
    %123 = vector.load %arg10[%c0_52, %c0_53] : memref<16x64xbf16, #tpu.memory_space<vmem>>, vector<16x64xbf16>
    %124 = arith.truncf %122 : vector<2x16xf32> to vector<2x16xbf16>
    %cst_54 = arith.constant dense<0.000000e+00> : vector<2x64xf32>
    %125 = tpu.matmul %124, %123, %cst_54 {dimension_numbers = #tpu.dot_dimension_numbers<[1], [0], [0], [1], [0, 0, 1, 1], [], []>} : vector<2x16xbf16>, vector<16x64xbf16>, vector<2x64xf32> -> vector<2x64xf32>
    %c0_55 = arith.constant 0 : index
    %c0_56 = arith.constant 0 : index
    %126 = vector.load %arg11[%c0_55, %c0_56] : memref<16x64xbf16, #tpu.memory_space<vmem>>, vector<16x64xbf16>
    %127 = arith.truncf %9 : vector<2x16xf32> to vector<2x16xbf16>
    %cst_57 = arith.constant dense<0.000000e+00> : vector<2x64xf32>
    %128 = tpu.matmul %127, %126, %cst_57 {dimension_numbers = #tpu.dot_dimension_numbers<[1], [0], [0], [1], [0, 0, 1, 1], [], []>} : vector<2x16xbf16>, vector<16x64xbf16>, vector<2x64xf32> -> vector<2x64xf32>
    %129 = arith.addf %125, %128 : vector<2x64xf32>
    %c0_58 = arith.constant 0 : index
    %c1664 = arith.constant 1664 : index
    %130 = vector.load %arg4[%c0_58, %c1664] : memref<1x4224xf32, #tpu.memory_space<vmem>>, vector<1x64xf32>
    %131 = vector.broadcast %130 : vector<1x64xf32> to vector<2x64xf32>
    %132 = arith.addf %129, %131 : vector<2x64xf32>
    %c0_59 = arith.constant 0 : index
    %c1792 = arith.constant 1792 : index
    %133 = vector.load %arg4[%c0_59, %c1792] : memref<1x4224xf32, #tpu.memory_space<vmem>>, vector<1x64xf32>
    %c0_60 = arith.constant 0 : index
    %c1920 = arith.constant 1920 : index
    %134 = vector.load %arg4[%c0_60, %c1920] : memref<1x4224xf32, #tpu.memory_space<vmem>>, vector<1x64xf32>
    %cst_61 = arith.constant dense<0.000000e+00> : vector<64xf32>
    %135 = vector.multi_reduction <add>, %132, %cst_61 [0] : vector<2x64xf32> to vector<64xf32>
    %136 = vector.shape_cast %135 : vector<64xf32> to vector<1x64xf32>
    %cst_62 = arith.constant 2.000000e+00 : f32
    %137 = vector.broadcast %cst_62 : f32 to vector<1x64xf32>
    %138 = arith.divf %136, %137 : vector<1x64xf32>
    %139 = vector.broadcast %138 : vector<1x64xf32> to vector<2x64xf32>
    %140 = arith.subf %132, %139 : vector<2x64xf32>
    %141 = arith.mulf %140, %140 : vector<2x64xf32>
    %cst_63 = arith.constant dense<0.000000e+00> : vector<64xf32>
    %142 = vector.multi_reduction <add>, %141, %cst_63 [0] : vector<2x64xf32> to vector<64xf32>
    %143 = vector.shape_cast %142 : vector<64xf32> to vector<1x64xf32>
    %cst_64 = arith.constant 2.000000e+00 : f32
    %144 = vector.broadcast %cst_64 : f32 to vector<1x64xf32>
    %145 = arith.divf %143, %144 : vector<1x64xf32>
    %146 = vector.broadcast %138 : vector<1x64xf32> to vector<2x64xf32>
    %147 = arith.subf %132, %146 : vector<2x64xf32>
    %cst_65 = arith.constant 9.99999974E-6 : f32
    %148 = vector.broadcast %cst_65 : f32 to vector<1x64xf32>
    %149 = arith.addf %145, %148 : vector<1x64xf32>
    %150 = math.rsqrt %149 : vector<1x64xf32>
    %151 = vector.broadcast %150 : vector<1x64xf32> to vector<2x64xf32>
    %152 = arith.mulf %147, %151 : vector<2x64xf32>
    %153 = vector.broadcast %133 : vector<1x64xf32> to vector<2x64xf32>
    %154 = arith.mulf %152, %153 : vector<2x64xf32>
    %155 = vector.broadcast %134 : vector<1x64xf32> to vector<2x64xf32>
    %156 = arith.addf %154, %155 : vector<2x64xf32>
    %cst_66 = arith.constant 0.000000e+00 : f32
    %157 = vector.broadcast %cst_66 : f32 to vector<2x64xf32>
    %158 = arith.maximumf %156, %157 : vector<2x64xf32>
    %c0_67 = arith.constant 0 : index
    %c0_68 = arith.constant 0 : index
    %159 = vector.load %arg12[%c0_67, %c0_68] : memref<64x128xbf16, #tpu.memory_space<vmem>>, vector<64x128xbf16>
    %160 = arith.truncf %158 : vector<2x64xf32> to vector<2x64xbf16>
    %cst_69 = arith.constant dense<0.000000e+00> : vector<2x128xf32>
    %161 = tpu.matmul %160, %159, %cst_69 {dimension_numbers = #tpu.dot_dimension_numbers<[1], [0], [0], [1], [0, 0, 1, 1], [], []>} : vector<2x64xbf16>, vector<64x128xbf16>, vector<2x128xf32> -> vector<2x128xf32>
    %c0_70 = arith.constant 0 : index
    %c2048 = arith.constant 2048 : index
    %162 = vector.load %arg4[%c0_70, %c2048] : memref<1x4224xf32, #tpu.memory_space<vmem>>, vector<1x128xf32>
    %163 = vector.broadcast %162 : vector<1x128xf32> to vector<2x128xf32>
    %164 = arith.addf %161, %163 : vector<2x128xf32>
    %c0_71 = arith.constant 0 : index
    %c2176 = arith.constant 2176 : index
    %165 = vector.load %arg4[%c0_71, %c2176] : memref<1x4224xf32, #tpu.memory_space<vmem>>, vector<1x128xf32>
    %c0_72 = arith.constant 0 : index
    %c2304 = arith.constant 2304 : index
    %166 = vector.load %arg4[%c0_72, %c2304] : memref<1x4224xf32, #tpu.memory_space<vmem>>, vector<1x128xf32>
    %cst_73 = arith.constant dense<0.000000e+00> : vector<128xf32>
    %167 = vector.multi_reduction <add>, %164, %cst_73 [0] : vector<2x128xf32> to vector<128xf32>
    %168 = vector.shape_cast %167 : vector<128xf32> to vector<1x128xf32>
    %cst_74 = arith.constant 2.000000e+00 : f32
    %169 = vector.broadcast %cst_74 : f32 to vector<1x128xf32>
    %170 = arith.divf %168, %169 : vector<1x128xf32>
    %171 = vector.broadcast %170 : vector<1x128xf32> to vector<2x128xf32>
    %172 = arith.subf %164, %171 : vector<2x128xf32>
    %173 = arith.mulf %172, %172 : vector<2x128xf32>
    %cst_75 = arith.constant dense<0.000000e+00> : vector<128xf32>
    %174 = vector.multi_reduction <add>, %173, %cst_75 [0] : vector<2x128xf32> to vector<128xf32>
    %175 = vector.shape_cast %174 : vector<128xf32> to vector<1x128xf32>
    %cst_76 = arith.constant 2.000000e+00 : f32
    %176 = vector.broadcast %cst_76 : f32 to vector<1x128xf32>
    %177 = arith.divf %175, %176 : vector<1x128xf32>
    %178 = vector.broadcast %170 : vector<1x128xf32> to vector<2x128xf32>
    %179 = arith.subf %164, %178 : vector<2x128xf32>
    %cst_77 = arith.constant 9.99999974E-6 : f32
    %180 = vector.broadcast %cst_77 : f32 to vector<1x128xf32>
    %181 = arith.addf %177, %180 : vector<1x128xf32>
    %182 = math.rsqrt %181 : vector<1x128xf32>
    %183 = vector.broadcast %182 : vector<1x128xf32> to vector<2x128xf32>
    %184 = arith.mulf %179, %183 : vector<2x128xf32>
    %185 = vector.broadcast %165 : vector<1x128xf32> to vector<2x128xf32>
    %186 = arith.mulf %184, %185 : vector<2x128xf32>
    %187 = vector.broadcast %166 : vector<1x128xf32> to vector<2x128xf32>
    %188 = arith.addf %186, %187 : vector<2x128xf32>
    %cst_78 = arith.constant 0.000000e+00 : f32
    %189 = vector.broadcast %cst_78 : f32 to vector<2x128xf32>
    %190 = arith.maximumf %188, %189 : vector<2x128xf32>
    %c0_79 = arith.constant 0 : index
    %c0_80 = arith.constant 0 : index
    %191 = vector.load %arg13[%c0_79, %c0_80] : memref<128x256xbf16, #tpu.memory_space<vmem>>, vector<128x256xbf16>
    %192 = arith.truncf %190 : vector<2x128xf32> to vector<2x128xbf16>
    %cst_81 = arith.constant dense<0.000000e+00> : vector<2x256xf32>
    %193 = tpu.matmul %192, %191, %cst_81 {dimension_numbers = #tpu.dot_dimension_numbers<[1], [0], [0], [1], [0, 0, 1, 1], [], []>} : vector<2x128xbf16>, vector<128x256xbf16>, vector<2x256xf32> -> vector<2x256xf32>
    %c0_82 = arith.constant 0 : index
    %c2432 = arith.constant 2432 : index
    %194 = vector.load %arg4[%c0_82, %c2432] : memref<1x4224xf32, #tpu.memory_space<vmem>>, vector<1x256xf32>
    %195 = vector.broadcast %194 : vector<1x256xf32> to vector<2x256xf32>
    %196 = arith.addf %193, %195 : vector<2x256xf32>
    %c0_83 = arith.constant 0 : index
    %c2688 = arith.constant 2688 : index
    %197 = vector.load %arg4[%c0_83, %c2688] : memref<1x4224xf32, #tpu.memory_space<vmem>>, vector<1x256xf32>
    %c0_84 = arith.constant 0 : index
    %c2944 = arith.constant 2944 : index
    %198 = vector.load %arg4[%c0_84, %c2944] : memref<1x4224xf32, #tpu.memory_space<vmem>>, vector<1x256xf32>
    %cst_85 = arith.constant dense<0.000000e+00> : vector<256xf32>
    %199 = vector.multi_reduction <add>, %196, %cst_85 [0] : vector<2x256xf32> to vector<256xf32>
    %200 = vector.shape_cast %199 : vector<256xf32> to vector<1x256xf32>
    %cst_86 = arith.constant 2.000000e+00 : f32
    %201 = vector.broadcast %cst_86 : f32 to vector<1x256xf32>
    %202 = arith.divf %200, %201 : vector<1x256xf32>
    %203 = vector.broadcast %202 : vector<1x256xf32> to vector<2x256xf32>
    %204 = arith.subf %196, %203 : vector<2x256xf32>
    %205 = arith.mulf %204, %204 : vector<2x256xf32>
    %cst_87 = arith.constant dense<0.000000e+00> : vector<256xf32>
    %206 = vector.multi_reduction <add>, %205, %cst_87 [0] : vector<2x256xf32> to vector<256xf32>
    %207 = vector.shape_cast %206 : vector<256xf32> to vector<1x256xf32>
    %cst_88 = arith.constant 2.000000e+00 : f32
    %208 = vector.broadcast %cst_88 : f32 to vector<1x256xf32>
    %209 = arith.divf %207, %208 : vector<1x256xf32>
    %210 = vector.broadcast %202 : vector<1x256xf32> to vector<2x256xf32>
    %211 = arith.subf %196, %210 : vector<2x256xf32>
    %cst_89 = arith.constant 9.99999974E-6 : f32
    %212 = vector.broadcast %cst_89 : f32 to vector<1x256xf32>
    %213 = arith.addf %209, %212 : vector<1x256xf32>
    %214 = math.rsqrt %213 : vector<1x256xf32>
    %215 = vector.broadcast %214 : vector<1x256xf32> to vector<2x256xf32>
    %216 = arith.mulf %211, %215 : vector<2x256xf32>
    %217 = vector.broadcast %197 : vector<1x256xf32> to vector<2x256xf32>
    %218 = arith.mulf %216, %217 : vector<2x256xf32>
    %219 = vector.broadcast %198 : vector<1x256xf32> to vector<2x256xf32>
    %220 = arith.addf %218, %219 : vector<2x256xf32>
    %cst_90 = arith.constant 0.000000e+00 : f32
    %221 = vector.broadcast %cst_90 : f32 to vector<2x256xf32>
    %222 = arith.maximumf %220, %221 : vector<2x256xf32>
    tpu.wait_dma2 semaphore(%arg18 : memref<!tpu.dma_semaphore, #tpu.memory_space<semaphore_mem>>) src(%arg14 : memref<256x1024xbf16, #tpu.memory_space<any>>) dst(%arg17 : memref<256x1024xbf16, #tpu.memory_space<vmem>>)
    %c0_91 = arith.constant 0 : index
    %c0_92 = arith.constant 0 : index
    %223 = vector.load %arg17[%c0_91, %c0_92] : memref<256x1024xbf16, #tpu.memory_space<vmem>>, vector<256x1024xbf16>
    %224 = arith.truncf %222 : vector<2x256xf32> to vector<2x256xbf16>
    %cst_93 = arith.constant dense<0.000000e+00> : vector<2x1024xf32>
    %225 = tpu.matmul %224, %223, %cst_93 {dimension_numbers = #tpu.dot_dimension_numbers<[1], [0], [0], [1], [0, 0, 1, 1], [], []>} : vector<2x256xbf16>, vector<256x1024xbf16>, vector<2x1024xf32> -> vector<2x1024xf32>
    %c0_94 = arith.constant 0 : index
    %c3200 = arith.constant 3200 : index
    %226 = vector.load %arg4[%c0_94, %c3200] : memref<1x4224xf32, #tpu.memory_space<vmem>>, vector<1x1024xf32>
    %227 = vector.broadcast %226 : vector<1x1024xf32> to vector<2x1024xf32>
    %228 = arith.addf %225, %227 : vector<2x1024xf32>
    %229 = arith.negf %228 : vector<2x1024xf32>
    %230 = math.exp %229 : vector<2x1024xf32>
    %cst_95 = arith.constant 1.000000e+00 : f32
    %231 = vector.broadcast %cst_95 : f32 to vector<2x1024xf32>
    %232 = arith.addf %231, %230 : vector<2x1024xf32>
    %233 = arith.divf %231, %232 : vector<2x1024xf32>
    %c0_96 = arith.constant 0 : index
    %c0_97 = arith.constant 0 : index
    %234 = vector.load %arg15[%c0_96, %c0_97] : memref<2x1024xf32, #tpu.memory_space<vmem>>, vector<2x1024xf32>
    tpu.vector_store %arg15[%c0_96, %c0_97], %233 {strides = array<i32>} : memref<2x1024xf32, #tpu.memory_space<vmem>>, vector<2x1024xf32>,
    %c0_98 = arith.constant 0 : index
    %c0_99 = arith.constant 0 : index
    %235 = vector.load %arg16[%c0_98, %c0_99] : memref<2x128xf32, #tpu.memory_space<vmem>>, vector<2x128xf32>
    tpu.vector_store %arg16[%c0_98, %c0_99], %115 {strides = array<i32>} : memref<2x128xf32, #tpu.memory_space<vmem>>, vector<2x128xf32>,
    return
  }
}

</mosaic_0001>

<llo_original>
// kernel: cvae_forward.1
$region0: #{cvae_forward.1}
  #allocation0 [shape = 'u32[]', space=smem, size = 0x4, offset = 0x4, fixed_abs, tag = 'smem constant byte address 0x4 - core index']
  #allocation1 [shape = 'u32[72,128]{1,0:T(1,128)}', space=vmem, size = 0x9000, scoped, tag = 'internal scratch']
  #allocation2 [shape = 'bf16[256,1024]{1,0:T(8,128)(2,1)}', space=vmem, size = 0x80000, scoped, tag = 'scratch operand']
  #allocation3 [shape = 's32[1]{0}', space=sflag, size = 0x4, scoped, tag = 'scratch operand']
  #allocation17 [shape = 's32[]', space=sflag, size = 0x4, offset = 0, fixed_abs, tag = 'sflag constant byte address 0x0 - dummy sync flag']
  #allocation18 [shape = 's32[]', space=sflag, size = 0x4, offset = 0, fixed_abs, tag = 'sflag constant byte address 0x0 - dummy sync flag']
  #allocation19 [shape = 'u32[]', space=smem, size = 0x4, offset = 0x44, fixed_abs, tag = 'smem constant byte address 0x44 - assertion arg 0']
  #allocation20 [shape = 'u32[]', space=smem, size = 0x4, offset = 0x48, fixed_abs, tag = 'smem constant byte address 0x48 - assertion arg 1']
  %s0 = inlined_call_operand.vmem [shape: f32[2,1024], index: 0, kind: input, shape index: {}]
  %s1 = inlined_call_operand.vmem [shape: s32[2,1], index: 1, kind: input, shape index: {}]
  %s2 = inlined_call_operand.vmem [shape: f32[2,16], index: 2, kind: input, shape index: {}]
  %s3 = inlined_call_operand.vmem [shape: f32[10,16], index: 3, kind: input, shape index: {}]
  %s4 = inlined_call_operand.hbm [shape: f32[1,4224], index: 4, kind: input, shape index: {}]
  %s5 = inlined_call_operand.hbm [shape: bf16[1024,256], index: 5, kind: input, shape index: {}]
  %s6 = inlined_call_operand.vmem [shape: bf16[256,128], index: 6, kind: input, shape index: {}]
  %s7 = inlined_call_operand.hbm [shape: bf16[128,128], index: 7, kind: input, shape index: {}]
  %s8 = inlined_call_operand.vmem [shape: bf16[16,128], index: 8, kind: input, shape index: {}]
  %s9 = inlined_call_operand.hbm [shape: bf16[128,128], index: 9, kind: input, shape index: {}]
  %s10 = inlined_call_operand.hbm [shape: bf16[16,64], index: 10, kind: input, shape index: {}]
  %s11 = inlined_call_operand.hbm [shape: bf16[16,64], index: 11, kind: input, shape index: {}]
  %s12 = inlined_call_operand.hbm [shape: bf16[64,128], index: 12, kind: input, shape index: {}]
  %s13 = inlined_call_operand.hbm [shape: bf16[128,256], index: 13, kind: input, shape index: {}]
  %s14 = inlined_call_operand.hbm [shape: bf16[256,1024], index: 14, kind: input, shape index: {}]
  %s15 = inlined_call_operand.vmem [shape: f32[2,1024], index: 15, kind: output, shape index: {0}]
  %s16 = inlined_call_operand.vmem [shape: f32[2,128], index: 16, kind: output, shape index: {1}]
  %17 = xla_tuple %s15, %s16
  %s18 = sld [smem:[#allocation0]]
  $region110: #{cvae_forward.1} parent=0
    _
  %s20 = ssub.s32 1, %s18
  %s21 = scalar_select 0, %s20, %s18
  $region1: #{cvae_forward.1} parent=0
    #allocation4 [shape = 'u8[16896]{0}', space=vmem, size = 0x4400, scoped, tag = 'input window, operand 4, single buffered']
    #allocation5 [shape = 's32[1]{0}', space=sflag, size = 0x4, scoped, tag = 'scoped memory for cvae_forward.1']
    #allocation6 [shape = 'u8[524288]{0}', space=vmem, size = 0x80000, scoped, tag = 'input window, operand 5, single buffered']
    #allocation7 [shape = 's32[1]{0}', space=sflag, size = 0x4, scoped, tag = 'scoped memory for cvae_forward.1']
    #allocation8 [shape = 'u8[32768]{0}', space=vmem, size = 0x8000, scoped, tag = 'input window, operand 7, single buffered']
    #allocation9 [shape = 'u8[32768]{0}', space=vmem, size = 0x8000, scoped, tag = 'input window, operand 9, single buffered']
    #allocation10 [shape = 's32[1]{0}', space=sflag, size = 0x4, scoped, tag = 'scoped memory for cvae_forward.1']
    #allocation11 [shape = 'u8[4096]{0}', space=vmem, size = 0x1000, scoped, tag = 'input window, operand 10, single buffered']
    #allocation12 [shape = 'u8[4096]{0}', space=vmem, size = 0x1000, scoped, tag = 'input window, operand 11, single buffered']
    #allocation13 [shape = 's32[1]{0}', space=sflag, size = 0x4, scoped, tag = 'scoped memory for cvae_forward.1']
    #allocation14 [shape = 'u8[16384]{0}', space=vmem, size = 0x4000, scoped, tag = 'input window, operand 12, single buffered']
    #allocation15 [shape = 'u8[65536]{0}', space=vmem, size = 0x10000, scoped, tag = 'input window, operand 13, single buffered']
    #allocation16 [shape = 's32[1]{0}', space=sflag, size = 0x4, scoped, tag = 'scoped memory for cvae_forward.1']
    %22 = vsyncpa [#allocation5], 0
    %23 = vsyncpa [#allocation7], 0
    %24 = vsyncpa [#allocation10], 0
    %25 = vsyncpa [#allocation13], 0
    %26 = vsyncpa [#allocation16], 0
    // Predicated region
    $region2: #{cvae_forward.1} parent=1 // pred_check
      _
    $region3: #{cvae_forward.1} parent=1 // pred_check_branch
      %28 = sbr.rel (0) target = $region5
    $region4: #{cvae_forward.1} parent=1 // pred_region
      _
    $region5: #{cvae_forward.1} parent=1 // pred_fallthru
      _
    // Predicated region
    $region6: #{cvae_forward.1} parent=1 // pred_check
      _
    $region7: #{cvae_forward.1} parent=1 // pred_check_branch
      %30 = sbr.rel (0) target = $region9
    $region8: #{cvae_forward.1} parent=1 // pred_region
      _
    $region9: #{cvae_forward.1} parent=1 // pred_fallthru
      _
    // Predicated region
    $region10: #{cvae_forward.1} parent=1 // pred_check
      _
    $region11: #{cvae_forward.1} parent=1 // pred_check_branch
      %32 = sbr.rel (0) target = $region13
    $region12: #{cvae_forward.1} parent=1 // pred_region
      _
    $region13: #{cvae_forward.1} parent=1 // pred_fallthru
      _
    // Predicated region
    $region14: #{cvae_forward.1} parent=1 // pred_check
      _
    $region15: #{cvae_forward.1} parent=1 // pred_check_branch
      %34 = sbr.rel (0) target = $region17
    $region16: #{cvae_forward.1} parent=1 // pred_region
      _
    $region17: #{cvae_forward.1} parent=1 // pred_fallthru
      _
    // Predicated region
    $region18: #{cvae_forward.1} parent=1 // pred_check
      _
    $region19: #{cvae_forward.1} parent=1 // pred_check_branch
      %36 = sbr.rel (0) target = $region21
    $region20: #{cvae_forward.1} parent=1 // pred_region
      %38 = vsyncadd [#allocation5], 0
      %s40 = sshll.u32 %s4, 4
      %s41 = int_to_ptr.hbm [resolvable:$true] %s40
      %s42 = sshll.u32 [#allocation4], 4
      %s43 = int_to_ptr.vmem [resolvable:$true] %s42
      %45 = dma.hbm_to_vmem [thread:$0]  %s41, 528, %s43, [#allocation5]
    $region21: #{cvae_forward.1} parent=1 // pred_fallthru
      _
    // Predicated region
    $region22: #{cvae_forward.1} parent=1 // pred_check
      _
    $region23: #{cvae_forward.1} parent=1 // pred_check_branch
      %47 = sbr.rel (0) target = $region25
    $region24: #{cvae_forward.1} parent=1 // pred_region
      %49 = vsyncadd [#allocation7], 0
      %s50 = sshll.u32 %s5, 4
      %s51 = int_to_ptr.hbm [resolvable:$true] %s50
      %s52 = sshll.u32 [#allocation6], 4
      %s53 = int_to_ptr.vmem [resolvable:$true] %s52
      %58 = dma.hbm_to_vmem [thread:$0]  %s51, 16384, %s53, [#allocation7], 128, 128, 8
    $region25: #{cvae_forward.1} parent=1 // pred_fallthru
      _
    // Predicated region
    $region26: #{cvae_forward.1} parent=1 // pred_check
      _
    $region27: #{cvae_forward.1} parent=1 // pred_check_branch
      %60 = sbr.rel (0) target = $region29
    $region28: #{cvae_forward.1} parent=1 // pred_region
      _
    $region29: #{cvae_forward.1} parent=1 // pred_fallthru
      _
    // Predicated region
    $region30: #{cvae_forward.1} parent=1 // pred_check
      _
    $region31: #{cvae_forward.1} parent=1 // pred_check_branch
      %62 = sbr.rel (0) target = $region33
    $region32: #{cvae_forward.1} parent=1 // pred_region
      %64 = vsyncadd [#allocation7], 0
      %s65 = sshll.u32 %s7, 4
      %s66 = int_to_ptr.hbm [resolvable:$true] %s65
      %s67 = sshll.u32 [#allocation8], 4
      %s68 = int_to_ptr.vmem [resolvable:$true] %s67
      %73 = dma.hbm_to_vmem [thread:$0]  %s66, 1024, %s68, [#allocation7], 64, 64, 4
    $region33: #{cvae_forward.1} parent=1 // pred_fallthru
      _
    // Predicated region
    $region34: #{cvae_forward.1} parent=1 // pred_check
      _
    $region35: #{cvae_forward.1} parent=1 // pred_check_branch
      %75 = sbr.rel (0) target = $region37
    $region36: #{cvae_forward.1} parent=1 // pred_region
      _
    $region37: #{cvae_forward.1} parent=1 // pred_fallthru
      _
    // Predicated region
    $region38: #{cvae_forward.1} parent=1 // pred_check
      _
    $region39: #{cvae_forward.1} parent=1 // pred_check_branch
      %77 = sbr.rel (0) target = $region41
    $region40: #{cvae_forward.1} parent=1 // pred_region
      %79 = vsyncadd [#allocation10], 0
      %s80 = sshll.u32 %s9, 4
      %s81 = int_to_ptr.hbm [resolvable:$true] %s80
      %s82 = sshll.u32 [#allocation9], 4
      %s83 = int_to_ptr.vmem [resolvable:$true] %s82
      %88 = dma.hbm_to_vmem [thread:$0]  %s81, 1024, %s83, [#allocation10], 64, 64, 4
    $region41: #{cvae_forward.1} parent=1 // pred_fallthru
      _
    // Predicated region
    $region42: #{cvae_forward.1} parent=1 // pred_check
      _
    $region43: #{cvae_forward.1} parent=1 // pred_check_branch
      %90 = sbr.rel (0) target = $region45
    $region44: #{cvae_forward.1} parent=1 // pred_region
      %92 = vsyncadd [#allocation10], 0
      %s93 = sshll.u32 %s10, 4
      %s94 = int_to_ptr.hbm [resolvable:$true] %s93
      %s95 = sshll.u32 [#allocation11], 4
      %s96 = int_to_ptr.vmem [resolvable:$true] %s95
      %101 = dma.hbm_to_vmem [thread:$0]  %s94, 128, %s96, [#allocation10], 64, 64, 4
    $region45: #{cvae_forward.1} parent=1 // pred_fallthru
      _
    // Predicated region
    $region46: #{cvae_forward.1} parent=1 // pred_check
      _
    $region47: #{cvae_forward.1} parent=1 // pred_check_branch
      %103 = sbr.rel (0) target = $region49
    $region48: #{cvae_forward.1} parent=1 // pred_region
      %105 = vsyncadd [#allocation13], 0
      %s106 = sshll.u32 %s11, 4
      %s107 = int_to_ptr.hbm [resolvable:$true] %s106
      %s108 = sshll.u32 [#allocation12], 4
      %s109 = int_to_ptr.vmem [resolvable:$true] %s108
      %114 = dma.hbm_to_vmem [thread:$0]  %s107, 128, %s109, [#allocation13], 64, 64, 4
    $region49: #{cvae_forward.1} parent=1 // pred_fallthru
      _
    // Predicated region
    $region50: #{cvae_forward.1} parent=1 // pred_check
      _
    $region51: #{cvae_forward.1} parent=1 // pred_check_branch
      %116 = sbr.rel (0) target = $region53
    $region52: #{cvae_forward.1} parent=1 // pred_region
      %118 = vsyncadd [#allocation13], 0
      %s119 = sshll.u32 %s12, 4
      %s120 = int_to_ptr.hbm [resolvable:$true] %s119
      %s121 = sshll.u32 [#allocation14], 4
      %s122 = int_to_ptr.vmem [resolvable:$true] %s121
      %127 = dma.hbm_to_vmem [thread:$0]  %s120, 512, %s122, [#allocation13], 64, 64, 4
    $region53: #{cvae_forward.1} parent=1 // pred_fallthru
      _
    // Predicated region
    $region54: #{cvae_forward.1} parent=1 // pred_check
      _
    $region55: #{cvae_forward.1} parent=1 // pred_check_branch
      %129 = sbr.rel (0) target = $region57
    $region56: #{cvae_forward.1} parent=1 // pred_region
      %131 = vsyncadd [#allocation16], 0
      %s132 = sshll.u32 %s13, 4
      %s133 = int_to_ptr.hbm [resolvable:$true] %s132
      %s134 = sshll.u32 [#allocation15], 4
      %s135 = int_to_ptr.vmem [resolvable:$true] %s134
      %140 = dma.hbm_to_vmem [thread:$0]  %s133, 2048, %s135, [#allocation16], 128, 128, 8
    $region57: #{cvae_forward.1} parent=1 // pred_fallthru
      _
    // Predicated region
    $region58: #{cvae_forward.1} parent=1 // pred_check
      _
    $region59: #{cvae_forward.1} parent=1 // pred_check_branch
      %142 = sbr.rel (0) target = $region61
    $region60: #{cvae_forward.1} parent=1 // pred_region
      %144 = dma.done [#allocation5], 528
    $region61: #{cvae_forward.1} parent=1 // pred_fallthru
      _
    // Predicated region
    $region62: #{cvae_forward.1} parent=1 // pred_check
      _
    $region63: #{cvae_forward.1} parent=1 // pred_check_branch
      %146 = sbr.rel (0) target = $region65
    $region64: #{cvae_forward.1} parent=1 // pred_region
      %148 = dma.done [#allocation7], 16384
    $region65: #{cvae_forward.1} parent=1 // pred_fallthru
      _
    // Predicated region
    $region66: #{cvae_forward.1} parent=1 // pred_check
      _
    $region67: #{cvae_forward.1} parent=1 // pred_check_branch
      %150 = sbr.rel (0) target = $region69
    $region68: #{cvae_forward.1} parent=1 // pred_region
      %152 = dma.done [#allocation7], 1024
    $region69: #{cvae_forward.1} parent=1 // pred_fallthru
      _
    // Predicated region
    $region70: #{cvae_forward.1} parent=1 // pred_check
      _
    $region71: #{cvae_forward.1} parent=1 // pred_check_branch
      %154 = sbr.rel (0) target = $region73
    $region72: #{cvae_forward.1} parent=1 // pred_region
      %156 = dma.done [#allocation10], 1024
    $region73: #{cvae_forward.1} parent=1 // pred_fallthru
      _
    // Predicated region
    $region74: #{cvae_forward.1} parent=1 // pred_check
      _
    $region75: #{cvae_forward.1} parent=1 // pred_check_branch
      %158 = sbr.rel (0) target = $region77
    $region76: #{cvae_forward.1} parent=1 // pred_region
      %160 = dma.done [#allocation10], 128
    $region77: #{cvae_forward.1} parent=1 // pred_fallthru
      _
    // Predicated region
    $region78: #{cvae_forward.1} parent=1 // pred_check
      _
    $region79: #{cvae_forward.1} parent=1 // pred_check_branch
      %162 = sbr.rel (0) target = $region81
    $region80: #{cvae_forward.1} parent=1 // pred_region
      %164 = dma.done [#allocation13], 128
    $region81: #{cvae_forward.1} parent=1 // pred_fallthru
      _
    // Predicated region
    $region82: #{cvae_forward.1} parent=1 // pred_check
      _
    $region83: #{cvae_forward.1} parent=1 // pred_check_branch
      %166 = sbr.rel (0) target = $region85
    $region84: #{cvae_forward.1} parent=1 // pred_region
      %168 = dma.done [#allocation13], 512
    $region85: #{cvae_forward.1} parent=1 // pred_fallthru
      _
    // Predicated region
    $region86: #{cvae_forward.1} parent=1 // pred_check
      _
    $region87: #{cvae_forward.1} parent=1 // pred_check_branch
      %170 = sbr.rel (0) target = $region89
    $region88: #{cvae_forward.1} parent=1 // pred_region
      %172 = dma.done [#allocation16], 2048
    $region89: #{cvae_forward.1} parent=1 // pred_fallthru
      _
    // Predicated region
    $region90: #{cvae_forward.1} parent=1 // pred_check
      _
    $region91: #{cvae_forward.1} parent=1 // pred_check_branch
      %175 = sbr.rel target = $region93
    $region92: #{cvae_forward.1} parent=1 // pred_region
      %176 = sst [smem:[#allocation19]] [#allocation18]
      %177 = sst [smem:[#allocation20]] [#allocation17]
    $region93: #{cvae_forward.1} parent=1 // pred_fallthru
      _
    %179 = shalt.err (0)
    %s181 = sshll.u32 %s14, 4
    %s182 = int_to_ptr.hbm [resolvable:$true] %s181
    %s183 = sshll.u32 [#allocation2], 4
    %s184 = int_to_ptr.vmem [resolvable:$true] %s183
    %186 = dma.hbm_to_vmem [thread:$0]  %s182, 16384, %s184, [#allocation3]
    %v187 = vld [vmem:[%s0] sm:$0xff]
    %v188 = vld [vmem:[%s0 + $0x8] sm:$0xff]
    %v189 = vld [vmem:[%s2] sm:$0x3]
    %v190 = vlaneseq
    %v191 = vand.u32 %v190, 127
    %v192 = vld [vmem:[%s1] sm:$0x3]
    %193 = vset.pattern.permute.xlu0 0
    %194 = vperm.xlu0 %193, %v192
    %v195 = vpop.permute.xlu0 %194
    %vm196 = vcmp.eq.s32.totalorder %v191, %v195
    %v197 = vsel %vm196, 1, 0
    %v198 = vcvt.s32.f32 %v197
    %v199 = vld [vmem:[%s3] sm:$0xff]
    %v200 = vld [vmem:[%s3 + $0x8] sm:$0x3]
    %vm201 = vcmask 80896
    %v203 = vsel %vm201, %v198, 0
    %vm205 = vcmask 1041408
    %v207 = vsel %vm205, %v200, 0
    %209 = vmatpush.msra.mxu0 0.0
    %210 = vmatpush.msra.mxu0 0.0
    %211 = vmatpush.msra.mxu0 0.0
    %212 = vmatpush.msra.mxu0 0.0
    %213 = vmatpush.msra.mxu0 0.0
    %214 = vmatpush.msra.mxu0 0.0
    %215 = vmatpush.msra.mxu0 0.0
    %216 = vmatpush.msra.mxu0 0.0
    %217 = vmatpush.msra.mxu0 0.0
    %218 = vmatpush.msra.mxu0 0.0
    %219 = vmatpush.msra.mxu0 0.0
    %220 = vmatpush.msra.mxu0 0.0
    %221 = vmatpush.msra.mxu0 0.0
    %222 = vmatpush.msra.mxu0 0.0
    %223 = vmatpush.msra.mxu0 %v207
    %224 = vmatpush.msra.mxu0 %v199
    %225 = vmatmul.f32.gmra.mxu0 %v203
    %v226 = vpop.f32.mrf.mxu0
    %v227 = vadd.f32 0.0, %v226
    %228 = vdwg.mxu0
    %v229 = vld [vmem:[#allocation6] sm:$0xff]
    %v230 = vld [vmem:[#allocation6 + $0x8] sm:$0xff]
    %v231 = vld [vmem:[#allocation6 + $0x10] sm:$0xff]
    %v232 = vld [vmem:[#allocation6 + $0x18] sm:$0xff]
    %v233 = vld [vmem:[#allocation6 + $0x20] sm:$0xff]
    %v234 = vld [vmem:[#allocation6 + $0x28] sm:$0xff]
    %v235 = vld [vmem:[#allocation6 + $0x30] sm:$0xff]
    %v236 = vld [vmem:[#allocation6 + $0x38] sm:$0xff]
    %v237 = vld [vmem:[#allocation6 + $0x40] sm:$0xff]
    %v238 = vld [vmem:[#allocation6 + $0x48] sm:$0xff]
    %v239 = vld [vmem:[#allocation6 + $0x50] sm:$0xff]
    %v240 = vld [vmem:[#allocation6 + $0x58] sm:$0xff]
    %v241 = vld [vmem:[#allocation6 + $0x60] sm:$0xff]
    %v242 = vld [vmem:[#allocation6 + $0x68] sm:$0xff]
    %v243 = vld [vmem:[#allocation6 + $0x70] sm:$0xff]
    %v244 = vld [vmem:[#allocation6 + $0x78] sm:$0xff]
    %v245 = vld [vmem:[#allocation6 + $0x80] sm:$0xff]
    %v246 = vld [vmem:[#allocation6 + $0x88] sm:$0xff]
    %v247 = vld [vmem:[#allocation6 + $0x90] sm:$0xff]
    %v248 = vld [vmem:[#allocation6 + $0x98] sm:$0xff]
    %v249 = vld [vmem:[#allocation6 + $0xa0] sm:$0xff]
    %v250 = vld [vmem:[#allocation6 + $0xa8] sm:$0xff]
    %v251 = vld [vmem:[#allocation6 + $0xb0] sm:$0xff]
    %v252 = vld [vmem:[#allocation6 + $0xb8] sm:$0xff]
    %v253 = vld [vmem:[#allocation6 + $0xc0] sm:$0xff]
    %v254 = vld [vmem:[#allocation6 + $0xc8] sm:$0xff]
    %v255 = vld [vmem:[#allocation6 + $0xd0] sm:$0xff]
    %v256 = vld [vmem:[#allocation6 + $0xd8] sm:$0xff]
    %v257 = vld [vmem:[#allocation6 + $0xe0] sm:$0xff]
    %v258 = vld [vmem:[#allocation6 + $0xe8] sm:$0xff]
    %v259 = vld [vmem:[#allocation6 + $0xf0] sm:$0xff]
    %v260 = vld [vmem:[#allocation6 + $0xf8] sm:$0xff]
    %v261 = vld [vmem:[#allocation6 + $0x100] sm:$0xff]
    %v262 = vld [vmem:[#allocation6 + $0x108] sm:$0xff]
    %v263 = vld [vmem:[#allocation6 + $0x110] sm:$0xff]
    %v264 = vld [vmem:[#allocation6 + $0x118] sm:$0xff]
    %v265 = vld [vmem:[#allocation6 + $0x120] sm:$0xff]
    %v266 = vld [vmem:[#allocation6 + $0x128] sm:$0xff]
    %v267 = vld [vmem:[#allocation6 + $0x130] sm:$0xff]
    %v268 = vld [vmem:[#allocation6 + $0x138] sm:$0xff]
    %v269 = vld [vmem:[#allocation6 + $0x140] sm:$0xff]
    %v270 = vld [vmem:[#allocation6 + $0x148] sm:$0xff]
    %v271 = vld [vmem:[#allocation6 + $0x150] sm:$0xff]
    %v272 = vld [vmem:[#allocation6 + $0x158] sm:$0xff]
    %v273 = vld [vmem:[#allocation6 + $0x160] sm:$0xff]
    %v274 = vld [vmem:[#allocation6 + $0x168] sm:$0xff]
    %v275 = vld [vmem:[#allocation6 + $0x170] sm:$0xff]
    %v276 = vld [vmem:[#allocation6 + $0x178] sm:$0xff]
    %v277 = vld [vmem:[#allocation6 + $0x180] sm:$0xff]
    %v278 = vld [vmem:[#allocation6 + $0x188] sm:$0xff]
    %v279 = vld [vmem:[#allocation6 + $0x190] sm:$0xff]
    %v280 = vld [vmem:[#allocation6 + $0x198] sm:$0xff]
    %v281 = vld [vmem:[#allocation6 + $0x1a0] sm:$0xff]
    %v282 = vld [vmem:[#allocation6 + $0x1a8] sm:$0xff]
    %v283 = vld [vmem:[#allocation6 + $0x1b0] sm:$0xff]
    %v284 = vld [vmem:[#allocation6 + $0x1b8] sm:$0xff]
    %v285 = vld [vmem:[#allocation6 + $0x1c0] sm:$0xff]
    %v286 = vld [vmem:[#allocation6 + $0x1c8] sm:$0xff]
    %v287 = vld [vmem:[#allocation6 + $0x1d0] sm:$0xff]
    %v288 = vld [vmem:[#allocation6 + $0x1d8] sm:$0xff]
    %v289 = vld [vmem:[#allocation6 + $0x1e0] sm:$0xff]
    %v290 = vld [vmem:[#allocation6 + $0x1e8] sm:$0xff]
    %v291 = vld [vmem:[#allocation6 + $0x1f0] sm:$0xff]
    %v292 = vld [vmem:[#allocation6 + $0x1f8] sm:$0xff]
    %v293 = vld [vmem:[#allocation6 + $0x200] sm:$0xff]
    %v294 = vld [vmem:[#allocation6 + $0x208] sm:$0xff]
    %v295 = vld [vmem:[#allocation6 + $0x210] sm:$0xff]
    %v296 = vld [vmem:[#allocation6 + $0x218] sm:$0xff]
    %v297 = vld [vmem:[#allocation6 + $0x220] sm:$0xff]
    %v298 = vld [vmem:[#allocation6 + $0x228] sm:$0xff]
    %v299 = vld [vmem:[#allocation6 + $0x230] sm:$0xff]
    %v300 = vld [vmem:[#allocation6 + $0x238] sm:$0xff]
    %v301 = vld [vmem:[#allocation6 + $0x240] sm:$0xff]
    %v302 = vld [vmem:[#allocation6 + $0x248] sm:$0xff]
    %v303 = vld [vmem:[#allocation6 + $0x250] sm:$0xff]
    %v304 = vld [vmem:[#allocation6 + $0x258] sm:$0xff]
    %v305 = vld [vmem:[#allocation6 + $0x260] sm:$0xff]
    %v306 = vld [vmem:[#allocation6 + $0x268] sm:$0xff]
    %v307 = vld [vmem:[#allocation6 + $0x270] sm:$0xff]
    %v308 = vld [vmem:[#allocation6 + $0x278] sm:$0xff]
    %v309 = vld [vmem:[#allocation6 + $0x280] sm:$0xff]
    %v310 = vld [vmem:[#allocation6 + $0x288] sm:$0xff]
    %v311 = vld [vmem:[#allocation6 + $0x290] sm:$0xff]
    %v312 = vld [vmem:[#allocation6 + $0x298] sm:$0xff]
    %v313 = vld [vmem:[#allocation6 + $0x2a0] sm:$0xff]
    %v314 = vld [vmem:[#allocation6 + $0x2a8] sm:$0xff]
    %v315 = vld [vmem:[#allocation6 + $0x2b0] sm:$0xff]
    %v316 = vld [vmem:[#allocation6 + $0x2b8] sm:$0xff]
    %v317 = vld [vmem:[#allocation6 + $0x2c0] sm:$0xff]
    %v318 = vld [vmem:[#allocation6 + $0x2c8] sm:$0xff]
    %v319 = vld [vmem:[#allocation6 + $0x2d0] sm:$0xff]
    %v320 = vld [vmem:[#allocation6 + $0x2d8] sm:$0xff]
    %v321 = vld [vmem:[#allocation6 + $0x2e0] sm:$0xff]
    %v322 = vld [vmem:[#allocation6 + $0x2e8] sm:$0xff]
    %v323 = vld [vmem:[#allocation6 + $0x2f0] sm:$0xff]
    %v324 = vld [vmem:[#allocation6 + $0x2f8] sm:$0xff]
    %v325 = vld [vmem:[#allocation6 + $0x300] sm:$0xff]
    %v326 = vld [vmem:[#allocation6 + $0x308] sm:$0xff]
    %v327 = vld [vmem:[#allocation6 + $0x310] sm:$0xff]
    %v328 = vld [vmem:[#allocation6 + $0x318] sm:$0xff]
    %v329 = vld [vmem:[#allocation6 + $0x320] sm:$0xff]
    %v330 = vld [vmem:[#allocation6 + $0x328] sm:$0xff]
    %v331 = vld [vmem:[#allocation6 + $0x330] sm:$0xff]
    %v332 = vld [vmem:[#allocation6 + $0x338] sm:$0xff]
    %v333 = vld [vmem:[#allocation6 + $0x340] sm:$0xff]
    %v334 = vld [vmem:[#allocation6 + $0x348] sm:$0xff]
    %v335 = vld [vmem:[#allocation6 + $0x350] sm:$0xff]
    %v336 = vld [vmem:[#allocation6 + $0x358] sm:$0xff]
    %v337 = vld [vmem:[#allocation6 + $0x360] sm:$0xff]
    %v338 = vld [vmem:[#allocation6 + $0x368] sm:$0xff]
    %v339 = vld [vmem:[#allocation6 + $0x370] sm:$0xff]
    %v340 = vld [vmem:[#allocation6 + $0x378] sm:$0xff]
    %v341 = vld [vmem:[#allocation6 + $0x380] sm:$0xff]
    %v342 = vld [vmem:[#allocation6 + $0x388] sm:$0xff]
    %v343 = vld [vmem:[#allocation6 + $0x390] sm:$0xff]
    %v344 = vld [vmem:[#allocation6 + $0x398] sm:$0xff]
    %v345 = vld [vmem:[#allocation6 + $0x3a0] sm:$0xff]
    %v346 = vld [vmem:[#allocation6 + $0x3a8] sm:$0xff]
    %v347 = vld [vmem:[#allocation6 + $0x3b0] sm:$0xff]
    %v348 = vld [vmem:[#allocation6 + $0x3b8] sm:$0xff]
    %v349 = vld [vmem:[#allocation6 + $0x3c0] sm:$0xff]
    %v350 = vld [vmem:[#allocation6 + $0x3c8] sm:$0xff]
    %v351 = vld [vmem:[#allocation6 + $0x3d0] sm:$0xff]
    %v352 = vld [vmem:[#allocation6 + $0x3d8] sm:$0xff]
    %v353 = vld [vmem:[#allocation6 + $0x3e0] sm:$0xff]
    %v354 = vld [vmem:[#allocation6 + $0x3e8] sm:$0xff]
    %v355 = vld [vmem:[#allocation6 + $0x3f0] sm:$0xff]
    %v356 = vld [vmem:[#allocation6 + $0x3f8] sm:$0xff]
    %359 = vst [vmem:[#allocation1] ss:$4 sm:$0xff] %v187
    %s360 = scalar_lea.vmem [#allocation1], 32
    %361 = vst [vmem:[%s360] ss:$4 sm:$0xff] %v188
    %v362 = vld.sshfl [vmem:[#allocation1] sm:$0xff pattern:$0x73625140]
    %v363 = vld.sshfl [vmem:[#allocation1 + $0x8] sm:$0xff pattern:$0x73625140]
    %v364 = vld.sshfl [vmem:[#allocation1 + $0x10] sm:$0xff pattern:$0x73625140]
    %v365 = vld.sshfl [vmem:[#allocation1 + $0x18] sm:$0xff pattern:$0x73625140]
    %v366 = vld.sshfl [vmem:[#allocation1 + $0x20] sm:$0xff pattern:$0x73625140]
    %v367 = vld.sshfl [vmem:[#allocation1 + $0x28] sm:$0xff pattern:$0x73625140]
    %v368 = vld.sshfl [vmem:[#allocation1 + $0x30] sm:$0xff pattern:$0x73625140]
    %v369 = vld.sshfl [vmem:[#allocation1 + $0x38] sm:$0xff pattern:$0x73625140]
    %v378 = vpack.c.bf16 %v362, %v362
    %v379 = vpack.c.bf16 %v363, %v363
    %v380 = vpack.c.bf16 %v364, %v364
    %v381 = vpack.c.bf16 %v365, %v365
    %v382 = vpack.c.bf16 %v366, %v366
    %v383 = vpack.c.bf16 %v367, %v367
    %v384 = vpack.c.bf16 %v368, %v368
    %v385 = vpack.c.bf16 %v369, %v369
    %v386 = vld [vmem:[#allocation4] sm:$0x3]
    %v388 = vperm.slane %v386, 0
    %v389 = vperm.slane %v386, 1
    %v520 = vunpack.c.l.b16 %v229
    %v521 = vunpack.c.h.b16 %v229
    %v522 = vunpack.c.l.b16 %v230
    %v523 = vunpack.c.h.b16 %v230
    %v524 = vunpack.c.l.b16 %v231
    %v525 = vunpack.c.h.b16 %v231
    %v526 = vunpack.c.l.b16 %v232
    %v527 = vunpack.c.h.b16 %v232
    %v528 = vunpack.c.l.b16 %v233
    %v529 = vunpack.c.h.b16 %v233
    %v530 = vunpack.c.l.b16 %v234
    %v531 = vunpack.c.h.b16 %v234
    %v532 = vunpack.c.l.b16 %v235
    %v533 = vunpack.c.h.b16 %v235
    %v534 = vunpack.c.l.b16 %v236
    %v535 = vunpack.c.h.b16 %v236
    %v536 = vunpack.c.l.b16 %v237
    %v537 = vunpack.c.h.b16 %v237
    %v538 = vunpack.c.l.b16 %v238
    %v539 = vunpack.c.h.b16 %v238
    %v540 = vunpack.c.l.b16 %v239
    %v541 = vunpack.c.h.b16 %v239
    %v542 = vunpack.c.l.b16 %v240
    %v543 = vunpack.c.h.b16 %v240
    %v544 = vunpack.c.l.b16 %v241
    %v545 = vunpack.c.h.b16 %v241
    %v546 = vunpack.c.l.b16 %v242
    %v547 = vunpack.c.h.b16 %v242
    %v548 = vunpack.c.l.b16 %v243
    %v549 = vunpack.c.h.b16 %v243
    %v550 = vunpack.c.l.b16 %v244
    %v551 = vunpack.c.h.b16 %v244
    %v552 = vunpack.c.l.b16 %v245
    %v553 = vunpack.c.h.b16 %v245
    %v554 = vunpack.c.l.b16 %v246
    %v555 = vunpack.c.h.b16 %v246
    %v556 = vunpack.c.l.b16 %v247
    %v557 = vunpack.c.h.b16 %v247
    %v558 = vunpack.c.l.b16 %v248
    %v559 = vunpack.c.h.b16 %v248
    %v560 = vunpack.c.l.b16 %v249
    %v561 = vunpack.c.h.b16 %v249
    %v562 = vunpack.c.l.b16 %v250
    %v563 = vunpack.c.h.b16 %v250
    %v564 = vunpack.c.l.b16 %v251
    %v565 = vunpack.c.h.b16 %v251
    %v566 = vunpack.c.l.b16 %v252
    %v567 = vunpack.c.h.b16 %v252
    %v568 = vunpack.c.l.b16 %v253
    %v569 = vunpack.c.h.b16 %v253
    %v570 = vunpack.c.l.b16 %v254
    %v571 = vunpack.c.h.b16 %v254
    %v572 = vunpack.c.l.b16 %v255
    %v573 = vunpack.c.h.b16 %v255
    %v574 = vunpack.c.l.b16 %v256
    %v575 = vunpack.c.h.b16 %v256
    %v576 = vunpack.c.l.b16 %v257
    %v577 = vunpack.c.h.b16 %v257
    %v578 = vunpack.c.l.b16 %v258
    %v579 = vunpack.c.h.b16 %v258
    %v580 = vunpack.c.l.b16 %v259
    %v581 = vunpack.c.h.b16 %v259
    %v582 = vunpack.c.l.b16 %v260
    %v583 = vunpack.c.h.b16 %v260
    %v584 = vunpack.c.l.b16 %v261
    %v585 = vunpack.c.h.b16 %v261
    %v586 = vunpack.c.l.b16 %v262
    %v587 = vunpack.c.h.b16 %v262
    %v588 = vunpack.c.l.b16 %v263
    %v589 = vunpack.c.h.b16 %v263
    %v590 = vunpack.c.l.b16 %v264
    %v591 = vunpack.c.h.b16 %v264
    %v592 = vunpack.c.l.b16 %v265
    %v593 = vunpack.c.h.b16 %v265
    %v594 = vunpack.c.l.b16 %v266
    %v595 = vunpack.c.h.b16 %v266
    %v596 = vunpack.c.l.b16 %v267
    %v597 = vunpack.c.h.b16 %v267
    %v598 = vunpack.c.l.b16 %v268
    %v599 = vunpack.c.h.b16 %v268
    %v600 = vunpack.c.l.b16 %v269
    %v601 = vunpack.c.h.b16 %v269
    %v602 = vunpack.c.l.b16 %v270
    %v603 = vunpack.c.h.b16 %v270
    %v604 = vunpack.c.l.b16 %v271
    %v605 = vunpack.c.h.b16 %v271
    %v606 = vunpack.c.l.b16 %v272
    %v607 = vunpack.c.h.b16 %v272
    %v608 = vunpack.c.l.b16 %v273
    %v609 = vunpack.c.h.b16 %v273
    %v610 = vunpack.c.l.b16 %v274
    %v611 = vunpack.c.h.b16 %v274
    %v612 = vunpack.c.l.b16 %v275
    %v613 = vunpack.c.h.b16 %v275
    %v614 = vunpack.c.l.b16 %v276
    %v615 = vunpack.c.h.b16 %v276
    %v616 = vunpack.c.l.b16 %v277
    %v617 = vunpack.c.h.b16 %v277
    %v618 = vunpack.c.l.b16 %v278
    %v619 = vunpack.c.h.b16 %v278
    %v620 = vunpack.c.l.b16 %v279
    %v621 = vunpack.c.h.b16 %v279
    %v622 = vunpack.c.l.b16 %v280
    %v623 = vunpack.c.h.b16 %v280
    %v624 = vunpack.c.l.b16 %v281
    %v625 = vunpack.c.h.b16 %v281
    %v626 = vunpack.c.l.b16 %v282
    %v627 = vunpack.c.h.b16 %v282
    %v628 = vunpack.c.l.b16 %v283
    %v629 = vunpack.c.h.b16 %v283
    %v630 = vunpack.c.l.b16 %v284
    %v631 = vunpack.c.h.b16 %v284
    %v632 = vunpack.c.l.b16 %v285
    %v633 = vunpack.c.h.b16 %v285
    %v634 = vunpack.c.l.b16 %v286
    %v635 = vunpack.c.h.b16 %v286
    %v636 = vunpack.c.l.b16 %v287
    %v637 = vunpack.c.h.b16 %v287
    %v638 = vunpack.c.l.b16 %v288
    %v639 = vunpack.c.h.b16 %v288
    %v640 = vunpack.c.l.b16 %v289
    %v641 = vunpack.c.h.b16 %v289
    %v642 = vunpack.c.l.b16 %v290
    %v643 = vunpack.c.h.b16 %v290
    %v644 = vunpack.c.l.b16 %v291
    %v645 = vunpack.c.h.b16 %v291
    %v646 = vunpack.c.l.b16 %v292
    %v647 = vunpack.c.h.b16 %v292
    %v648 = vunpack.c.l.b16 %v293
    %v649 = vunpack.c.h.b16 %v293
    %v650 = vunpack.c.l.b16 %v294
    %v651 = vunpack.c.h.b16 %v294
    %v652 = vunpack.c.l.b16 %v295
    %v653 = vunpack.c.h.b16 %v295
    %v654 = vunpack.c.l.b16 %v296
    %v655 = vunpack.c.h.b16 %v296
    %v656 = vunpack.c.l.b16 %v297
    %v657 = vunpack.c.h.b16 %v297
    %v658 = vunpack.c.l.b16 %v298
    %v659 = vunpack.c.h.b16 %v298
    %v660 = vunpack.c.l.b16 %v299
    %v661 = vunpack.c.h.b16 %v299
    %v662 = vunpack.c.l.b16 %v300
    %v663 = vunpack.c.h.b16 %v300
    %v664 = vunpack.c.l.b16 %v301
    %v665 = vunpack.c.h.b16 %v301
    %v666 = vunpack.c.l.b16 %v302
    %v667 = vunpack.c.h.b16 %v302
    %v668 = vunpack.c.l.b16 %v303
    %v669 = vunpack.c.h.b16 %v303
    %v670 = vunpack.c.l.b16 %v304
    %v671 = vunpack.c.h.b16 %v304
    %v672 = vunpack.c.l.b16 %v305
    %v673 = vunpack.c.h.b16 %v305
    %v674 = vunpack.c.l.b16 %v306
    %v675 = vunpack.c.h.b16 %v306
    %v676 = vunpack.c.l.b16 %v307
    %v677 = vunpack.c.h.b16 %v307
    %v678 = vunpack.c.l.b16 %v308
    %v679 = vunpack.c.h.b16 %v308
    %v680 = vunpack.c.l.b16 %v309
    %v681 = vunpack.c.h.b16 %v309
    %v682 = vunpack.c.l.b16 %v310
    %v683 = vunpack.c.h.b16 %v310
    %v684 = vunpack.c.l.b16 %v311
    %v685 = vunpack.c.h.b16 %v311
    %v686 = vunpack.c.l.b16 %v312
    %v687 = vunpack.c.h.b16 %v312
    %v688 = vunpack.c.l.b16 %v313
    %v689 = vunpack.c.h.b16 %v313
    %v690 = vunpack.c.l.b16 %v314
    %v691 = vunpack.c.h.b16 %v314
    %v692 = vunpack.c.l.b16 %v315
    %v693 = vunpack.c.h.b16 %v315
    %v694 = vunpack.c.l.b16 %v316
    %v695 = vunpack.c.h.b16 %v316
    %v696 = vunpack.c.l.b16 %v317
    %v697 = vunpack.c.h.b16 %v317
    %v698 = vunpack.c.l.b16 %v318
    %v699 = vunpack.c.h.b16 %v318
    %v700 = vunpack.c.l.b16 %v319
    %v701 = vunpack.c.h.b16 %v319
    %v702 = vunpack.c.l.b16 %v320
    %v703 = vunpack.c.h.b16 %v320
    %v704 = vunpack.c.l.b16 %v321
    %v705 = vunpack.c.h.b16 %v321
    %v706 = vunpack.c.l.b16 %v322
    %v707 = vunpack.c.h.b16 %v322
    %v708 = vunpack.c.l.b16 %v323
    %v709 = vunpack.c.h.b16 %v323
    %v710 = vunpack.c.l.b16 %v324
    %v711 = vunpack.c.h.b16 %v324
    %v712 = vunpack.c.l.b16 %v325
    %v713 = vunpack.c.h.b16 %v325
    %v714 = vunpack.c.l.b16 %v326
    %v715 = vunpack.c.h.b16 %v326
    %v716 = vunpack.c.l.b16 %v327
    %v717 = vunpack.c.h.b16 %v327
    %v718 = vunpack.c.l.b16 %v328
    %v719 = vunpack.c.h.b16 %v328
    %v720 = vunpack.c.l.b16 %v329
    %v721 = vunpack.c.h.b16 %v329
    %v722 = vunpack.c.l.b16 %v330
    %v723 = vunpack.c.h.b16 %v330
    %v724 = vunpack.c.l.b16 %v331
    %v725 = vunpack.c.h.b16 %v331
    %v726 = vunpack.c.l.b16 %v332
    %v727 = vunpack.c.h.b16 %v332
    %v728 = vunpack.c.l.b16 %v333
    %v729 = vunpack.c.h.b16 %v333
    %v730 = vunpack.c.l.b16 %v334
    %v731 = vunpack.c.h.b16 %v334
    %v732 = vunpack.c.l.b16 %v335
    %v733 = vunpack.c.h.b16 %v335
    %v734 = vunpack.c.l.b16 %v336
    %v735 = vunpack.c.h.b16 %v336
    %v736 = vunpack.c.l.b16 %v337
    %v737 = vunpack.c.h.b16 %v337
    %v738 = vunpack.c.l.b16 %v338
    %v739 = vunpack.c.h.b16 %v338
    %v740 = vunpack.c.l.b16 %v339
    %v741 = vunpack.c.h.b16 %v339
    %v742 = vunpack.c.l.b16 %v340
    %v743 = vunpack.c.h.b16 %v340
    %v744 = vunpack.c.l.b16 %v341
    %v745 = vunpack.c.h.b16 %v341
    %v746 = vunpack.c.l.b16 %v342
    %v747 = vunpack.c.h.b16 %v342
    %v748 = vunpack.c.l.b16 %v343
    %v749 = vunpack.c.h.b16 %v343
    %v750 = vunpack.c.l.b16 %v344
    %v751 = vunpack.c.h.b16 %v344
    %v752 = vunpack.c.l.b16 %v345
    %v753 = vunpack.c.h.b16 %v345
    %v754 = vunpack.c.l.b16 %v346
    %v755 = vunpack.c.h.b16 %v346
    %v756 = vunpack.c.l.b16 %v347
    %v757 = vunpack.c.h.b16 %v347
    %v758 = vunpack.c.l.b16 %v348
    %v759 = vunpack.c.h.b16 %v348
    %v760 = vunpack.c.l.b16 %v349
    %v761 = vunpack.c.h.b16 %v349
    %v762 = vunpack.c.l.b16 %v350
    %v763 = vunpack.c.h.b16 %v350
    %v764 = vunpack.c.l.b16 %v351
    %v765 = vunpack.c.h.b16 %v351
    %v766 = vunpack.c.l.b16 %v352
    %v767 = vunpack.c.h.b16 %v352
    %v768 = vunpack.c.l.b16 %v353
    %v769 = vunpack.c.h.b16 %v353
    %v770 = vunpack.c.l.b16 %v354
    %v771 = vunpack.c.h.b16 %v354
    %v772 = vunpack.c.l.b16 %v355
    %v773 = vunpack.c.h.b16 %v355
    %v774 = vunpack.c.l.b16 %v356
    %v775 = vunpack.c.h.b16 %v356
    %v776 = vpack.c.b16 %v522, %v520
    %v777 = vpack.c.b16 %v523, %v521
    %v778 = vpack.c.b16 %v526, %v524
    %v779 = vpack.c.b16 %v527, %v525
    %v780 = vpack.c.b16 %v530, %v528
    %v781 = vpack.c.b16 %v531, %v529
    %v782 = vpack.c.b16 %v534, %v532
    %v783 = vpack.c.b16 %v535, %v533
    %v784 = vpack.c.b16 %v538, %v536
    %v785 = vpack.c.b16 %v539, %v537
    %v786 = vpack.c.b16 %v542, %v540
    %v787 = vpack.c.b16 %v543, %v541
    %v788 = vpack.c.b16 %v546, %v544
    %v789 = vpack.c.b16 %v547, %v545
    %v790 = vpack.c.b16 %v550, %v548
    %v791 = vpack.c.b16 %v551, %v549
    %v792 = vpack.c.b16 %v554, %v552
    %v793 = vpack.c.b16 %v555, %v553
    %v794 = vpack.c.b16 %v558, %v556
    %v795 = vpack.c.b16 %v559, %v557
    %v796 = vpack.c.b16 %v562, %v560
    %v797 = vpack.c.b16 %v563, %v561
    %v798 = vpack.c.b16 %v566, %v564
    %v799 = vpack.c.b16 %v567, %v565
    %v800 = vpack.c.b16 %v570, %v568
    %v801 = vpack.c.b16 %v571, %v569
    %v802 = vpack.c.b16 %v574, %v572
    %v803 = vpack.c.b16 %v575, %v573
    %v804 = vpack.c.b16 %v578, %v576
    %v805 = vpack.c.b16 %v579, %v577
    %v806 = vpack.c.b16 %v582, %v580
    %v807 = vpack.c.b16 %v583, %v581
    %v808 = vpack.c.b16 %v586, %v584
    %v809 = vpack.c.b16 %v587, %v585
    %v810 = vpack.c.b16 %v590, %v588
    %v811 = vpack.c.b16 %v591, %v589
    %v812 = vpack.c.b16 %v594, %v592
    %v813 = vpack.c.b16 %v595, %v593
    %v814 = vpack.c.b16 %v598, %v596
    %v815 = vpack.c.b16 %v599, %v597
    %v816 = vpack.c.b16 %v602, %v600
    %v817 = vpack.c.b16 %v603, %v601
    %v818 = vpack.c.b16 %v606, %v604
    %v819 = vpack.c.b16 %v607, %v605
    %v820 = vpack.c.b16 %v610, %v608
    %v821 = vpack.c.b16 %v611, %v609
    %v822 = vpack.c.b16 %v614, %v612
    %v823 = vpack.c.b16 %v615, %v613
    %v824 = vpack.c.b16 %v618, %v616
    %v825 = vpack.c.b16 %v619, %v617
    %v826 = vpack.c.b16 %v622, %v620
    %v827 = vpack.c.b16 %v623, %v621
    %v828 = vpack.c.b16 %v626, %v624
    %v829 = vpack.c.b16 %v627, %v625
    %v830 = vpack.c.b16 %v630, %v628
    %v831 = vpack.c.b16 %v631, %v629
    %v832 = vpack.c.b16 %v634, %v632
    %v833 = vpack.c.b16 %v635, %v633
    %v834 = vpack.c.b16 %v638, %v636
    %v835 = vpack.c.b16 %v639, %v637
    %v836 = vpack.c.b16 %v642, %v640
    %v837 = vpack.c.b16 %v643, %v641
    %v838 = vpack.c.b16 %v646, %v644
    %v839 = vpack.c.b16 %v647, %v645
    %v840 = vpack.c.b16 %v650, %v648
    %v841 = vpack.c.b16 %v651, %v649
    %v842 = vpack.c.b16 %v654, %v652
    %v843 = vpack.c.b16 %v655, %v653
    %v844 = vpack.c.b16 %v658, %v656
    %v845 = vpack.c.b16 %v659, %v657
    %v846 = vpack.c.b16 %v662, %v660
    %v847 = vpack.c.b16 %v663, %v661
    %v848 = vpack.c.b16 %v666, %v664
    %v849 = vpack.c.b16 %v667, %v665
    %v850 = vpack.c.b16 %v670, %v668
    %v851 = vpack.c.b16 %v671, %v669
    %v852 = vpack.c.b16 %v674, %v672
    %v853 = vpack.c.b16 %v675, %v673
    %v854 = vpack.c.b16 %v678, %v676
    %v855 = vpack.c.b16 %v679, %v677
    %v856 = vpack.c.b16 %v682, %v680
    %v857 = vpack.c.b16 %v683, %v681
    %v858 = vpack.c.b16 %v686, %v684
    %v859 = vpack.c.b16 %v687, %v685
    %v860 = vpack.c.b16 %v690, %v688
    %v861 = vpack.c.b16 %v691, %v689
    %v862 = vpack.c.b16 %v694, %v692
    %v863 = vpack.c.b16 %v695, %v693
    %v864 = vpack.c.b16 %v698, %v696
    %v865 = vpack.c.b16 %v699, %v697
    %v866 = vpack.c.b16 %v702, %v700
    %v867 = vpack.c.b16 %v703, %v701
    %v868 = vpack.c.b16 %v706, %v704
    %v869 = vpack.c.b16 %v707, %v705
    %v870 = vpack.c.b16 %v710, %v708
    %v871 = vpack.c.b16 %v711, %v709
    %v872 = vpack.c.b16 %v714, %v712
    %v873 = vpack.c.b16 %v715, %v713
    %v874 = vpack.c.b16 %v718, %v716
    %v875 = vpack.c.b16 %v719, %v717
    %v876 = vpack.c.b16 %v722, %v720
    %v877 = vpack.c.b16 %v723, %v721
    %v878 = vpack.c.b16 %v726, %v724
    %v879 = vpack.c.b16 %v727, %v725
    %v880 = vpack.c.b16 %v730, %v728
    %v881 = vpack.c.b16 %v731, %v729
    %v882 = vpack.c.b16 %v734, %v732
    %v883 = vpack.c.b16 %v735, %v733
    %v884 = vpack.c.b16 %v738, %v736
    %v885 = vpack.c.b16 %v739, %v737
    %v886 = vpack.c.b16 %v742, %v740
    %v887 = vpack.c.b16 %v743, %v741
    %v888 = vpack.c.b16 %v746, %v744
    %v889 = vpack.c.b16 %v747, %v745
    %v890 = vpack.c.b16 %v750, %v748
    %v891 = vpack.c.b16 %v751, %v749
    %v892 = vpack.c.b16 %v754, %v752
    %v893 = vpack.c.b16 %v755, %v753
    %v894 = vpack.c.b16 %v758, %v756
    %v895 = vpack.c.b16 %v759, %v757
    %v896 = vpack.c.b16 %v762, %v760
    %v897 = vpack.c.b16 %v763, %v761
    %v898 = vpack.c.b16 %v766, %v764
    %v899 = vpack.c.b16 %v767, %v765
    %v900 = vpack.c.b16 %v770, %v768
    %v901 = vpack.c.b16 %v771, %v769
    %v902 = vpack.c.b16 %v774, %v772
    %v903 = vpack.c.b16 %v775, %v773
    %1032 = vmatpush.bf16.msra.mxu0 %v790
    %1033 = vmatpush.bf16.msra.mxu0 %v788
    %1034 = vmatpush.bf16.msra.mxu0 %v786
    %1035 = vmatpush.bf16.msra.mxu0 %v784
    %1036 = vmatpush.bf16.msra.mxu0 %v782
    %1037 = vmatpush.bf16.msra.mxu0 %v780
    %1038 = vmatpush.bf16.msra.mxu0 %v778
    %1039 = vmatpush.bf16.msra.mxu0 %v776
    %1040 = vmatmul.bf16.gmra.mxu0 %v378
    %v1041 = vpop.f32.mrf.mxu0
    %v1042 = vadd.f32 %v388, %v1041
    %v1043 = vpop.f32.mrf.mxu0
    %1044 = vdwg.mxu0
    %1045 = vmatpush.bf16.msra.mxu0 %v806
    %1046 = vmatpush.bf16.msra.mxu0 %v804
    %1047 = vmatpush.bf16.msra.mxu0 %v802
    %1048 = vmatpush.bf16.msra.mxu0 %v800
    %1049 = vmatpush.bf16.msra.mxu0 %v798
    %1050 = vmatpush.bf16.msra.mxu0 %v796
    %1051 = vmatpush.bf16.msra.mxu0 %v794
    %1052 = vmatpush.bf16.msra.mxu0 %v792
    %1053 = vmatmul.bf16.gmra.mxu0 %v379
    %v1054 = vpop.f32.mrf.mxu0
    %v1055 = vadd.f32 %v1042, %v1054
    %v1056 = vpop.f32.mrf.mxu0
    %1057 = vdwg.mxu0
    %1058 = vmatpush.bf16.msra.mxu0 %v822
    %1059 = vmatpush.bf16.msra.mxu0 %v820
    %1060 = vmatpush.bf16.msra.mxu0 %v818
    %1061 = vmatpush.bf16.msra.mxu0 %v816
    %1062 = vmatpush.bf16.msra.mxu0 %v814
    %1063 = vmatpush.bf16.msra.mxu0 %v812
    %1064 = vmatpush.bf16.msra.mxu0 %v810
    %1065 = vmatpush.bf16.msra.mxu0 %v808
    %1066 = vmatmul.bf16.gmra.mxu0 %v380
    %v1067 = vpop.f32.mrf.mxu0
    %v1068 = vadd.f32 %v1055, %v1067
    %v1069 = vpop.f32.mrf.mxu0
    %1070 = vdwg.mxu0
    %1071 = vmatpush.bf16.msra.mxu0 %v838
    %1072 = vmatpush.bf16.msra.mxu0 %v836
    %1073 = vmatpush.bf16.msra.mxu0 %v834
    %1074 = vmatpush.bf16.msra.mxu0 %v832
    %1075 = vmatpush.bf16.msra.mxu0 %v830
    %1076 = vmatpush.bf16.msra.mxu0 %v828
    %1077 = vmatpush.bf16.msra.mxu0 %v826
    %1078 = vmatpush.bf16.msra.mxu0 %v824
    %1079 = vmatmul.bf16.gmra.mxu0 %v381
    %v1080 = vpop.f32.mrf.mxu0
    %v1081 = vadd.f32 %v1068, %v1080
    %v1082 = vpop.f32.mrf.mxu0
    %1083 = vdwg.mxu0
    %1084 = vmatpush.bf16.msra.mxu0 %v854
    %1085 = vmatpush.bf16.msra.mxu0 %v852
    %1086 = vmatpush.bf16.msra.mxu0 %v850
    %1087 = vmatpush.bf16.msra.mxu0 %v848
    %1088 = vmatpush.bf16.msra.mxu0 %v846
    %1089 = vmatpush.bf16.msra.mxu0 %v844
    %1090 = vmatpush.bf16.msra.mxu0 %v842
    %1091 = vmatpush.bf16.msra.mxu0 %v840
    %1092 = vmatmul.bf16.gmra.mxu0 %v382
    %v1093 = vpop.f32.mrf.mxu0
    %v1094 = vadd.f32 %v1081, %v1093
    %v1095 = vpop.f32.mrf.mxu0
    %1096 = vdwg.mxu0
    %1097 = vmatpush.bf16.msra.mxu0 %v870
    %1098 = vmatpush.bf16.msra.mxu0 %v868
    %1099 = vmatpush.bf16.msra.mxu0 %v866
    %1100 = vmatpush.bf16.msra.mxu0 %v864
    %1101 = vmatpush.bf16.msra.mxu0 %v862
    %1102 = vmatpush.bf16.msra.mxu0 %v860
    %1103 = vmatpush.bf16.msra.mxu0 %v858
    %1104 = vmatpush.bf16.msra.mxu0 %v856
    %1105 = vmatmul.bf16.gmra.mxu0 %v383
    %v1106 = vpop.f32.mrf.mxu0
    %v1107 = vadd.f32 %v1094, %v1106
    %v1108 = vpop.f32.mrf.mxu0
    %1109 = vdwg.mxu0
    %1110 = vmatpush.bf16.msra.mxu0 %v886
    %1111 = vmatpush.bf16.msra.mxu0 %v884
    %1112 = vmatpush.bf16.msra.mxu0 %v882
    %1113 = vmatpush.bf16.msra.mxu0 %v880
    %1114 = vmatpush.bf16.msra.mxu0 %v878
    %1115 = vmatpush.bf16.msra.mxu0 %v876
    %1116 = vmatpush.bf16.msra.mxu0 %v874
    %1117 = vmatpush.bf16.msra.mxu0 %v872
    %1118 = vmatmul.bf16.gmra.mxu0 %v384
    %v1119 = vpop.f32.mrf.mxu0
    %v1120 = vadd.f32 %v1107, %v1119
    %v1121 = vpop.f32.mrf.mxu0
    %1122 = vdwg.mxu0
    %1123 = vmatpush.bf16.msra.mxu0 %v902
    %1124 = vmatpush.bf16.msra.mxu0 %v900
    %1125 = vmatpush.bf16.msra.mxu0 %v898
    %1126 = vmatpush.bf16.msra.mxu0 %v896
    %1127 = vmatpush.bf16.msra.mxu0 %v894
    %1128 = vmatpush.bf16.msra.mxu0 %v892
    %1129 = vmatpush.bf16.msra.mxu0 %v890
    %1130 = vmatpush.bf16.msra.mxu0 %v888
    %1131 = vmatmul.bf16.gmra.mxu0 %v385
    %v1132 = vpop.f32.mrf.mxu0
    %v1133 = vadd.f32 %v1120, %v1132
    %v1134 = vpop.f32.mrf.mxu0
    %1135 = vdwg.mxu0
    %1136 = vmatpush.bf16.msra.mxu0 %v791
    %1137 = vmatpush.bf16.msra.mxu0 %v789
    %1138 = vmatpush.bf16.msra.mxu0 %v787
    %1139 = vmatpush.bf16.msra.mxu0 %v785
    %1140 = vmatpush.bf16.msra.mxu0 %v783
    %1141 = vmatpush.bf16.msra.mxu0 %v781
    %1142 = vmatpush.bf16.msra.mxu0 %v779
    %1143 = vmatpush.bf16.msra.mxu0 %v777
    %1144 = vmatmul.bf16.gmra.mxu0 %v378
    %v1145 = vpop.f32.mrf.mxu0
    %v1146 = vadd.f32 %v389, %v1145
    %v1147 = vpop.f32.mrf.mxu0
    %1148 = vdwg.mxu0
    %1149 = vmatpush.bf16.msra.mxu0 %v807
    %1150 = vmatpush.bf16.msra.mxu0 %v805
    %1151 = vmatpush.bf16.msra.mxu0 %v803
    %1152 = vmatpush.bf16.msra.mxu0 %v801
    %1153 = vmatpush.bf16.msra.mxu0 %v799
    %1154 = vmatpush.bf16.msra.mxu0 %v797
    %1155 = vmatpush.bf16.msra.mxu0 %v795
    %1156 = vmatpush.bf16.msra.mxu0 %v793
    %1157 = vmatmul.bf16.gmra.mxu0 %v379
    %v1158 = vpop.f32.mrf.mxu0
    %v1159 = vadd.f32 %v1146, %v1158
    %v1160 = vpop.f32.mrf.mxu0
    %1161 = vdwg.mxu0
    %1162 = vmatpush.bf16.msra.mxu0 %v823
    %1163 = vmatpush.bf16.msra.mxu0 %v821
    %1164 = vmatpush.bf16.msra.mxu0 %v819
    %1165 = vmatpush.bf16.msra.mxu0 %v817
    %1166 = vmatpush.bf16.msra.mxu0 %v815
    %1167 = vmatpush.bf16.msra.mxu0 %v813
    %1168 = vmatpush.bf16.msra.mxu0 %v811
    %1169 = vmatpush.bf16.msra.mxu0 %v809
    %1170 = vmatmul.bf16.gmra.mxu0 %v380
    %v1171 = vpop.f32.mrf.mxu0
    %v1172 = vadd.f32 %v1159, %v1171
    %v1173 = vpop.f32.mrf.mxu0
    %1174 = vdwg.mxu0
    %1175 = vmatpush.bf16.msra.mxu0 %v839
    %1176 = vmatpush.bf16.msra.mxu0 %v837
    %1177 = vmatpush.bf16.msra.mxu0 %v835
    %1178 = vmatpush.bf16.msra.mxu0 %v833
    %1179 = vmatpush.bf16.msra.mxu0 %v831
    %1180 = vmatpush.bf16.msra.mxu0 %v829
    %1181 = vmatpush.bf16.msra.mxu0 %v827
    %1182 = vmatpush.bf16.msra.mxu0 %v825
    %1183 = vmatmul.bf16.gmra.mxu0 %v381
    %v1184 = vpop.f32.mrf.mxu0
    %v1185 = vadd.f32 %v1172, %v1184
    %v1186 = vpop.f32.mrf.mxu0
    %1187 = vdwg.mxu0
    %1188 = vmatpush.bf16.msra.mxu0 %v855
    %1189 = vmatpush.bf16.msra.mxu0 %v853
    %1190 = vmatpush.bf16.msra.mxu0 %v851
    %1191 = vmatpush.bf16.msra.mxu0 %v849
    %1192 = vmatpush.bf16.msra.mxu0 %v847
    %1193 = vmatpush.bf16.msra.mxu0 %v845
    %1194 = vmatpush.bf16.msra.mxu0 %v843
    %1195 = vmatpush.bf16.msra.mxu0 %v841
    %1196 = vmatmul.bf16.gmra.mxu0 %v382
    %v1197 = vpop.f32.mrf.mxu0
    %v1198 = vadd.f32 %v1185, %v1197
    %v1199 = vpop.f32.mrf.mxu0
    %1200 = vdwg.mxu0
    %1201 = vmatpush.bf16.msra.mxu0 %v871
    %1202 = vmatpush.bf16.msra.mxu0 %v869
    %1203 = vmatpush.bf16.msra.mxu0 %v867
    %1204 = vmatpush.bf16.msra.mxu0 %v865
    %1205 = vmatpush.bf16.msra.mxu0 %v863
    %1206 = vmatpush.bf16.msra.mxu0 %v861
    %1207 = vmatpush.bf16.msra.mxu0 %v859
    %1208 = vmatpush.bf16.msra.mxu0 %v857
    %1209 = vmatmul.bf16.gmra.mxu0 %v383
    %v1210 = vpop.f32.mrf.mxu0
    %v1211 = vadd.f32 %v1198, %v1210
    %v1212 = vpop.f32.mrf.mxu0
    %1213 = vdwg.mxu0
    %1214 = vmatpush.bf16.msra.mxu0 %v887
    %1215 = vmatpush.bf16.msra.mxu0 %v885
    %1216 = vmatpush.bf16.msra.mxu0 %v883
    %1217 = vmatpush.bf16.msra.mxu0 %v881
    %1218 = vmatpush.bf16.msra.mxu0 %v879
    %1219 = vmatpush.bf16.msra.mxu0 %v877
    %1220 = vmatpush.bf16.msra.mxu0 %v875
    %1221 = vmatpush.bf16.msra.mxu0 %v873
    %1222 = vmatmul.bf16.gmra.mxu0 %v384
    %v1223 = vpop.f32.mrf.mxu0
    %v1224 = vadd.f32 %v1211, %v1223
    %v1225 = vpop.f32.mrf.mxu0
    %1226 = vdwg.mxu0
    %1227 = vmatpush.bf16.msra.mxu0 %v903
    %1228 = vmatpush.bf16.msra.mxu0 %v901
    %1229 = vmatpush.bf16.msra.mxu0 %v899
    %1230 = vmatpush.bf16.msra.mxu0 %v897
    %1231 = vmatpush.bf16.msra.mxu0 %v895
    %1232 = vmatpush.bf16.msra.mxu0 %v893
    %1233 = vmatpush.bf16.msra.mxu0 %v891
    %1234 = vmatpush.bf16.msra.mxu0 %v889
    %1235 = vmatmul.bf16.gmra.mxu0 %v385
    %v1236 = vpop.f32.mrf.mxu0
    %v1237 = vadd.f32 %v1224, %v1236
    %v1238 = vpop.f32.mrf.mxu0
    %1239 = vdwg.mxu0
    %v1240 = vld [vmem:[#allocation4 + $0x2] sm:$0x3]
    %v1241 = vld [vmem:[#allocation4 + $0x4] sm:$0x3]
    %v1242 = vsel %vm205, %v1133, 0.0
    %v1243 = vrot.slane %v1242, 4
    %v1244 = vadd.f32 %v1242, %v1243
    %v1245 = vrot.slane %v1244, 2
    %v1246 = vadd.f32 %v1244, %v1245
    %v1247 = vrot.slane %v1246, 1
    %v1248 = vadd.f32 %v1246, %v1247
    %v1249 = vsel %vm205, %v1237, 0.0
    %v1250 = vrot.slane %v1249, 4
    %v1251 = vadd.f32 %v1249, %v1250
    %v1252 = vrot.slane %v1251, 2
    %v1253 = vadd.f32 %v1251, %v1252
    %v1254 = vrot.slane %v1253, 1
    %v1255 = vadd.f32 %v1253, %v1254
    %v1256 = vrcp.pop 2.0
    %v1257 = vmul.f32 2.0, %v1256
    %v1258 = vsub.f32 1.0, %v1257
    %v1259 = vmul.f32 %v1256, %v1258
    %v1260 = vadd.f32 %v1256, %v1259
    %vm1261 = vweird.f32 %v1256
    %v1262 = vsel %vm1261, %v1256, %v1260
    %v1263 = vmul.f32 %v1248, %v1262
    %v1264 = vmul.f32 %v1255, %v1262
    %v1265 = vsub.f32 %v1133, %v1263
    %v1266 = vsub.f32 %v1237, %v1264
    %v1267 = vmul.f32 %v1265, %v1265
    %v1268 = vmul.f32 %v1266, %v1266
    %v1269 = vsel %vm205, %v1267, 0.0
    %v1270 = vrot.slane %v1269, 4
    %v1271 = vadd.f32 %v1269, %v1270
    %v1272 = vrot.slane %v1271, 2
    %v1273 = vadd.f32 %v1271, %v1272
    %v1274 = vrot.slane %v1273, 1
    %v1275 = vadd.f32 %v1273, %v1274
    %v1276 = vsel %vm205, %v1268, 0.0
    %v1277 = vrot.slane %v1276, 4
    %v1278 = vadd.f32 %v1276, %v1277
    %v1279 = vrot.slane %v1278, 2
    %v1280 = vadd.f32 %v1278, %v1279
    %v1281 = vrot.slane %v1280, 1
    %v1282 = vadd.f32 %v1280, %v1281
    %v1283 = vmul.f32 %v1275, %v1262
    %v1284 = vmul.f32 %v1282, %v1262
    %v1285 = vadd.f32 %v1283, 1e-05
    %v1286 = vadd.f32 %v1284, 1e-05
    %v1287 = vrsqrt.pop %v1285
    %v1288 = vmul.f32 %v1287, %v1285
    %v1289 = vmul.f32 %v1288, %v1287
    %v1290 = vmul.f32 0.5, %v1289
    %v1291 = vsub.f32 1.5, %v1290
    %v1292 = vmul.f32 %v1287, %v1291
    %vm1293 = vweird.f32 %v1285
    %vm1294 = vweird.f32 %v1287
    %vm1295 = vmor %vm1293, %vm1294
    %v1296 = vsel %vm1295, %v1287, %v1292
    %v1297 = vrsqrt.pop %v1286
    %v1298 = vmul.f32 %v1297, %v1286
    %v1299 = vmul.f32 %v1298, %v1297
    %v1300 = vmul.f32 0.5, %v1299
    %v1301 = vsub.f32 1.5, %v1300
    %v1302 = vmul.f32 %v1297, %v1301
    %vm1303 = vweird.f32 %v1286
    %vm1304 = vweird.f32 %v1297
    %vm1305 = vmor %vm1303, %vm1304
    %v1306 = vsel %vm1305, %v1297, %v1302
    %v1307 = vmul.f32 %v1265, %v1296
    %v1308 = vmul.f32 %v1266, %v1306
    %v1310 = vperm.slane %v1240, 0
    %v1311 = vperm.slane %v1240, 1
    %v1314 = vmul.f32 %v1307, %v1310
    %v1315 = vmul.f32 %v1308, %v1311
    %v1317 = vperm.slane %v1241, 0
    %v1318 = vperm.slane %v1241, 1
    %v1321 = vadd.f32 %v1314, %v1317
    %v1322 = vadd.f32 %v1315, %v1318
    %v1323 = vmax.f32 %v1321, 0.0
    %v1324 = vmax.f32 %v1322, 0.0
    %v1325 = vld [vmem:[%s6] sm:$0xf]
    %v1326 = vld [vmem:[%s6 + $0x4] sm:$0xf]
    %v1327 = vld [vmem:[%s6 + $0x8] sm:$0xf]
    %v1328 = vld [vmem:[%s6 + $0xc] sm:$0xf]
    %v1329 = vld [vmem:[%s6 + $0x10] sm:$0xf]
    %v1330 = vld [vmem:[%s6 + $0x14] sm:$0xf]
    %v1331 = vld [vmem:[%s6 + $0x18] sm:$0xf]
    %v1332 = vld [vmem:[%s6 + $0x1c] sm:$0xf]
    %v1333 = vld [vmem:[%s6 + $0x20] sm:$0xf]
    %v1334 = vld [vmem:[%s6 + $0x24] sm:$0xf]
    %v1335 = vld [vmem:[%s6 + $0x28] sm:$0xf]
    %v1336 = vld [vmem:[%s6 + $0x2c] sm:$0xf]
    %v1337 = vld [vmem:[%s6 + $0x30] sm:$0xf]
    %v1338 = vld [vmem:[%s6 + $0x34] sm:$0xf]
    %v1339 = vld [vmem:[%s6 + $0x38] sm:$0xf]
    %v1340 = vld [vmem:[%s6 + $0x3c] sm:$0xf]
    %v1341 = vld [vmem:[%s6 + $0x40] sm:$0xf]
    %v1342 = vld [vmem:[%s6 + $0x44] sm:$0xf]
    %v1343 = vld [vmem:[%s6 + $0x48] sm:$0xf]
    %v1344 = vld [vmem:[%s6 + $0x4c] sm:$0xf]
    %v1345 = vld [vmem:[%s6 + $0x50] sm:$0xf]
    %v1346 = vld [vmem:[%s6 + $0x54] sm:$0xf]
    %v1347 = vld [vmem:[%s6 + $0x58] sm:$0xf]
    %v1348 = vld [vmem:[%s6 + $0x5c] sm:$0xf]
    %v1349 = vld [vmem:[%s6 + $0x60] sm:$0xf]
    %v1350 = vld [vmem:[%s6 + $0x64] sm:$0xf]
    %v1351 = vld [vmem:[%s6 + $0x68] sm:$0xf]
    %v1352 = vld [vmem:[%s6 + $0x6c] sm:$0xf]
    %v1353 = vld [vmem:[%s6 + $0x70] sm:$0xf]
    %v1354 = vld [vmem:[%s6 + $0x74] sm:$0xf]
    %v1355 = vld [vmem:[%s6 + $0x78] sm:$0xf]
    %v1356 = vld [vmem:[%s6 + $0x7c] sm:$0xf]
    %v1357 = vpack.c.bf16 %v1323, %v1323
    %v1358 = vpack.c.bf16 %v1324, %v1324
    %v1359 = vld [vmem:[#allocation4 + $0x6] sm:$0x1]
    %v1361 = vperm.slane %v1359, 0
    %v1395 = vunpack.c.l.b16 %v1325
    %v1396 = vunpack.c.l.b16 %v1326
    %v1397 = vunpack.c.l.b16 %v1327
    %v1398 = vunpack.c.l.b16 %v1328
    %v1399 = vunpack.c.l.b16 %v1329
    %v1400 = vunpack.c.l.b16 %v1330
    %v1401 = vunpack.c.l.b16 %v1331
    %v1402 = vunpack.c.l.b16 %v1332
    %v1403 = vunpack.c.l.b16 %v1333
    %v1404 = vunpack.c.l.b16 %v1334
    %v1405 = vunpack.c.l.b16 %v1335
    %v1406 = vunpack.c.l.b16 %v1336
    %v1407 = vunpack.c.l.b16 %v1337
    %v1408 = vunpack.c.l.b16 %v1338
    %v1409 = vunpack.c.l.b16 %v1339
    %v1410 = vunpack.c.l.b16 %v1340
    %v1411 = vunpack.c.l.b16 %v1341
    %v1412 = vunpack.c.l.b16 %v1342
    %v1413 = vunpack.c.l.b16 %v1343
    %v1414 = vunpack.c.l.b16 %v1344
    %v1415 = vunpack.c.l.b16 %v1345
    %v1416 = vunpack.c.l.b16 %v1346
    %v1417 = vunpack.c.l.b16 %v1347
    %v1418 = vunpack.c.l.b16 %v1348
    %v1419 = vunpack.c.l.b16 %v1349
    %v1420 = vunpack.c.l.b16 %v1350
    %v1421 = vunpack.c.l.b16 %v1351
    %v1422 = vunpack.c.l.b16 %v1352
    %v1423 = vunpack.c.l.b16 %v1353
    %v1424 = vunpack.c.l.b16 %v1354
    %v1425 = vunpack.c.l.b16 %v1355
    %v1426 = vunpack.c.l.b16 %v1356
    %v1427 = vpack.c.b16 %v1396, %v1395
    %v1428 = vpack.c.b16 %v1398, %v1397
    %v1429 = vpack.c.b16 %v1400, %v1399
    %v1430 = vpack.c.b16 %v1402, %v1401
    %v1431 = vpack.c.b16 %v1404, %v1403
    %v1432 = vpack.c.b16 %v1406, %v1405
    %v1433 = vpack.c.b16 %v1408, %v1407
    %v1434 = vpack.c.b16 %v1410, %v1409
    %v1435 = vpack.c.b16 %v1412, %v1411
    %v1436 = vpack.c.b16 %v1414, %v1413
    %v1437 = vpack.c.b16 %v1416, %v1415
    %v1438 = vpack.c.b16 %v1418, %v1417
    %v1439 = vpack.c.b16 %v1420, %v1419
    %v1440 = vpack.c.b16 %v1422, %v1421
    %v1441 = vpack.c.b16 %v1424, %v1423
    %v1442 = vpack.c.b16 %v1426, %v1425
    %1459 = vmatpush.bf16.msra.mxu0 %v1434
    %1460 = vmatpush.bf16.msra.mxu0 %v1433
    %1461 = vmatpush.bf16.msra.mxu0 %v1432
    %1462 = vmatpush.bf16.msra.mxu0 %v1431
    %1463 = vmatpush.bf16.msra.mxu0 %v1430
    %1464 = vmatpush.bf16.msra.mxu0 %v1429
    %1465 = vmatpush.bf16.msra.mxu0 %v1428
    %1466 = vmatpush.bf16.msra.mxu0 %v1427
    %1467 = vmatmul.bf16.gmra.mxu0 %v1357
    %v1468 = vpop.f32.mrf.mxu0
    %v1469 = vadd.f32 %v1361, %v1468
    %v1470 = vpop.f32.mrf.mxu0
    %1471 = vdwg.mxu0
    %1472 = vmatpush.bf16.msra.mxu0 %v1442
    %1473 = vmatpush.bf16.msra.mxu0 %v1441
    %1474 = vmatpush.bf16.msra.mxu0 %v1440
    %1475 = vmatpush.bf16.msra.mxu0 %v1439
    %1476 = vmatpush.bf16.msra.mxu0 %v1438
    %1477 = vmatpush.bf16.msra.mxu0 %v1437
    %1478 = vmatpush.bf16.msra.mxu0 %v1436
    %1479 = vmatpush.bf16.msra.mxu0 %v1435
    %1480 = vmatmul.bf16.gmra.mxu0 %v1358
    %v1481 = vpop.f32.mrf.mxu0
    %v1482 = vadd.f32 %v1469, %v1481
    %v1483 = vpop.f32.mrf.mxu0
    %1484 = vdwg.mxu0
    %v1485 = vld [vmem:[#allocation4 + $0x7] sm:$0x1]
    %v1486 = vld [vmem:[#allocation4 + $0x8] sm:$0x1]
    %v1487 = vsel %vm205, %v1482, 0.0
    %v1488 = vrot.slane %v1487, 4
    %v1489 = vadd.f32 %v1487, %v1488
    %v1490 = vrot.slane %v1489, 2
    %v1491 = vadd.f32 %v1489, %v1490
    %v1492 = vrot.slane %v1491, 1
    %v1493 = vadd.f32 %v1491, %v1492
    %v1494 = vmul.f32 %v1493, %v1262
    %v1495 = vsub.f32 %v1482, %v1494
    %v1496 = vmul.f32 %v1495, %v1495
    %v1497 = vsel %vm205, %v1496, 0.0
    %v1498 = vrot.slane %v1497, 4
    %v1499 = vadd.f32 %v1497, %v1498
    %v1500 = vrot.slane %v1499, 2
    %v1501 = vadd.f32 %v1499, %v1500
    %v1502 = vrot.slane %v1501, 1
    %v1503 = vadd.f32 %v1501, %v1502
    %v1504 = vmul.f32 %v1503, %v1262
    %v1505 = vadd.f32 %v1504, 1e-05
    %v1506 = vrsqrt.pop %v1505
    %v1507 = vmul.f32 %v1506, %v1505
    %v1508 = vmul.f32 %v1507, %v1506
    %v1509 = vmul.f32 0.5, %v1508
    %v1510 = vsub.f32 1.5, %v1509
    %v1511 = vmul.f32 %v1506, %v1510
    %vm1512 = vweird.f32 %v1505
    %vm1513 = vweird.f32 %v1506
    %vm1514 = vmor %vm1512, %vm1513
    %v1515 = vsel %vm1514, %v1506, %v1511
    %v1516 = vmul.f32 %v1495, %v1515
    %v1518 = vperm.slane %v1485, 0
    %v1520 = vmul.f32 %v1516, %v1518
    %v1522 = vperm.slane %v1486, 0
    %v1524 = vadd.f32 %v1520, %v1522
    %v1525 = vmax.f32 %v1524, 0.0
    %v1526 = vld [vmem:[#allocation8] sm:$0xf]
    %v1527 = vld [vmem:[#allocation8 + $0x4] sm:$0xf]
    %v1528 = vld [vmem:[#allocation8 + $0x8] sm:$0xf]
    %v1529 = vld [vmem:[#allocation8 + $0xc] sm:$0xf]
    %v1530 = vld [vmem:[#allocation8 + $0x10] sm:$0xf]
    %v1531 = vld [vmem:[#allocation8 + $0x14] sm:$0xf]
    %v1532 = vld [vmem:[#allocation8 + $0x18] sm:$0xf]
    %v1533 = vld [vmem:[#allocation8 + $0x1c] sm:$0xf]
    %v1534 = vld [vmem:[#allocation8 + $0x20] sm:$0xf]
    %v1535 = vld [vmem:[#allocation8 + $0x24] sm:$0xf]
    %v1536 = vld [vmem:[#allocation8 + $0x28] sm:$0xf]
    %v1537 = vld [vmem:[#allocation8 + $0x2c] sm:$0xf]
    %v1538 = vld [vmem:[#allocation8 + $0x30] sm:$0xf]
    %v1539 = vld [vmem:[#allocation8 + $0x34] sm:$0xf]
    %v1540 = vld [vmem:[#allocation8 + $0x38] sm:$0xf]
    %v1541 = vld [vmem:[#allocation8 + $0x3c] sm:$0xf]
    %v1542 = vpack.c.bf16 %v1525, %v1525
    %v1543 = vld [vmem:[%s8] sm:$0xf]
    %v1544 = vld [vmem:[%s8 + $0x4] sm:$0xf]
    %v1545 = vpack.c.bf16 %v227, %v227
    %v1548 = vunpack.c.l.b16 %v1543
    %v1549 = vunpack.c.l.b16 %v1544
    %v1550 = vpack.c.b16 %v1549, %v1548
    %vm1552 = vcmask 130048
    %v1554 = vsel %vm1552, %v1545, 0
    %1556 = vmatpush.bf16.msra.mxu0 0
    %1557 = vmatpush.bf16.msra.mxu0 0
    %1558 = vmatpush.bf16.msra.mxu0 0
    %1559 = vmatpush.bf16.msra.mxu0 0
    %1560 = vmatpush.bf16.msra.mxu0 0
    %1561 = vmatpush.bf16.msra.mxu0 0
    %1562 = vmatpush.bf16.msra.mxu0 0
    %1563 = vmatpush.bf16.msra.mxu0 %v1550
    %1564 = vmatmul.bf16.gmra.mxu0 %v1554
    %v1565 = vpop.f32.mrf.mxu0
    %v1566 = vadd.f32 0.0, %v1565
    %v1567 = vpop.f32.mrf.mxu0
    %1568 = vdwg.mxu0
    %v1585 = vunpack.c.l.b16 %v1526
    %v1586 = vunpack.c.l.b16 %v1527
    %v1587 = vunpack.c.l.b16 %v1528
    %v1588 = vunpack.c.l.b16 %v1529
    %v1589 = vunpack.c.l.b16 %v1530
    %v1590 = vunpack.c.l.b16 %v1531
    %v1591 = vunpack.c.l.b16 %v1532
    %v1592 = vunpack.c.l.b16 %v1533
    %v1593 = vunpack.c.l.b16 %v1534
    %v1594 = vunpack.c.l.b16 %v1535
    %v1595 = vunpack.c.l.b16 %v1536
    %v1596 = vunpack.c.l.b16 %v1537
    %v1597 = vunpack.c.l.b16 %v1538
    %v1598 = vunpack.c.l.b16 %v1539
    %v1599 = vunpack.c.l.b16 %v1540
    %v1600 = vunpack.c.l.b16 %v1541
    %v1601 = vpack.c.b16 %v1586, %v1585
    %v1602 = vpack.c.b16 %v1588, %v1587
    %v1603 = vpack.c.b16 %v1590, %v1589
    %v1604 = vpack.c.b16 %v1592, %v1591
    %v1605 = vpack.c.b16 %v1594, %v1593
    %v1606 = vpack.c.b16 %v1596, %v1595
    %v1607 = vpack.c.b16 %v1598, %v1597
    %v1608 = vpack.c.b16 %v1600, %v1599
    %1617 = vmatpush.bf16.msra.mxu0 %v1608
    %1618 = vmatpush.bf16.msra.mxu0 %v1607
    %1619 = vmatpush.bf16.msra.mxu0 %v1606
    %1620 = vmatpush.bf16.msra.mxu0 %v1605
    %1621 = vmatpush.bf16.msra.mxu0 %v1604
    %1622 = vmatpush.bf16.msra.mxu0 %v1603
    %1623 = vmatpush.bf16.msra.mxu0 %v1602
    %1624 = vmatpush.bf16.msra.mxu0 %v1601
    %1625 = vmatmul.bf16.gmra.mxu0 %v1542
    %v1626 = vpop.f32.mrf.mxu0
    %v1627 = vadd.f32 %v1566, %v1626
    %v1628 = vpop.f32.mrf.mxu0
    %1629 = vdwg.mxu0
    %v1630 = vld [vmem:[#allocation4 + $0x9] sm:$0x1]
    %v1632 = vperm.slane %v1630, 0
    %v1634 = vadd.f32 %v1627, %v1632
    %v1635 = vld [vmem:[#allocation4 + $0xa] sm:$0x1]
    %v1636 = vld [vmem:[#allocation4 + $0xb] sm:$0x1]
    %v1637 = vsel %vm205, %v1634, 0.0
    %v1638 = vrot.slane %v1637, 4
    %v1639 = vadd.f32 %v1637, %v1638
    %v1640 = vrot.slane %v1639, 2
    %v1641 = vadd.f32 %v1639, %v1640
    %v1642 = vrot.slane %v1641, 1
    %v1643 = vadd.f32 %v1641, %v1642
    %v1644 = vmul.f32 %v1643, %v1262
    %v1645 = vsub.f32 %v1634, %v1644
    %v1646 = vmul.f32 %v1645, %v1645
    %v1647 = vsel %vm205, %v1646, 0.0
    %v1648 = vrot.slane %v1647, 4
    %v1649 = vadd.f32 %v1647, %v1648
    %v1650 = vrot.slane %v1649, 2
    %v1651 = vadd.f32 %v1649, %v1650
    %v1652 = vrot.slane %v1651, 1
    %v1653 = vadd.f32 %v1651, %v1652
    %v1654 = vmul.f32 %v1653, %v1262
    %v1655 = vadd.f32 %v1654, 1e-05
    %v1656 = vrsqrt.pop %v1655
    %v1657 = vmul.f32 %v1656, %v1655
    %v1658 = vmul.f32 %v1657, %v1656
    %v1659 = vmul.f32 0.5, %v1658
    %v1660 = vsub.f32 1.5, %v1659
    %v1661 = vmul.f32 %v1656, %v1660
    %vm1662 = vweird.f32 %v1655
    %vm1663 = vweird.f32 %v1656
    %vm1664 = vmor %vm1662, %vm1663
    %v1665 = vsel %vm1664, %v1656, %v1661
    %v1666 = vmul.f32 %v1645, %v1665
    %v1668 = vperm.slane %v1635, 0
    %v1670 = vmul.f32 %v1666, %v1668
    %v1672 = vperm.slane %v1636, 0
    %v1674 = vadd.f32 %v1670, %v1672
    %v1675 = vmax.f32 %v1674, 0.0
    %v1676 = vld [vmem:[#allocation9] sm:$0xf]
    %v1677 = vld [vmem:[#allocation9 + $0x4] sm:$0xf]
    %v1678 = vld [vmem:[#allocation9 + $0x8] sm:$0xf]
    %v1679 = vld [vmem:[#allocation9 + $0xc] sm:$0xf]
    %v1680 = vld [vmem:[#allocation9 + $0x10] sm:$0xf]
    %v1681 = vld [vmem:[#allocation9 + $0x14] sm:$0xf]
    %v1682 = vld [vmem:[#allocation9 + $0x18] sm:$0xf]
    %v1683 = vld [vmem:[#allocation9 + $0x1c] sm:$0xf]
    %v1684 = vld [vmem:[#allocation9 + $0x20] sm:$0xf]
    %v1685 = vld [vmem:[#allocation9 + $0x24] sm:$0xf]
    %v1686 = vld [vmem:[#allocation9 + $0x28] sm:$0xf]
    %v1687 = vld [vmem:[#allocation9 + $0x2c] sm:$0xf]
    %v1688 = vld [vmem:[#allocation9 + $0x30] sm:$0xf]
    %v1689 = vld [vmem:[#allocation9 + $0x34] sm:$0xf]
    %v1690 = vld [vmem:[#allocation9 + $0x38] sm:$0xf]
    %v1691 = vld [vmem:[#allocation9 + $0x3c] sm:$0xf]
    %v1692 = vpack.c.bf16 %v1675, %v1675
    %v1693 = vld [vmem:[#allocation4 + $0xc] sm:$0x1]
    %v1695 = vperm.slane %v1693, 0
    %v1713 = vunpack.c.l.b16 %v1676
    %v1714 = vunpack.c.l.b16 %v1677
    %v1715 = vunpack.c.l.b16 %v1678
    %v1716 = vunpack.c.l.b16 %v1679
    %v1717 = vunpack.c.l.b16 %v1680
    %v1718 = vunpack.c.l.b16 %v1681
    %v1719 = vunpack.c.l.b16 %v1682
    %v1720 = vunpack.c.l.b16 %v1683
    %v1721 = vunpack.c.l.b16 %v1684
    %v1722 = vunpack.c.l.b16 %v1685
    %v1723 = vunpack.c.l.b16 %v1686
    %v1724 = vunpack.c.l.b16 %v1687
    %v1725 = vunpack.c.l.b16 %v1688
    %v1726 = vunpack.c.l.b16 %v1689
    %v1727 = vunpack.c.l.b16 %v1690
    %v1728 = vunpack.c.l.b16 %v1691
    %v1729 = vpack.c.b16 %v1714, %v1713
    %v1730 = vpack.c.b16 %v1716, %v1715
    %v1731 = vpack.c.b16 %v1718, %v1717
    %v1732 = vpack.c.b16 %v1720, %v1719
    %v1733 = vpack.c.b16 %v1722, %v1721
    %v1734 = vpack.c.b16 %v1724, %v1723
    %v1735 = vpack.c.b16 %v1726, %v1725
    %v1736 = vpack.c.b16 %v1728, %v1727
    %1745 = vmatpush.bf16.msra.mxu0 %v1736
    %1746 = vmatpush.bf16.msra.mxu0 %v1735
    %1747 = vmatpush.bf16.msra.mxu0 %v1734
    %1748 = vmatpush.bf16.msra.mxu0 %v1733
    %1749 = vmatpush.bf16.msra.mxu0 %v1732
    %1750 = vmatpush.bf16.msra.mxu0 %v1731
    %1751 = vmatpush.bf16.msra.mxu0 %v1730
    %1752 = vmatpush.bf16.msra.mxu0 %v1729
    %1753 = vmatmul.bf16.gmra.mxu0 %v1692
    %v1754 = vpop.f32.mrf.mxu0
    %v1755 = vadd.f32 %v1695, %v1754
    %v1756 = vpop.f32.mrf.mxu0
    %1757 = vdwg.mxu0
    %v1758 = vmul.f32 %v1755, 1.442695
    %v1759 = vpow.pop %v1758
    %v1760 = vmul.f32 %v1759, 0.5
    %1762 = vrot.lane.b32.xlu0 %v1760, 112
    %v1763 = vpop.permute.xlu0 %1762
    %v1765 = vmul.f32 %v189, %v1763
    %v1766 = vadd.f32 %v1755, %v1765
    %v1767 = vld [vmem:[#allocation11] sm:$0xf]
    %v1768 = vld [vmem:[#allocation11 + $0x4] sm:$0xf]
    %v1769 = vpack.c.bf16 %v1766, %v1766
    %v1770 = vld [vmem:[#allocation12] sm:$0xf]
    %v1771 = vld [vmem:[#allocation12 + $0x4] sm:$0xf]
    %v1774 = vunpack.c.l.b16 %v1770
    %v1775 = vunpack.c.l.b16 %v1771
    %v1776 = vpack.c.b16 %v1775, %v1774
    %1778 = vmatpush.bf16.msra.mxu0 0
    %1779 = vmatpush.bf16.msra.mxu0 0
    %1780 = vmatpush.bf16.msra.mxu0 0
    %1781 = vmatpush.bf16.msra.mxu0 0
    %1782 = vmatpush.bf16.msra.mxu0 0
    %1783 = vmatpush.bf16.msra.mxu0 0
    %1784 = vmatpush.bf16.msra.mxu0 0
    %1785 = vmatpush.bf16.msra.mxu0 %v1776
    %1786 = vmatmul.bf16.gmra.mxu0 %v1554
    %v1787 = vpop.f32.mrf.mxu0
    %v1788 = vadd.f32 0.0, %v1787
    %v1789 = vpop.f32.mrf.mxu0
    %1790 = vdwg.mxu0
    %v1793 = vunpack.c.l.b16 %v1767
    %v1794 = vunpack.c.l.b16 %v1768
    %v1795 = vpack.c.b16 %v1794, %v1793
    %v1798 = vsel %vm1552, %v1769, 0
    %1800 = vmatpush.bf16.msra.mxu0 0
    %1801 = vmatpush.bf16.msra.mxu0 0
    %1802 = vmatpush.bf16.msra.mxu0 0
    %1803 = vmatpush.bf16.msra.mxu0 0
    %1804 = vmatpush.bf16.msra.mxu0 0
    %1805 = vmatpush.bf16.msra.mxu0 0
    %1806 = vmatpush.bf16.msra.mxu0 0
    %1807 = vmatpush.bf16.msra.mxu0 %v1795
    %1808 = vmatmul.bf16.gmra.mxu0 %v1798
    %v1809 = vpop.f32.mrf.mxu0
    %v1810 = vadd.f32 %v1788, %v1809
    %v1811 = vpop.f32.mrf.mxu0
    %1812 = vdwg.mxu0
    %v1813 = vld [vmem:[#allocation4 + $0xd] sm:$0x1]
    %v1815 = vperm.slane %v1813, 0
    %v1817 = vadd.f32 %v1810, %v1815
    %v1818 = vld [vmem:[#allocation4 + $0xe] sm:$0x1]
    %v1819 = vld [vmem:[#allocation4 + $0xf] sm:$0x1]
    %vm1820 = vcmask 517120
    %v1821 = vsel %vm1820, %v1817, 0.0
    %v1822 = vrot.slane %v1821, 4
    %v1823 = vadd.f32 %v1821, %v1822
    %v1824 = vrot.slane %v1823, 2
    %v1825 = vadd.f32 %v1823, %v1824
    %v1826 = vrot.slane %v1825, 1
    %v1827 = vadd.f32 %v1825, %v1826
    %v1828 = vmul.f32 %v1827, %v1262
    %v1829 = vsub.f32 %v1817, %v1828
    %v1830 = vmul.f32 %v1829, %v1829
    %v1831 = vsel %vm1820, %v1830, 0.0
    %v1832 = vrot.slane %v1831, 4
    %v1833 = vadd.f32 %v1831, %v1832
    %v1834 = vrot.slane %v1833, 2
    %v1835 = vadd.f32 %v1833, %v1834
    %v1836 = vrot.slane %v1835, 1
    %v1837 = vadd.f32 %v1835, %v1836
    %v1838 = vmul.f32 %v1837, %v1262
    %v1839 = vadd.f32 %v1838, 1e-05
    %v1840 = vrsqrt.pop %v1839
    %v1841 = vmul.f32 %v1840, %v1839
    %v1842 = vmul.f32 %v1841, %v1840
    %v1843 = vmul.f32 0.5, %v1842
    %v1844 = vsub.f32 1.5, %v1843
    %v1845 = vmul.f32 %v1840, %v1844
    %vm1846 = vweird.f32 %v1839
    %vm1847 = vweird.f32 %v1840
    %vm1848 = vmor %vm1846, %vm1847
    %v1849 = vsel %vm1848, %v1840, %v1845
    %v1850 = vmul.f32 %v1829, %v1849
    %v1852 = vperm.slane %v1818, 0
    %v1854 = vmul.f32 %v1850, %v1852
    %v1856 = vperm.slane %v1819, 0
    %v1858 = vadd.f32 %v1854, %v1856
    %v1859 = vmax.f32 %v1858, 0.0
    %v1860 = vld [vmem:[#allocation14] sm:$0xf]
    %v1861 = vld [vmem:[#allocation14 + $0x4] sm:$0xf]
    %v1862 = vld [vmem:[#allocation14 + $0x8] sm:$0xf]
    %v1863 = vld [vmem:[#allocation14 + $0xc] sm:$0xf]
    %v1864 = vld [vmem:[#allocation14 + $0x10] sm:$0xf]
    %v1865 = vld [vmem:[#allocation14 + $0x14] sm:$0xf]
    %v1866 = vld [vmem:[#allocation14 + $0x18] sm:$0xf]
    %v1867 = vld [vmem:[#allocation14 + $0x1c] sm:$0xf]
    %v1868 = vpack.c.bf16 %v1859, %v1859
    %v1869 = vld [vmem:[#allocation4 + $0x10] sm:$0x1]
    %v1871 = vperm.slane %v1869, 0
    %v1881 = vunpack.c.l.b16 %v1860
    %v1882 = vunpack.c.l.b16 %v1861
    %v1883 = vunpack.c.l.b16 %v1862
    %v1884 = vunpack.c.l.b16 %v1863
    %v1885 = vunpack.c.l.b16 %v1864
    %v1886 = vunpack.c.l.b16 %v1865
    %v1887 = vunpack.c.l.b16 %v1866
    %v1888 = vunpack.c.l.b16 %v1867
    %v1889 = vpack.c.b16 %v1882, %v1881
    %v1890 = vpack.c.b16 %v1884, %v1883
    %v1891 = vpack.c.b16 %v1886, %v1885
    %v1892 = vpack.c.b16 %v1888, %v1887
    %vm1897 = vcmask 523264
    %v1899 = vsel %vm1897, %v1868, 0
    %1901 = vmatpush.bf16.msra.mxu0 0
    %1902 = vmatpush.bf16.msra.mxu0 0
    %1903 = vmatpush.bf16.msra.mxu0 0
    %1904 = vmatpush.bf16.msra.mxu0 0
    %1905 = vmatpush.bf16.msra.mxu0 %v1892
    %1906 = vmatpush.bf16.msra.mxu0 %v1891
    %1907 = vmatpush.bf16.msra.mxu0 %v1890
    %1908 = vmatpush.bf16.msra.mxu0 %v1889
    %1909 = vmatmul.bf16.gmra.mxu0 %v1899
    %v1910 = vpop.f32.mrf.mxu0
    %v1911 = vadd.f32 %v1871, %v1910
    %v1912 = vpop.f32.mrf.mxu0
    %1913 = vdwg.mxu0
    %v1914 = vld [vmem:[#allocation4 + $0x11] sm:$0x1]
    %v1915 = vld [vmem:[#allocation4 + $0x12] sm:$0x1]
    %v1916 = vsel %vm205, %v1911, 0.0
    %v1917 = vrot.slane %v1916, 4
    %v1918 = vadd.f32 %v1916, %v1917
    %v1919 = vrot.slane %v1918, 2
    %v1920 = vadd.f32 %v1918, %v1919
    %v1921 = vrot.slane %v1920, 1
    %v1922 = vadd.f32 %v1920, %v1921
    %v1923 = vmul.f32 %v1922, %v1262
    %v1924 = vsub.f32 %v1911, %v1923
    %v1925 = vmul.f32 %v1924, %v1924
    %v1926 = vsel %vm205, %v1925, 0.0
    %v1927 = vrot.slane %v1926, 4
    %v1928 = vadd.f32 %v1926, %v1927
    %v1929 = vrot.slane %v1928, 2
    %v1930 = vadd.f32 %v1928, %v1929
    %v1931 = vrot.slane %v1930, 1
    %v1932 = vadd.f32 %v1930, %v1931
    %v1933 = vmul.f32 %v1932, %v1262
    %v1934 = vadd.f32 %v1933, 1e-05
    %v1935 = vrsqrt.pop %v1934
    %v1936 = vmul.f32 %v1935, %v1934
    %v1937 = vmul.f32 %v1936, %v1935
    %v1938 = vmul.f32 0.5, %v1937
    %v1939 = vsub.f32 1.5, %v1938
    %v1940 = vmul.f32 %v1935, %v1939
    %vm1941 = vweird.f32 %v1934
    %vm1942 = vweird.f32 %v1935
    %vm1943 = vmor %vm1941, %vm1942
    %v1944 = vsel %vm1943, %v1935, %v1940
    %v1945 = vmul.f32 %v1924, %v1944
    %v1947 = vperm.slane %v1914, 0
    %v1949 = vmul.f32 %v1945, %v1947
    %v1951 = vperm.slane %v1915, 0
    %v1953 = vadd.f32 %v1949, %v1951
    %v1954 = vmax.f32 %v1953, 0.0
    %v1955 = vld [vmem:[#allocation15] sm:$0xff]
    %v1956 = vld [vmem:[#allocation15 + $0x8] sm:$0xff]
    %v1957 = vld [vmem:[#allocation15 + $0x10] sm:$0xff]
    %v1958 = vld [vmem:[#allocation15 + $0x18] sm:$0xff]
    %v1959 = vld [vmem:[#allocation15 + $0x20] sm:$0xff]
    %v1960 = vld [vmem:[#allocation15 + $0x28] sm:$0xff]
    %v1961 = vld [vmem:[#allocation15 + $0x30] sm:$0xff]
    %v1962 = vld [vmem:[#allocation15 + $0x38] sm:$0xff]
    %v1963 = vld [vmem:[#allocation15 + $0x40] sm:$0xff]
    %v1964 = vld [vmem:[#allocation15 + $0x48] sm:$0xff]
    %v1965 = vld [vmem:[#allocation15 + $0x50] sm:$0xff]
    %v1966 = vld [vmem:[#allocation15 + $0x58] sm:$0xff]
    %v1967 = vld [vmem:[#allocation15 + $0x60] sm:$0xff]
    %v1968 = vld [vmem:[#allocation15 + $0x68] sm:$0xff]
    %v1969 = vld [vmem:[#allocation15 + $0x70] sm:$0xff]
    %v1970 = vld [vmem:[#allocation15 + $0x78] sm:$0xff]
    %v1971 = vpack.c.bf16 %v1954, %v1954
    %v1972 = vld [vmem:[#allocation4 + $0x13] sm:$0x3]
    %v1974 = vperm.slane %v1972, 0
    %v1975 = vperm.slane %v1972, 1
    %v1994 = vunpack.c.l.b16 %v1955
    %v1995 = vunpack.c.h.b16 %v1955
    %v1996 = vunpack.c.l.b16 %v1956
    %v1997 = vunpack.c.h.b16 %v1956
    %v1998 = vunpack.c.l.b16 %v1957
    %v1999 = vunpack.c.h.b16 %v1957
    %v2000 = vunpack.c.l.b16 %v1958
    %v2001 = vunpack.c.h.b16 %v1958
    %v2002 = vunpack.c.l.b16 %v1959
    %v2003 = vunpack.c.h.b16 %v1959
    %v2004 = vunpack.c.l.b16 %v1960
    %v2005 = vunpack.c.h.b16 %v1960
    %v2006 = vunpack.c.l.b16 %v1961
    %v2007 = vunpack.c.h.b16 %v1961
    %v2008 = vunpack.c.l.b16 %v1962
    %v2009 = vunpack.c.h.b16 %v1962
    %v2010 = vunpack.c.l.b16 %v1963
    %v2011 = vunpack.c.h.b16 %v1963
    %v2012 = vunpack.c.l.b16 %v1964
    %v2013 = vunpack.c.h.b16 %v1964
    %v2014 = vunpack.c.l.b16 %v1965
    %v2015 = vunpack.c.h.b16 %v1965
    %v2016 = vunpack.c.l.b16 %v1966
    %v2017 = vunpack.c.h.b16 %v1966
    %v2018 = vunpack.c.l.b16 %v1967
    %v2019 = vunpack.c.h.b16 %v1967
    %v2020 = vunpack.c.l.b16 %v1968
    %v2021 = vunpack.c.h.b16 %v1968
    %v2022 = vunpack.c.l.b16 %v1969
    %v2023 = vunpack.c.h.b16 %v1969
    %v2024 = vunpack.c.l.b16 %v1970
    %v2025 = vunpack.c.h.b16 %v1970
    %v2026 = vpack.c.b16 %v1996, %v1994
    %v2027 = vpack.c.b16 %v1997, %v1995
    %v2028 = vpack.c.b16 %v2000, %v1998
    %v2029 = vpack.c.b16 %v2001, %v1999
    %v2030 = vpack.c.b16 %v2004, %v2002
    %v2031 = vpack.c.b16 %v2005, %v2003
    %v2032 = vpack.c.b16 %v2008, %v2006
    %v2033 = vpack.c.b16 %v2009, %v2007
    %v2034 = vpack.c.b16 %v2012, %v2010
    %v2035 = vpack.c.b16 %v2013, %v2011
    %v2036 = vpack.c.b16 %v2016, %v2014
    %v2037 = vpack.c.b16 %v2017, %v2015
    %v2038 = vpack.c.b16 %v2020, %v2018
    %v2039 = vpack.c.b16 %v2021, %v2019
    %v2040 = vpack.c.b16 %v2024, %v2022
    %v2041 = vpack.c.b16 %v2025, %v2023
    %2058 = vmatpush.bf16.msra.mxu0 %v2040
    %2059 = vmatpush.bf16.msra.mxu0 %v2038
    %2060 = vmatpush.bf16.msra.mxu0 %v2036
    %2061 = vmatpush.bf16.msra.mxu0 %v2034
    %2062 = vmatpush.bf16.msra.mxu0 %v2032
    %2063 = vmatpush.bf16.msra.mxu0 %v2030
    %2064 = vmatpush.bf16.msra.mxu0 %v2028
    %2065 = vmatpush.bf16.msra.mxu0 %v2026
    %2066 = vmatmul.bf16.gmra.mxu0 %v1971
    %v2067 = vpop.f32.mrf.mxu0
    %v2068 = vadd.f32 %v1974, %v2067
    %v2069 = vpop.f32.mrf.mxu0
    %2070 = vdwg.mxu0
    %2071 = vmatpush.bf16.msra.mxu0 %v2041
    %2072 = vmatpush.bf16.msra.mxu0 %v2039
    %2073 = vmatpush.bf16.msra.mxu0 %v2037
    %2074 = vmatpush.bf16.msra.mxu0 %v2035
    %2075 = vmatpush.bf16.msra.mxu0 %v2033
    %2076 = vmatpush.bf16.msra.mxu0 %v2031
    %2077 = vmatpush.bf16.msra.mxu0 %v2029
    %2078 = vmatpush.bf16.msra.mxu0 %v2027
    %2079 = vmatmul.bf16.gmra.mxu0 %v1971
    %v2080 = vpop.f32.mrf.mxu0
    %v2081 = vadd.f32 %v1975, %v2080
    %v2082 = vpop.f32.mrf.mxu0
    %2083 = vdwg.mxu0
    %v2084 = vld [vmem:[#allocation4 + $0x15] sm:$0x3]
    %v2085 = vld [vmem:[#allocation4 + $0x17] sm:$0x3]
    %v2086 = vsel %vm205, %v2068, 0.0
    %v2087 = vrot.slane %v2086, 4
    %v2088 = vadd.f32 %v2086, %v2087
    %v2089 = vrot.slane %v2088, 2
    %v2090 = vadd.f32 %v2088, %v2089
    %v2091 = vrot.slane %v2090, 1
    %v2092 = vadd.f32 %v2090, %v2091
    %v2093 = vsel %vm205, %v2081, 0.0
    %v2094 = vrot.slane %v2093, 4
    %v2095 = vadd.f32 %v2093, %v2094
    %v2096 = vrot.slane %v2095, 2
    %v2097 = vadd.f32 %v2095, %v2096
    %v2098 = vrot.slane %v2097, 1
    %v2099 = vadd.f32 %v2097, %v2098
    %v2100 = vmul.f32 %v2092, %v1262
    %v2101 = vmul.f32 %v2099, %v1262
    %v2102 = vsub.f32 %v2068, %v2100
    %v2103 = vsub.f32 %v2081, %v2101
    %v2104 = vmul.f32 %v2102, %v2102
    %v2105 = vmul.f32 %v2103, %v2103
    %v2106 = vsel %vm205, %v2104, 0.0
    %v2107 = vrot.slane %v2106, 4
    %v2108 = vadd.f32 %v2106, %v2107
    %v2109 = vrot.slane %v2108, 2
    %v2110 = vadd.f32 %v2108, %v2109
    %v2111 = vrot.slane %v2110, 1
    %v2112 = vadd.f32 %v2110, %v2111
    %v2113 = vsel %vm205, %v2105, 0.0
    %v2114 = vrot.slane %v2113, 4
    %v2115 = vadd.f32 %v2113, %v2114
    %v2116 = vrot.slane %v2115, 2
    %v2117 = vadd.f32 %v2115, %v2116
    %v2118 = vrot.slane %v2117, 1
    %v2119 = vadd.f32 %v2117, %v2118
    %v2120 = vmul.f32 %v2112, %v1262
    %v2121 = vmul.f32 %v2119, %v1262
    %v2122 = vadd.f32 %v2120, 1e-05
    %v2123 = vadd.f32 %v2121, 1e-05
    %v2124 = vrsqrt.pop %v2122
    %v2125 = vmul.f32 %v2124, %v2122
    %v2126 = vmul.f32 %v2125, %v2124
    %v2127 = vmul.f32 0.5, %v2126
    %v2128 = vsub.f32 1.5, %v2127
    %v2129 = vmul.f32 %v2124, %v2128
    %vm2130 = vweird.f32 %v2122
    %vm2131 = vweird.f32 %v2124
    %vm2132 = vmor %vm2130, %vm2131
    %v2133 = vsel %vm2132, %v2124, %v2129
    %v2134 = vrsqrt.pop %v2123
    %v2135 = vmul.f32 %v2134, %v2123
    %v2136 = vmul.f32 %v2135, %v2134
    %v2137 = vmul.f32 0.5, %v2136
    %v2138 = vsub.f32 1.5, %v2137
    %v2139 = vmul.f32 %v2134, %v2138
    %vm2140 = vweird.f32 %v2123
    %vm2141 = vweird.f32 %v2134
    %vm2142 = vmor %vm2140, %vm2141
    %v2143 = vsel %vm2142, %v2134, %v2139
    %v2144 = vmul.f32 %v2102, %v2133
    %v2145 = vmul.f32 %v2103, %v2143
    %v2147 = vperm.slane %v2084, 0
    %v2148 = vperm.slane %v2084, 1
    %v2151 = vmul.f32 %v2144, %v2147
    %v2152 = vmul.f32 %v2145, %v2148
    %v2154 = vperm.slane %v2085, 0
    %v2155 = vperm.slane %v2085, 1
    %v2158 = vadd.f32 %v2151, %v2154
    %v2159 = vadd.f32 %v2152, %v2155
    %v2160 = vmax.f32 %v2158, 0.0
    %v2161 = vmax.f32 %v2159, 0.0
    %s2162 = smul.u32 4, 32
    %s2163 = smul.u32 %s2162, 8
    %s2164 = sshll.u32 %s2163, 4
    %2165 = dma.done [#allocation3], %s2164
    %v2166 = vld [vmem:[#allocation2] sm:$0xff]
    %v2167 = vld [vmem:[#allocation2 + $0x8] sm:$0xff]
    %v2168 = vld [vmem:[#allocation2 + $0x10] sm:$0xff]
    %v2169 = vld [vmem:[#allocation2 + $0x18] sm:$0xff]
    %v2170 = vld [vmem:[#allocation2 + $0x20] sm:$0xff]
    %v2171 = vld [vmem:[#allocation2 + $0x28] sm:$0xff]
    %v2172 = vld [vmem:[#allocation2 + $0x30] sm:$0xff]
    %v2173 = vld [vmem:[#allocation2 + $0x38] sm:$0xff]
    %v2174 = vld [vmem:[#allocation2 + $0x40] sm:$0xff]
    %v2175 = vld [vmem:[#allocation2 + $0x48] sm:$0xff]
    %v2176 = vld [vmem:[#allocation2 + $0x50] sm:$0xff]
    %v2177 = vld [vmem:[#allocation2 + $0x58] sm:$0xff]
    %v2178 = vld [vmem:[#allocation2 + $0x60] sm:$0xff]
    %v2179 = vld [vmem:[#allocation2 + $0x68] sm:$0xff]
    %v2180 = vld [vmem:[#allocation2 + $0x70] sm:$0xff]
    %v2181 = vld [vmem:[#allocation2 + $0x78] sm:$0xff]
    %v2182 = vld [vmem:[#allocation2 + $0x80] sm:$0xff]
    %v2183 = vld [vmem:[#allocation2 + $0x88] sm:$0xff]
    %v2184 = vld [vmem:[#allocation2 + $0x90] sm:$0xff]
    %v2185 = vld [vmem:[#allocation2 + $0x98] sm:$0xff]
    %v2186 = vld [vmem:[#allocation2 + $0xa0] sm:$0xff]
    %v2187 = vld [vmem:[#allocation2 + $0xa8] sm:$0xff]
    %v2188 = vld [vmem:[#allocation2 + $0xb0] sm:$0xff]
    %v2189 = vld [vmem:[#allocation2 + $0xb8] sm:$0xff]
    %v2190 = vld [vmem:[#allocation2 + $0xc0] sm:$0xff]
    %v2191 = vld [vmem:[#allocation2 + $0xc8] sm:$0xff]
    %v2192 = vld [vmem:[#allocation2 + $0xd0] sm:$0xff]
    %v2193 = vld [vmem:[#allocation2 + $0xd8] sm:$0xff]
    %v2194 = vld [vmem:[#allocation2 + $0xe0] sm:$0xff]
    %v2195 = vld [vmem:[#allocation2 + $0xe8] sm:$0xff]
    %v2196 = vld [vmem:[#allocation2 + $0xf0] sm:$0xff]
    %v2197 = vld [vmem:[#allocation2 + $0xf8] sm:$0xff]
    %v2198 = vld [vmem:[#allocation2 + $0x100] sm:$0xff]
    %v2199 = vld [vmem:[#allocation2 + $0x108] sm:$0xff]
    %v2200 = vld [vmem:[#allocation2 + $0x110] sm:$0xff]
    %v2201 = vld [vmem:[#allocation2 + $0x118] sm:$0xff]
    %v2202 = vld [vmem:[#allocation2 + $0x120] sm:$0xff]
    %v2203 = vld [vmem:[#allocation2 + $0x128] sm:$0xff]
    %v2204 = vld [vmem:[#allocation2 + $0x130] sm:$0xff]
    %v2205 = vld [vmem:[#allocation2 + $0x138] sm:$0xff]
    %v2206 = vld [vmem:[#allocation2 + $0x140] sm:$0xff]
    %v2207 = vld [vmem:[#allocation2 + $0x148] sm:$0xff]
    %v2208 = vld [vmem:[#allocation2 + $0x150] sm:$0xff]
    %v2209 = vld [vmem:[#allocation2 + $0x158] sm:$0xff]
    %v2210 = vld [vmem:[#allocation2 + $0x160] sm:$0xff]
    %v2211 = vld [vmem:[#allocation2 + $0x168] sm:$0xff]
    %v2212 = vld [vmem:[#allocation2 + $0x170] sm:$0xff]
    %v2213 = vld [vmem:[#allocation2 + $0x178] sm:$0xff]
    %v2214 = vld [vmem:[#allocation2 + $0x180] sm:$0xff]
    %v2215 = vld [vmem:[#allocation2 + $0x188] sm:$0xff]
    %v2216 = vld [vmem:[#allocation2 + $0x190] sm:$0xff]
    %v2217 = vld [vmem:[#allocation2 + $0x198] sm:$0xff]
    %v2218 = vld [vmem:[#allocation2 + $0x1a0] sm:$0xff]
    %v2219 = vld [vmem:[#allocation2 + $0x1a8] sm:$0xff]
    %v2220 = vld [vmem:[#allocation2 + $0x1b0] sm:$0xff]
    %v2221 = vld [vmem:[#allocation2 + $0x1b8] sm:$0xff]
    %v2222 = vld [vmem:[#allocation2 + $0x1c0] sm:$0xff]
    %v2223 = vld [vmem:[#allocation2 + $0x1c8] sm:$0xff]
    %v2224 = vld [vmem:[#allocation2 + $0x1d0] sm:$0xff]
    %v2225 = vld [vmem:[#allocation2 + $0x1d8] sm:$0xff]
    %v2226 = vld [vmem:[#allocation2 + $0x1e0] sm:$0xff]
    %v2227 = vld [vmem:[#allocation2 + $0x1e8] sm:$0xff]
    %v2228 = vld [vmem:[#allocation2 + $0x1f0] sm:$0xff]
    %v2229 = vld [vmem:[#allocation2 + $0x1f8] sm:$0xff]
    %v2230 = vld [vmem:[#allocation2 + $0x200] sm:$0xff]
    %v2231 = vld [vmem:[#allocation2 + $0x208] sm:$0xff]
    %v2232 = vld [vmem:[#allocation2 + $0x210] sm:$0xff]
    %v2233 = vld [vmem:[#allocation2 + $0x218] sm:$0xff]
    %v2234 = vld [vmem:[#allocation2 + $0x220] sm:$0xff]
    %v2235 = vld [vmem:[#allocation2 + $0x228] sm:$0xff]
    %v2236 = vld [vmem:[#allocation2 + $0x230] sm:$0xff]
    %v2237 = vld [vmem:[#allocation2 + $0x238] sm:$0xff]
    %v2238 = vld [vmem:[#allocation2 + $0x240] sm:$0xff]
    %v2239 = vld [vmem:[#allocation2 + $0x248] sm:$0xff]
    %v2240 = vld [vmem:[#allocation2 + $0x250] sm:$0xff]
    %v2241 = vld [vmem:[#allocation2 + $0x258] sm:$0xff]
    %v2242 = vld [vmem:[#allocation2 + $0x260] sm:$0xff]
    %v2243 = vld [vmem:[#allocation2 + $0x268] sm:$0xff]
    %v2244 = vld [vmem:[#allocation2 + $0x270] sm:$0xff]
    %v2245 = vld [vmem:[#allocation2 + $0x278] sm:$0xff]
    %v2246 = vld [vmem:[#allocation2 + $0x280] sm:$0xff]
    %v2247 = vld [vmem:[#allocation2 + $0x288] sm:$0xff]
    %v2248 = vld [vmem:[#allocation2 + $0x290] sm:$0xff]
    %v2249 = vld [vmem:[#allocation2 + $0x298] sm:$0xff]
    %v2250 = vld [vmem:[#allocation2 + $0x2a0] sm:$0xff]
    %v2251 = vld [vmem:[#allocation2 + $0x2a8] sm:$0xff]
    %v2252 = vld [vmem:[#allocation2 + $0x2b0] sm:$0xff]
    %v2253 = vld [vmem:[#allocation2 + $0x2b8] sm:$0xff]
    %v2254 = vld [vmem:[#allocation2 + $0x2c0] sm:$0xff]
    %v2255 = vld [vmem:[#allocation2 + $0x2c8] sm:$0xff]
    %v2256 = vld [vmem:[#allocation2 + $0x2d0] sm:$0xff]
    %v2257 = vld [vmem:[#allocation2 + $0x2d8] sm:$0xff]
    %v2258 = vld [vmem:[#allocation2 + $0x2e0] sm:$0xff]
    %v2259 = vld [vmem:[#allocation2 + $0x2e8] sm:$0xff]
    %v2260 = vld [vmem:[#allocation2 + $0x2f0] sm:$0xff]
    %v2261 = vld [vmem:[#allocation2 + $0x2f8] sm:$0xff]
    %v2262 = vld [vmem:[#allocation2 + $0x300] sm:$0xff]
    %v2263 = vld [vmem:[#allocation2 + $0x308] sm:$0xff]
    %v2264 = vld [vmem:[#allocation2 + $0x310] sm:$0xff]
    %v2265 = vld [vmem:[#allocation2 + $0x318] sm:$0xff]
    %v2266 = vld [vmem:[#allocation2 + $0x320] sm:$0xff]
    %v2267 = vld [vmem:[#allocation2 + $0x328] sm:$0xff]
    %v2268 = vld [vmem:[#allocation2 + $0x330] sm:$0xff]
    %v2269 = vld [vmem:[#allocation2 + $0x338] sm:$0xff]
    %v2270 = vld [vmem:[#allocation2 + $0x340] sm:$0xff]
    %v2271 = vld [vmem:[#allocation2 + $0x348] sm:$0xff]
    %v2272 = vld [vmem:[#allocation2 + $0x350] sm:$0xff]
    %v2273 = vld [vmem:[#allocation2 + $0x358] sm:$0xff]
    %v2274 = vld [vmem:[#allocation2 + $0x360] sm:$0xff]
    %v2275 = vld [vmem:[#allocation2 + $0x368] sm:$0xff]
    %v2276 = vld [vmem:[#allocation2 + $0x370] sm:$0xff]
    %v2277 = vld [vmem:[#allocation2 + $0x378] sm:$0xff]
    %v2278 = vld [vmem:[#allocation2 + $0x380] sm:$0xff]
    %v2279 = vld [vmem:[#allocation2 + $0x388] sm:$0xff]
    %v2280 = vld [vmem:[#allocation2 + $0x390] sm:$0xff]
    %v2281 = vld [vmem:[#allocation2 + $0x398] sm:$0xff]
    %v2282 = vld [vmem:[#allocation2 + $0x3a0] sm:$0xff]
    %v2283 = vld [vmem:[#allocation2 + $0x3a8] sm:$0xff]
    %v2284 = vld [vmem:[#allocation2 + $0x3b0] sm:$0xff]
    %v2285 = vld [vmem:[#allocation2 + $0x3b8] sm:$0xff]
    %v2286 = vld [vmem:[#allocation2 + $0x3c0] sm:$0xff]
    %v2287 = vld [vmem:[#allocation2 + $0x3c8] sm:$0xff]
    %v2288 = vld [vmem:[#allocation2 + $0x3d0] sm:$0xff]
    %v2289 = vld [vmem:[#allocation2 + $0x3d8] sm:$0xff]
    %v2290 = vld [vmem:[#allocation2 + $0x3e0] sm:$0xff]
    %v2291 = vld [vmem:[#allocation2 + $0x3e8] sm:$0xff]
    %v2292 = vld [vmem:[#allocation2 + $0x3f0] sm:$0xff]
    %v2293 = vld [vmem:[#allocation2 + $0x3f8] sm:$0xff]
    %v2294 = vpack.c.bf16 %v2160, %v2160
    %v2295 = vpack.c.bf16 %v2161, %v2161
    %v2296 = vld [vmem:[#allocation4 + $0x19] sm:$0xff]
    %v2298 = vperm.slane %v2296, 0
    %v2299 = vperm.slane %v2296, 1
    %v2300 = vperm.slane %v2296, 2
    %v2301 = vperm.slane %v2296, 3
    %v2302 = vperm.slane %v2296, 4
    %v2303 = vperm.slane %v2296, 5
    %v2304 = vperm.slane %v2296, 6
    %v2305 = vperm.slane %v2296, 7
    %v2442 = vunpack.c.l.b16 %v2166
    %v2443 = vunpack.c.h.b16 %v2166
    %v2444 = vunpack.c.l.b16 %v2167
    %v2445 = vunpack.c.h.b16 %v2167
    %v2446 = vunpack.c.l.b16 %v2168
    %v2447 = vunpack.c.h.b16 %v2168
    %v2448 = vunpack.c.l.b16 %v2169
    %v2449 = vunpack.c.h.b16 %v2169
    %v2450 = vunpack.c.l.b16 %v2170
    %v2451 = vunpack.c.h.b16 %v2170
    %v2452 = vunpack.c.l.b16 %v2171
    %v2453 = vunpack.c.h.b16 %v2171
    %v2454 = vunpack.c.l.b16 %v2172
    %v2455 = vunpack.c.h.b16 %v2172
    %v2456 = vunpack.c.l.b16 %v2173
    %v2457 = vunpack.c.h.b16 %v2173
    %v2458 = vunpack.c.l.b16 %v2174
    %v2459 = vunpack.c.h.b16 %v2174
    %v2460 = vunpack.c.l.b16 %v2175
    %v2461 = vunpack.c.h.b16 %v2175
    %v2462 = vunpack.c.l.b16 %v2176
    %v2463 = vunpack.c.h.b16 %v2176
    %v2464 = vunpack.c.l.b16 %v2177
    %v2465 = vunpack.c.h.b16 %v2177
    %v2466 = vunpack.c.l.b16 %v2178
    %v2467 = vunpack.c.h.b16 %v2178
    %v2468 = vunpack.c.l.b16 %v2179
    %v2469 = vunpack.c.h.b16 %v2179
    %v2470 = vunpack.c.l.b16 %v2180
    %v2471 = vunpack.c.h.b16 %v2180
    %v2472 = vunpack.c.l.b16 %v2181
    %v2473 = vunpack.c.h.b16 %v2181
    %v2474 = vunpack.c.l.b16 %v2182
    %v2475 = vunpack.c.h.b16 %v2182
    %v2476 = vunpack.c.l.b16 %v2183
    %v2477 = vunpack.c.h.b16 %v2183
    %v2478 = vunpack.c.l.b16 %v2184
    %v2479 = vunpack.c.h.b16 %v2184
    %v2480 = vunpack.c.l.b16 %v2185
    %v2481 = vunpack.c.h.b16 %v2185
    %v2482 = vunpack.c.l.b16 %v2186
    %v2483 = vunpack.c.h.b16 %v2186
    %v2484 = vunpack.c.l.b16 %v2187
    %v2485 = vunpack.c.h.b16 %v2187
    %v2486 = vunpack.c.l.b16 %v2188
    %v2487 = vunpack.c.h.b16 %v2188
    %v2488 = vunpack.c.l.b16 %v2189
    %v2489 = vunpack.c.h.b16 %v2189
    %v2490 = vunpack.c.l.b16 %v2190
    %v2491 = vunpack.c.h.b16 %v2190
    %v2492 = vunpack.c.l.b16 %v2191
    %v2493 = vunpack.c.h.b16 %v2191
    %v2494 = vunpack.c.l.b16 %v2192
    %v2495 = vunpack.c.h.b16 %v2192
    %v2496 = vunpack.c.l.b16 %v2193
    %v2497 = vunpack.c.h.b16 %v2193
    %v2498 = vunpack.c.l.b16 %v2194
    %v2499 = vunpack.c.h.b16 %v2194
    %v2500 = vunpack.c.l.b16 %v2195
    %v2501 = vunpack.c.h.b16 %v2195
    %v2502 = vunpack.c.l.b16 %v2196
    %v2503 = vunpack.c.h.b16 %v2196
    %v2504 = vunpack.c.l.b16 %v2197
    %v2505 = vunpack.c.h.b16 %v2197
    %v2506 = vunpack.c.l.b16 %v2198
    %v2507 = vunpack.c.h.b16 %v2198
    %v2508 = vunpack.c.l.b16 %v2199
    %v2509 = vunpack.c.h.b16 %v2199
    %v2510 = vunpack.c.l.b16 %v2200
    %v2511 = vunpack.c.h.b16 %v2200
    %v2512 = vunpack.c.l.b16 %v2201
    %v2513 = vunpack.c.h.b16 %v2201
    %v2514 = vunpack.c.l.b16 %v2202
    %v2515 = vunpack.c.h.b16 %v2202
    %v2516 = vunpack.c.l.b16 %v2203
    %v2517 = vunpack.c.h.b16 %v2203
    %v2518 = vunpack.c.l.b16 %v2204
    %v2519 = vunpack.c.h.b16 %v2204
    %v2520 = vunpack.c.l.b16 %v2205
    %v2521 = vunpack.c.h.b16 %v2205
    %v2522 = vunpack.c.l.b16 %v2206
    %v2523 = vunpack.c.h.b16 %v2206
    %v2524 = vunpack.c.l.b16 %v2207
    %v2525 = vunpack.c.h.b16 %v2207
    %v2526 = vunpack.c.l.b16 %v2208
    %v2527 = vunpack.c.h.b16 %v2208
    %v2528 = vunpack.c.l.b16 %v2209
    %v2529 = vunpack.c.h.b16 %v2209
    %v2530 = vunpack.c.l.b16 %v2210
    %v2531 = vunpack.c.h.b16 %v2210
    %v2532 = vunpack.c.l.b16 %v2211
    %v2533 = vunpack.c.h.b16 %v2211
    %v2534 = vunpack.c.l.b16 %v2212
    %v2535 = vunpack.c.h.b16 %v2212
    %v2536 = vunpack.c.l.b16 %v2213
    %v2537 = vunpack.c.h.b16 %v2213
    %v2538 = vunpack.c.l.b16 %v2214
    %v2539 = vunpack.c.h.b16 %v2214
    %v2540 = vunpack.c.l.b16 %v2215
    %v2541 = vunpack.c.h.b16 %v2215
    %v2542 = vunpack.c.l.b16 %v2216
    %v2543 = vunpack.c.h.b16 %v2216
    %v2544 = vunpack.c.l.b16 %v2217
    %v2545 = vunpack.c.h.b16 %v2217
    %v2546 = vunpack.c.l.b16 %v2218
    %v2547 = vunpack.c.h.b16 %v2218
    %v2548 = vunpack.c.l.b16 %v2219
    %v2549 = vunpack.c.h.b16 %v2219
    %v2550 = vunpack.c.l.b16 %v2220
    %v2551 = vunpack.c.h.b16 %v2220
    %v2552 = vunpack.c.l.b16 %v2221
    %v2553 = vunpack.c.h.b16 %v2221
    %v2554 = vunpack.c.l.b16 %v2222
    %v2555 = vunpack.c.h.b16 %v2222
    %v2556 = vunpack.c.l.b16 %v2223
    %v2557 = vunpack.c.h.b16 %v2223
    %v2558 = vunpack.c.l.b16 %v2224
    %v2559 = vunpack.c.h.b16 %v2224
    %v2560 = vunpack.c.l.b16 %v2225
    %v2561 = vunpack.c.h.b16 %v2225
    %v2562 = vunpack.c.l.b16 %v2226
    %v2563 = vunpack.c.h.b16 %v2226
    %v2564 = vunpack.c.l.b16 %v2227
    %v2565 = vunpack.c.h.b16 %v2227
    %v2566 = vunpack.c.l.b16 %v2228
    %v2567 = vunpack.c.h.b16 %v2228
    %v2568 = vunpack.c.l.b16 %v2229
    %v2569 = vunpack.c.h.b16 %v2229
    %v2570 = vunpack.c.l.b16 %v2230
    %v2571 = vunpack.c.h.b16 %v2230
    %v2572 = vunpack.c.l.b16 %v2231
    %v2573 = vunpack.c.h.b16 %v2231
    %v2574 = vunpack.c.l.b16 %v2232
    %v2575 = vunpack.c.h.b16 %v2232
    %v2576 = vunpack.c.l.b16 %v2233
    %v2577 = vunpack.c.h.b16 %v2233
    %v2578 = vunpack.c.l.b16 %v2234
    %v2579 = vunpack.c.h.b16 %v2234
    %v2580 = vunpack.c.l.b16 %v2235
    %v2581 = vunpack.c.h.b16 %v2235
    %v2582 = vunpack.c.l.b16 %v2236
    %v2583 = vunpack.c.h.b16 %v2236
    %v2584 = vunpack.c.l.b16 %v2237
    %v2585 = vunpack.c.h.b16 %v2237
    %v2586 = vunpack.c.l.b16 %v2238
    %v2587 = vunpack.c.h.b16 %v2238
    %v2588 = vunpack.c.l.b16 %v2239
    %v2589 = vunpack.c.h.b16 %v2239
    %v2590 = vunpack.c.l.b16 %v2240
    %v2591 = vunpack.c.h.b16 %v2240
    %v2592 = vunpack.c.l.b16 %v2241
    %v2593 = vunpack.c.h.b16 %v2241
    %v2594 = vunpack.c.l.b16 %v2242
    %v2595 = vunpack.c.h.b16 %v2242
    %v2596 = vunpack.c.l.b16 %v2243
    %v2597 = vunpack.c.h.b16 %v2243
    %v2598 = vunpack.c.l.b16 %v2244
    %v2599 = vunpack.c.h.b16 %v2244
    %v2600 = vunpack.c.l.b16 %v2245
    %v2601 = vunpack.c.h.b16 %v2245
    %v2602 = vunpack.c.l.b16 %v2246
    %v2603 = vunpack.c.h.b16 %v2246
    %v2604 = vunpack.c.l.b16 %v2247
    %v2605 = vunpack.c.h.b16 %v2247
    %v2606 = vunpack.c.l.b16 %v2248
    %v2607 = vunpack.c.h.b16 %v2248
    %v2608 = vunpack.c.l.b16 %v2249
    %v2609 = vunpack.c.h.b16 %v2249
    %v2610 = vunpack.c.l.b16 %v2250
    %v2611 = vunpack.c.h.b16 %v2250
    %v2612 = vunpack.c.l.b16 %v2251
    %v2613 = vunpack.c.h.b16 %v2251
    %v2614 = vunpack.c.l.b16 %v2252
    %v2615 = vunpack.c.h.b16 %v2252
    %v2616 = vunpack.c.l.b16 %v2253
    %v2617 = vunpack.c.h.b16 %v2253
    %v2618 = vunpack.c.l.b16 %v2254
    %v2619 = vunpack.c.h.b16 %v2254
    %v2620 = vunpack.c.l.b16 %v2255
    %v2621 = vunpack.c.h.b16 %v2255
    %v2622 = vunpack.c.l.b16 %v2256
    %v2623 = vunpack.c.h.b16 %v2256
    %v2624 = vunpack.c.l.b16 %v2257
    %v2625 = vunpack.c.h.b16 %v2257
    %v2626 = vunpack.c.l.b16 %v2258
    %v2627 = vunpack.c.h.b16 %v2258
    %v2628 = vunpack.c.l.b16 %v2259
    %v2629 = vunpack.c.h.b16 %v2259
    %v2630 = vunpack.c.l.b16 %v2260
    %v2631 = vunpack.c.h.b16 %v2260
    %v2632 = vunpack.c.l.b16 %v2261
    %v2633 = vunpack.c.h.b16 %v2261
    %v2634 = vunpack.c.l.b16 %v2262
    %v2635 = vunpack.c.h.b16 %v2262
    %v2636 = vunpack.c.l.b16 %v2263
    %v2637 = vunpack.c.h.b16 %v2263
    %v2638 = vunpack.c.l.b16 %v2264
    %v2639 = vunpack.c.h.b16 %v2264
    %v2640 = vunpack.c.l.b16 %v2265
    %v2641 = vunpack.c.h.b16 %v2265
    %v2642 = vunpack.c.l.b16 %v2266
    %v2643 = vunpack.c.h.b16 %v2266
    %v2644 = vunpack.c.l.b16 %v2267
    %v2645 = vunpack.c.h.b16 %v2267
    %v2646 = vunpack.c.l.b16 %v2268
    %v2647 = vunpack.c.h.b16 %v2268
    %v2648 = vunpack.c.l.b16 %v2269
    %v2649 = vunpack.c.h.b16 %v2269
    %v2650 = vunpack.c.l.b16 %v2270
    %v2651 = vunpack.c.h.b16 %v2270
    %v2652 = vunpack.c.l.b16 %v2271
    %v2653 = vunpack.c.h.b16 %v2271
    %v2654 = vunpack.c.l.b16 %v2272
    %v2655 = vunpack.c.h.b16 %v2272
    %v2656 = vunpack.c.l.b16 %v2273
    %v2657 = vunpack.c.h.b16 %v2273
    %v2658 = vunpack.c.l.b16 %v2274
    %v2659 = vunpack.c.h.b16 %v2274
    %v2660 = vunpack.c.l.b16 %v2275
    %v2661 = vunpack.c.h.b16 %v2275
    %v2662 = vunpack.c.l.b16 %v2276
    %v2663 = vunpack.c.h.b16 %v2276
    %v2664 = vunpack.c.l.b16 %v2277
    %v2665 = vunpack.c.h.b16 %v2277
    %v2666 = vunpack.c.l.b16 %v2278
    %v2667 = vunpack.c.h.b16 %v2278
    %v2668 = vunpack.c.l.b16 %v2279
    %v2669 = vunpack.c.h.b16 %v2279
    %v2670 = vunpack.c.l.b16 %v2280
    %v2671 = vunpack.c.h.b16 %v2280
    %v2672 = vunpack.c.l.b16 %v2281
    %v2673 = vunpack.c.h.b16 %v2281
    %v2674 = vunpack.c.l.b16 %v2282
    %v2675 = vunpack.c.h.b16 %v2282
    %v2676 = vunpack.c.l.b16 %v2283
    %v2677 = vunpack.c.h.b16 %v2283
    %v2678 = vunpack.c.l.b16 %v2284
    %v2679 = vunpack.c.h.b16 %v2284
    %v2680 = vunpack.c.l.b16 %v2285
    %v2681 = vunpack.c.h.b16 %v2285
    %v2682 = vunpack.c.l.b16 %v2286
    %v2683 = vunpack.c.h.b16 %v2286
    %v2684 = vunpack.c.l.b16 %v2287
    %v2685 = vunpack.c.h.b16 %v2287
    %v2686 = vunpack.c.l.b16 %v2288
    %v2687 = vunpack.c.h.b16 %v2288
    %v2688 = vunpack.c.l.b16 %v2289
    %v2689 = vunpack.c.h.b16 %v2289
    %v2690 = vunpack.c.l.b16 %v2290
    %v2691 = vunpack.c.h.b16 %v2290
    %v2692 = vunpack.c.l.b16 %v2291
    %v2693 = vunpack.c.h.b16 %v2291
    %v2694 = vunpack.c.l.b16 %v2292
    %v2695 = vunpack.c.h.b16 %v2292
    %v2696 = vunpack.c.l.b16 %v2293
    %v2697 = vunpack.c.h.b16 %v2293
    %v2698 = vpack.c.b16 %v2450, %v2442
    %v2699 = vpack.c.b16 %v2451, %v2443
    %v2700 = vpack.c.b16 %v2452, %v2444
    %v2701 = vpack.c.b16 %v2453, %v2445
    %v2702 = vpack.c.b16 %v2454, %v2446
    %v2703 = vpack.c.b16 %v2455, %v2447
    %v2704 = vpack.c.b16 %v2456, %v2448
    %v2705 = vpack.c.b16 %v2457, %v2449
    %v2706 = vpack.c.b16 %v2466, %v2458
    %v2707 = vpack.c.b16 %v2467, %v2459
    %v2708 = vpack.c.b16 %v2468, %v2460
    %v2709 = vpack.c.b16 %v2469, %v2461
    %v2710 = vpack.c.b16 %v2470, %v2462
    %v2711 = vpack.c.b16 %v2471, %v2463
    %v2712 = vpack.c.b16 %v2472, %v2464
    %v2713 = vpack.c.b16 %v2473, %v2465
    %v2714 = vpack.c.b16 %v2482, %v2474
    %v2715 = vpack.c.b16 %v2483, %v2475
    %v2716 = vpack.c.b16 %v2484, %v2476
    %v2717 = vpack.c.b16 %v2485, %v2477
    %v2718 = vpack.c.b16 %v2486, %v2478
    %v2719 = vpack.c.b16 %v2487, %v2479
    %v2720 = vpack.c.b16 %v2488, %v2480
    %v2721 = vpack.c.b16 %v2489, %v2481
    %v2722 = vpack.c.b16 %v2498, %v2490
    %v2723 = vpack.c.b16 %v2499, %v2491
    %v2724 = vpack.c.b16 %v2500, %v2492
    %v2725 = vpack.c.b16 %v2501, %v2493
    %v2726 = vpack.c.b16 %v2502, %v2494
    %v2727 = vpack.c.b16 %v2503, %v2495
    %v2728 = vpack.c.b16 %v2504, %v2496
    %v2729 = vpack.c.b16 %v2505, %v2497
    %v2730 = vpack.c.b16 %v2514, %v2506
    %v2731 = vpack.c.b16 %v2515, %v2507
    %v2732 = vpack.c.b16 %v2516, %v2508
    %v2733 = vpack.c.b16 %v2517, %v2509
    %v2734 = vpack.c.b16 %v2518, %v2510
    %v2735 = vpack.c.b16 %v2519, %v2511
    %v2736 = vpack.c.b16 %v2520, %v2512
    %v2737 = vpack.c.b16 %v2521, %v2513
    %v2738 = vpack.c.b16 %v2530, %v2522
    %v2739 = vpack.c.b16 %v2531, %v2523
    %v2740 = vpack.c.b16 %v2532, %v2524
    %v2741 = vpack.c.b16 %v2533, %v2525
    %v2742 = vpack.c.b16 %v2534, %v2526
    %v2743 = vpack.c.b16 %v2535, %v2527
    %v2744 = vpack.c.b16 %v2536, %v2528
    %v2745 = vpack.c.b16 %v2537, %v2529
    %v2746 = vpack.c.b16 %v2546, %v2538
    %v2747 = vpack.c.b16 %v2547, %v2539
    %v2748 = vpack.c.b16 %v2548, %v2540
    %v2749 = vpack.c.b16 %v2549, %v2541
    %v2750 = vpack.c.b16 %v2550, %v2542
    %v2751 = vpack.c.b16 %v2551, %v2543
    %v2752 = vpack.c.b16 %v2552, %v2544
    %v2753 = vpack.c.b16 %v2553, %v2545
    %v2754 = vpack.c.b16 %v2562, %v2554
    %v2755 = vpack.c.b16 %v2563, %v2555
    %v2756 = vpack.c.b16 %v2564, %v2556
    %v2757 = vpack.c.b16 %v2565, %v2557
    %v2758 = vpack.c.b16 %v2566, %v2558
    %v2759 = vpack.c.b16 %v2567, %v2559
    %v2760 = vpack.c.b16 %v2568, %v2560
    %v2761 = vpack.c.b16 %v2569, %v2561
    %v2762 = vpack.c.b16 %v2578, %v2570
    %v2763 = vpack.c.b16 %v2579, %v2571
    %v2764 = vpack.c.b16 %v2580, %v2572
    %v2765 = vpack.c.b16 %v2581, %v2573
    %v2766 = vpack.c.b16 %v2582, %v2574
    %v2767 = vpack.c.b16 %v2583, %v2575
    %v2768 = vpack.c.b16 %v2584, %v2576
    %v2769 = vpack.c.b16 %v2585, %v2577
    %v2770 = vpack.c.b16 %v2594, %v2586
    %v2771 = vpack.c.b16 %v2595, %v2587
    %v2772 = vpack.c.b16 %v2596, %v2588
    %v2773 = vpack.c.b16 %v2597, %v2589
    %v2774 = vpack.c.b16 %v2598, %v2590
    %v2775 = vpack.c.b16 %v2599, %v2591
    %v2776 = vpack.c.b16 %v2600, %v2592
    %v2777 = vpack.c.b16 %v2601, %v2593
    %v2778 = vpack.c.b16 %v2610, %v2602
    %v2779 = vpack.c.b16 %v2611, %v2603
    %v2780 = vpack.c.b16 %v2612, %v2604
    %v2781 = vpack.c.b16 %v2613, %v2605
    %v2782 = vpack.c.b16 %v2614, %v2606
    %v2783 = vpack.c.b16 %v2615, %v2607
    %v2784 = vpack.c.b16 %v2616, %v2608
    %v2785 = vpack.c.b16 %v2617, %v2609
    %v2786 = vpack.c.b16 %v2626, %v2618
    %v2787 = vpack.c.b16 %v2627, %v2619
    %v2788 = vpack.c.b16 %v2628, %v2620
    %v2789 = vpack.c.b16 %v2629, %v2621
    %v2790 = vpack.c.b16 %v2630, %v2622
    %v2791 = vpack.c.b16 %v2631, %v2623
    %v2792 = vpack.c.b16 %v2632, %v2624
    %v2793 = vpack.c.b16 %v2633, %v2625
    %v2794 = vpack.c.b16 %v2642, %v2634
    %v2795 = vpack.c.b16 %v2643, %v2635
    %v2796 = vpack.c.b16 %v2644, %v2636
    %v2797 = vpack.c.b16 %v2645, %v2637
    %v2798 = vpack.c.b16 %v2646, %v2638
    %v2799 = vpack.c.b16 %v2647, %v2639
    %v2800 = vpack.c.b16 %v2648, %v2640
    %v2801 = vpack.c.b16 %v2649, %v2641
    %v2802 = vpack.c.b16 %v2658, %v2650
    %v2803 = vpack.c.b16 %v2659, %v2651
    %v2804 = vpack.c.b16 %v2660, %v2652
    %v2805 = vpack.c.b16 %v2661, %v2653
    %v2806 = vpack.c.b16 %v2662, %v2654
    %v2807 = vpack.c.b16 %v2663, %v2655
    %v2808 = vpack.c.b16 %v2664, %v2656
    %v2809 = vpack.c.b16 %v2665, %v2657
    %v2810 = vpack.c.b16 %v2674, %v2666
    %v2811 = vpack.c.b16 %v2675, %v2667
    %v2812 = vpack.c.b16 %v2676, %v2668
    %v2813 = vpack.c.b16 %v2677, %v2669
    %v2814 = vpack.c.b16 %v2678, %v2670
    %v2815 = vpack.c.b16 %v2679, %v2671
    %v2816 = vpack.c.b16 %v2680, %v2672
    %v2817 = vpack.c.b16 %v2681, %v2673
    %v2818 = vpack.c.b16 %v2690, %v2682
    %v2819 = vpack.c.b16 %v2691, %v2683
    %v2820 = vpack.c.b16 %v2692, %v2684
    %v2821 = vpack.c.b16 %v2693, %v2685
    %v2822 = vpack.c.b16 %v2694, %v2686
    %v2823 = vpack.c.b16 %v2695, %v2687
    %v2824 = vpack.c.b16 %v2696, %v2688
    %v2825 = vpack.c.b16 %v2697, %v2689
    %2954 = vmatpush.bf16.msra.mxu0 %v2754
    %2955 = vmatpush.bf16.msra.mxu0 %v2746
    %2956 = vmatpush.bf16.msra.mxu0 %v2738
    %2957 = vmatpush.bf16.msra.mxu0 %v2730
    %2958 = vmatpush.bf16.msra.mxu0 %v2722
    %2959 = vmatpush.bf16.msra.mxu0 %v2714
    %2960 = vmatpush.bf16.msra.mxu0 %v2706
    %2961 = vmatpush.bf16.msra.mxu0 %v2698
    %2962 = vmatmul.bf16.gmra.mxu0 %v2294
    %v2963 = vpop.f32.mrf.mxu0
    %v2964 = vadd.f32 %v2298, %v2963
    %v2965 = vpop.f32.mrf.mxu0
    %2966 = vdwg.mxu0
    %2967 = vmatpush.bf16.msra.mxu0 %v2818
    %2968 = vmatpush.bf16.msra.mxu0 %v2810
    %2969 = vmatpush.bf16.msra.mxu0 %v2802
    %2970 = vmatpush.bf16.msra.mxu0 %v2794
    %2971 = vmatpush.bf16.msra.mxu0 %v2786
    %2972 = vmatpush.bf16.msra.mxu0 %v2778
    %2973 = vmatpush.bf16.msra.mxu0 %v2770
    %2974 = vmatpush.bf16.msra.mxu0 %v2762
    %2975 = vmatmul.bf16.gmra.mxu0 %v2295
    %v2976 = vpop.f32.mrf.mxu0
    %v2977 = vadd.f32 %v2964, %v2976
    %v2978 = vpop.f32.mrf.mxu0
    %2979 = vdwg.mxu0
    %2980 = vmatpush.bf16.msra.mxu0 %v2755
    %2981 = vmatpush.bf16.msra.mxu0 %v2747
    %2982 = vmatpush.bf16.msra.mxu0 %v2739
    %2983 = vmatpush.bf16.msra.mxu0 %v2731
    %2984 = vmatpush.bf16.msra.mxu0 %v2723
    %2985 = vmatpush.bf16.msra.mxu0 %v2715
    %2986 = vmatpush.bf16.msra.mxu0 %v2707
    %2987 = vmatpush.bf16.msra.mxu0 %v2699
    %2988 = vmatmul.bf16.gmra.mxu0 %v2294
    %v2989 = vpop.f32.mrf.mxu0
    %v2990 = vadd.f32 %v2299, %v2989
    %v2991 = vpop.f32.mrf.mxu0
    %2992 = vdwg.mxu0
    %2993 = vmatpush.bf16.msra.mxu0 %v2819
    %2994 = vmatpush.bf16.msra.mxu0 %v2811
    %2995 = vmatpush.bf16.msra.mxu0 %v2803
    %2996 = vmatpush.bf16.msra.mxu0 %v2795
    %2997 = vmatpush.bf16.msra.mxu0 %v2787
    %2998 = vmatpush.bf16.msra.mxu0 %v2779
    %2999 = vmatpush.bf16.msra.mxu0 %v2771
    %3000 = vmatpush.bf16.msra.mxu0 %v2763
    %3001 = vmatmul.bf16.gmra.mxu0 %v2295
    %v3002 = vpop.f32.mrf.mxu0
    %v3003 = vadd.f32 %v2990, %v3002
    %v3004 = vpop.f32.mrf.mxu0
    %3005 = vdwg.mxu0
    %3006 = vmatpush.bf16.msra.mxu0 %v2756
    %3007 = vmatpush.bf16.msra.mxu0 %v2748
    %3008 = vmatpush.bf16.msra.mxu0 %v2740
    %3009 = vmatpush.bf16.msra.mxu0 %v2732
    %3010 = vmatpush.bf16.msra.mxu0 %v2724
    %3011 = vmatpush.bf16.msra.mxu0 %v2716
    %3012 = vmatpush.bf16.msra.mxu0 %v2708
    %3013 = vmatpush.bf16.msra.mxu0 %v2700
    %3014 = vmatmul.bf16.gmra.mxu0 %v2294
    %v3015 = vpop.f32.mrf.mxu0
    %v3016 = vadd.f32 %v2300, %v3015
    %v3017 = vpop.f32.mrf.mxu0
    %3018 = vdwg.mxu0
    %3019 = vmatpush.bf16.msra.mxu0 %v2820
    %3020 = vmatpush.bf16.msra.mxu0 %v2812
    %3021 = vmatpush.bf16.msra.mxu0 %v2804
    %3022 = vmatpush.bf16.msra.mxu0 %v2796
    %3023 = vmatpush.bf16.msra.mxu0 %v2788
    %3024 = vmatpush.bf16.msra.mxu0 %v2780
    %3025 = vmatpush.bf16.msra.mxu0 %v2772
    %3026 = vmatpush.bf16.msra.mxu0 %v2764
    %3027 = vmatmul.bf16.gmra.mxu0 %v2295
    %v3028 = vpop.f32.mrf.mxu0
    %v3029 = vadd.f32 %v3016, %v3028
    %v3030 = vpop.f32.mrf.mxu0
    %3031 = vdwg.mxu0
    %3032 = vmatpush.bf16.msra.mxu0 %v2757
    %3033 = vmatpush.bf16.msra.mxu0 %v2749
    %3034 = vmatpush.bf16.msra.mxu0 %v2741
    %3035 = vmatpush.bf16.msra.mxu0 %v2733
    %3036 = vmatpush.bf16.msra.mxu0 %v2725
    %3037 = vmatpush.bf16.msra.mxu0 %v2717
    %3038 = vmatpush.bf16.msra.mxu0 %v2709
    %3039 = vmatpush.bf16.msra.mxu0 %v2701
    %3040 = vmatmul.bf16.gmra.mxu0 %v2294
    %v3041 = vpop.f32.mrf.mxu0
    %v3042 = vadd.f32 %v2301, %v3041
    %v3043 = vpop.f32.mrf.mxu0
    %3044 = vdwg.mxu0
    %3045 = vmatpush.bf16.msra.mxu0 %v2821
    %3046 = vmatpush.bf16.msra.mxu0 %v2813
    %3047 = vmatpush.bf16.msra.mxu0 %v2805
    %3048 = vmatpush.bf16.msra.mxu0 %v2797
    %3049 = vmatpush.bf16.msra.mxu0 %v2789
    %3050 = vmatpush.bf16.msra.mxu0 %v2781
    %3051 = vmatpush.bf16.msra.mxu0 %v2773
    %3052 = vmatpush.bf16.msra.mxu0 %v2765
    %3053 = vmatmul.bf16.gmra.mxu0 %v2295
    %v3054 = vpop.f32.mrf.mxu0
    %v3055 = vadd.f32 %v3042, %v3054
    %v3056 = vpop.f32.mrf.mxu0
    %3057 = vdwg.mxu0
    %3058 = vmatpush.bf16.msra.mxu0 %v2758
    %3059 = vmatpush.bf16.msra.mxu0 %v2750
    %3060 = vmatpush.bf16.msra.mxu0 %v2742
    %3061 = vmatpush.bf16.msra.mxu0 %v2734
    %3062 = vmatpush.bf16.msra.mxu0 %v2726
    %3063 = vmatpush.bf16.msra.mxu0 %v2718
    %3064 = vmatpush.bf16.msra.mxu0 %v2710
    %3065 = vmatpush.bf16.msra.mxu0 %v2702
    %3066 = vmatmul.bf16.gmra.mxu0 %v2294
    %v3067 = vpop.f32.mrf.mxu0
    %v3068 = vadd.f32 %v2302, %v3067
    %v3069 = vpop.f32.mrf.mxu0
    %3070 = vdwg.mxu0
    %3071 = vmatpush.bf16.msra.mxu0 %v2822
    %3072 = vmatpush.bf16.msra.mxu0 %v2814
    %3073 = vmatpush.bf16.msra.mxu0 %v2806
    %3074 = vmatpush.bf16.msra.mxu0 %v2798
    %3075 = vmatpush.bf16.msra.mxu0 %v2790
    %3076 = vmatpush.bf16.msra.mxu0 %v2782
    %3077 = vmatpush.bf16.msra.mxu0 %v2774
    %3078 = vmatpush.bf16.msra.mxu0 %v2766
    %3079 = vmatmul.bf16.gmra.mxu0 %v2295
    %v3080 = vpop.f32.mrf.mxu0
    %v3081 = vadd.f32 %v3068, %v3080
    %v3082 = vpop.f32.mrf.mxu0
    %3083 = vdwg.mxu0
    %3084 = vmatpush.bf16.msra.mxu0 %v2759
    %3085 = vmatpush.bf16.msra.mxu0 %v2751
    %3086 = vmatpush.bf16.msra.mxu0 %v2743
    %3087 = vmatpush.bf16.msra.mxu0 %v2735
    %3088 = vmatpush.bf16.msra.mxu0 %v2727
    %3089 = vmatpush.bf16.msra.mxu0 %v2719
    %3090 = vmatpush.bf16.msra.mxu0 %v2711
    %3091 = vmatpush.bf16.msra.mxu0 %v2703
    %3092 = vmatmul.bf16.gmra.mxu0 %v2294
    %v3093 = vpop.f32.mrf.mxu0
    %v3094 = vadd.f32 %v2303, %v3093
    %v3095 = vpop.f32.mrf.mxu0
    %3096 = vdwg.mxu0
    %3097 = vmatpush.bf16.msra.mxu0 %v2823
    %3098 = vmatpush.bf16.msra.mxu0 %v2815
    %3099 = vmatpush.bf16.msra.mxu0 %v2807
    %3100 = vmatpush.bf16.msra.mxu0 %v2799
    %3101 = vmatpush.bf16.msra.mxu0 %v2791
    %3102 = vmatpush.bf16.msra.mxu0 %v2783
    %3103 = vmatpush.bf16.msra.mxu0 %v2775
    %3104 = vmatpush.bf16.msra.mxu0 %v2767
    %3105 = vmatmul.bf16.gmra.mxu0 %v2295
    %v3106 = vpop.f32.mrf.mxu0
    %v3107 = vadd.f32 %v3094, %v3106
    %v3108 = vpop.f32.mrf.mxu0
    %3109 = vdwg.mxu0
    %3110 = vmatpush.bf16.msra.mxu0 %v2760
    %3111 = vmatpush.bf16.msra.mxu0 %v2752
    %3112 = vmatpush.bf16.msra.mxu0 %v2744
    %3113 = vmatpush.bf16.msra.mxu0 %v2736
    %3114 = vmatpush.bf16.msra.mxu0 %v2728
    %3115 = vmatpush.bf16.msra.mxu0 %v2720
    %3116 = vmatpush.bf16.msra.mxu0 %v2712
    %3117 = vmatpush.bf16.msra.mxu0 %v2704
    %3118 = vmatmul.bf16.gmra.mxu0 %v2294
    %v3119 = vpop.f32.mrf.mxu0
    %v3120 = vadd.f32 %v2304, %v3119
    %v3121 = vpop.f32.mrf.mxu0
    %3122 = vdwg.mxu0
    %3123 = vmatpush.bf16.msra.mxu0 %v2824
    %3124 = vmatpush.bf16.msra.mxu0 %v2816
    %3125 = vmatpush.bf16.msra.mxu0 %v2808
    %3126 = vmatpush.bf16.msra.mxu0 %v2800
    %3127 = vmatpush.bf16.msra.mxu0 %v2792
    %3128 = vmatpush.bf16.msra.mxu0 %v2784
    %3129 = vmatpush.bf16.msra.mxu0 %v2776
    %3130 = vmatpush.bf16.msra.mxu0 %v2768
    %3131 = vmatmul.bf16.gmra.mxu0 %v2295
    %v3132 = vpop.f32.mrf.mxu0
    %v3133 = vadd.f32 %v3120, %v3132
    %v3134 = vpop.f32.mrf.mxu0
    %3135 = vdwg.mxu0
    %3136 = vmatpush.bf16.msra.mxu0 %v2761
    %3137 = vmatpush.bf16.msra.mxu0 %v2753
    %3138 = vmatpush.bf16.msra.mxu0 %v2745
    %3139 = vmatpush.bf16.msra.mxu0 %v2737
    %3140 = vmatpush.bf16.msra.mxu0 %v2729
    %3141 = vmatpush.bf16.msra.mxu0 %v2721
    %3142 = vmatpush.bf16.msra.mxu0 %v2713
    %3143 = vmatpush.bf16.msra.mxu0 %v2705
    %3144 = vmatmul.bf16.gmra.mxu0 %v2294
    %v3145 = vpop.f32.mrf.mxu0
    %v3146 = vadd.f32 %v2305, %v3145
    %v3147 = vpop.f32.mrf.mxu0
    %3148 = vdwg.mxu0
    %3149 = vmatpush.bf16.msra.mxu0 %v2825
    %3150 = vmatpush.bf16.msra.mxu0 %v2817
    %3151 = vmatpush.bf16.msra.mxu0 %v2809
    %3152 = vmatpush.bf16.msra.mxu0 %v2801
    %3153 = vmatpush.bf16.msra.mxu0 %v2793
    %3154 = vmatpush.bf16.msra.mxu0 %v2785
    %3155 = vmatpush.bf16.msra.mxu0 %v2777
    %3156 = vmatpush.bf16.msra.mxu0 %v2769
    %3157 = vmatmul.bf16.gmra.mxu0 %v2295
    %v3158 = vpop.f32.mrf.mxu0
    %v3159 = vadd.f32 %v3146, %v3158
    %v3160 = vpop.f32.mrf.mxu0
    %3161 = vdwg.mxu0
    %v3162 = vxor.u32 %v2977, 2147483648
    %v3163 = vxor.u32 %v3003, 2147483648
    %v3164 = vxor.u32 %v3029, 2147483648
    %v3165 = vxor.u32 %v3055, 2147483648
    %v3166 = vxor.u32 %v3081, 2147483648
    %v3167 = vxor.u32 %v3107, 2147483648
    %v3168 = vxor.u32 %v3133, 2147483648
    %v3169 = vxor.u32 %v3159, 2147483648
    %v3170 = vmul.f32 %v3162, 1.442695
    %v3171 = vpow.pop %v3170
    %v3172 = vmul.f32 %v3163, 1.442695
    %v3173 = vpow.pop %v3172
    %v3174 = vmul.f32 %v3164, 1.442695
    %v3175 = vpow.pop %v3174
    %v3176 = vmul.f32 %v3165, 1.442695
    %v3177 = vpow.pop %v3176
    %v3178 = vmul.f32 %v3166, 1.442695
    %v3179 = vpow.pop %v3178
    %v3180 = vmul.f32 %v3167, 1.442695
    %v3181 = vpow.pop %v3180
    %v3182 = vmul.f32 %v3168, 1.442695
    %v3183 = vpow.pop %v3182
    %v3184 = vmul.f32 %v3169, 1.442695
    %v3185 = vpow.pop %v3184
    %v3186 = vadd.f32 %v3171, 1.0
    %v3187 = vadd.f32 %v3173, 1.0
    %v3188 = vadd.f32 %v3175, 1.0
    %v3189 = vadd.f32 %v3177, 1.0
    %v3190 = vadd.f32 %v3179, 1.0
    %v3191 = vadd.f32 %v3181, 1.0
    %v3192 = vadd.f32 %v3183, 1.0
    %v3193 = vadd.f32 %v3185, 1.0
    %v3194 = vrcp.pop %v3186
    %v3195 = vmul.f32 %v3186, %v3194
    %v3196 = vsub.f32 1.0, %v3195
    %v3197 = vmul.f32 %v3194, %v3196
    %v3198 = vadd.f32 %v3194, %v3197
    %vm3199 = vweird.f32 %v3186
    %vm3200 = vweird.f32 %v3194
    %vm3201 = vmor %vm3199, %vm3200
    %v3202 = vsel %vm3201, %v3194, %v3198
    %v3203 = vand.u32 2147483647, %v3186
    %vm3204 = vcmp.eq.f32.partialorder %v3203, 8.507059e+37
    %v3205 = vand.u32 %v3186, 2147483648
    %v3206 = vor.u32 1.1754944e-38, %v3205
    %v3207 = vsel %vm3204, %v3206, %v3202
    %v3208 = vmul.f32 1.0, %v3207
    %v3209 = vrcp.pop %v3187
    %v3210 = vmul.f32 %v3187, %v3209
    %v3211 = vsub.f32 1.0, %v3210
    %v3212 = vmul.f32 %v3209, %v3211
    %v3213 = vadd.f32 %v3209, %v3212
    %vm3214 = vweird.f32 %v3187
    %vm3215 = vweird.f32 %v3209
    %vm3216 = vmor %vm3214, %vm3215
    %v3217 = vsel %vm3216, %v3209, %v3213
    %v3218 = vand.u32 2147483647, %v3187
    %vm3219 = vcmp.eq.f32.partialorder %v3218, 8.507059e+37
    %v3220 = vand.u32 %v3187, 2147483648
    %v3221 = vor.u32 1.1754944e-38, %v3220
    %v3222 = vsel %vm3219, %v3221, %v3217
    %v3223 = vmul.f32 1.0, %v3222
    %v3224 = vrcp.pop %v3188
    %v3225 = vmul.f32 %v3188, %v3224
    %v3226 = vsub.f32 1.0, %v3225
    %v3227 = vmul.f32 %v3224, %v3226
    %v3228 = vadd.f32 %v3224, %v3227
    %vm3229 = vweird.f32 %v3188
    %vm3230 = vweird.f32 %v3224
    %vm3231 = vmor %vm3229, %vm3230
    %v3232 = vsel %vm3231, %v3224, %v3228
    %v3233 = vand.u32 2147483647, %v3188
    %vm3234 = vcmp.eq.f32.partialorder %v3233, 8.507059e+37
    %v3235 = vand.u32 %v3188, 2147483648
    %v3236 = vor.u32 1.1754944e-38, %v3235
    %v3237 = vsel %vm3234, %v3236, %v3232
    %v3238 = vmul.f32 1.0, %v3237
    %v3239 = vrcp.pop %v3189
    %v3240 = vmul.f32 %v3189, %v3239
    %v3241 = vsub.f32 1.0, %v3240
    %v3242 = vmul.f32 %v3239, %v3241
    %v3243 = vadd.f32 %v3239, %v3242
    %vm3244 = vweird.f32 %v3189
    %vm3245 = vweird.f32 %v3239
    %vm3246 = vmor %vm3244, %vm3245
    %v3247 = vsel %vm3246, %v3239, %v3243
    %v3248 = vand.u32 2147483647, %v3189
    %vm3249 = vcmp.eq.f32.partialorder %v3248, 8.507059e+37
    %v3250 = vand.u32 %v3189, 2147483648
    %v3251 = vor.u32 1.1754944e-38, %v3250
    %v3252 = vsel %vm3249, %v3251, %v3247
    %v3253 = vmul.f32 1.0, %v3252
    %v3254 = vrcp.pop %v3190
    %v3255 = vmul.f32 %v3190, %v3254
    %v3256 = vsub.f32 1.0, %v3255
    %v3257 = vmul.f32 %v3254, %v3256
    %v3258 = vadd.f32 %v3254, %v3257
    %vm3259 = vweird.f32 %v3190
    %vm3260 = vweird.f32 %v3254
    %vm3261 = vmor %vm3259, %vm3260
    %v3262 = vsel %vm3261, %v3254, %v3258
    %v3263 = vand.u32 2147483647, %v3190
    %vm3264 = vcmp.eq.f32.partialorder %v3263, 8.507059e+37
    %v3265 = vand.u32 %v3190, 2147483648
    %v3266 = vor.u32 1.1754944e-38, %v3265
    %v3267 = vsel %vm3264, %v3266, %v3262
    %v3268 = vmul.f32 1.0, %v3267
    %v3269 = vrcp.pop %v3191
    %v3270 = vmul.f32 %v3191, %v3269
    %v3271 = vsub.f32 1.0, %v3270
    %v3272 = vmul.f32 %v3269, %v3271
    %v3273 = vadd.f32 %v3269, %v3272
    %vm3274 = vweird.f32 %v3191
    %vm3275 = vweird.f32 %v3269
    %vm3276 = vmor %vm3274, %vm3275
    %v3277 = vsel %vm3276, %v3269, %v3273
    %v3278 = vand.u32 2147483647, %v3191
    %vm3279 = vcmp.eq.f32.partialorder %v3278, 8.507059e+37
    %v3280 = vand.u32 %v3191, 2147483648
    %v3281 = vor.u32 1.1754944e-38, %v3280
    %v3282 = vsel %vm3279, %v3281, %v3277
    %v3283 = vmul.f32 1.0, %v3282
    %v3284 = vrcp.pop %v3192
    %v3285 = vmul.f32 %v3192, %v3284
    %v3286 = vsub.f32 1.0, %v3285
    %v3287 = vmul.f32 %v3284, %v3286
    %v3288 = vadd.f32 %v3284, %v3287
    %vm3289 = vweird.f32 %v3192
    %vm3290 = vweird.f32 %v3284
    %vm3291 = vmor %vm3289, %vm3290
    %v3292 = vsel %vm3291, %v3284, %v3288
    %v3293 = vand.u32 2147483647, %v3192
    %vm3294 = vcmp.eq.f32.partialorder %v3293, 8.507059e+37
    %v3295 = vand.u32 %v3192, 2147483648
    %v3296 = vor.u32 1.1754944e-38, %v3295
    %v3297 = vsel %vm3294, %v3296, %v3292
    %v3298 = vmul.f32 1.0, %v3297
    %v3299 = vrcp.pop %v3193
    %v3300 = vmul.f32 %v3193, %v3299
    %v3301 = vsub.f32 1.0, %v3300
    %v3302 = vmul.f32 %v3299, %v3301
    %v3303 = vadd.f32 %v3299, %v3302
    %vm3304 = vweird.f32 %v3193
    %vm3305 = vweird.f32 %v3299
    %vm3306 = vmor %vm3304, %vm3305
    %v3307 = vsel %vm3306, %v3299, %v3303
    %v3308 = vand.u32 2147483647, %v3193
    %vm3309 = vcmp.eq.f32.partialorder %v3308, 8.507059e+37
    %v3310 = vand.u32 %v3193, 2147483648
    %v3311 = vor.u32 1.1754944e-38, %v3310
    %v3312 = vsel %vm3309, %v3311, %v3307
    %v3313 = vmul.f32 1.0, %v3312
    %v3322 = vrot.slane %v3223, 6
    %v3323 = vrot.slane %v3238, 4
    %v3324 = vrot.slane %v3253, 2
    %v3325 = vrot.slane %v3283, 6
    %v3326 = vrot.slane %v3298, 4
    %v3327 = vrot.slane %v3313, 2
    %v3328 = vsel %vm205, %v3208, %v3322
    %vm3329 = vcmask 1045508
    %v3330 = vsel %vm3329, %v3323, %v3324
    %vm3331 = vcmask 1043456
    %v3332 = vsel %vm3331, %v3328, %v3330
    %v3333 = vsel %vm205, %v3268, %v3325
    %v3334 = vsel %vm3329, %v3326, %v3327
    %v3335 = vsel %vm3331, %v3333, %v3334
    %3338 = vst [vmem:[%s15] sm:$0xff] %v3332
    %3339 = vst [vmem:[%s15 + $0x8] sm:$0xff] %v3335
    %3340 = vst [vmem:[%s16] sm:$0x3] %v1755
    // Predicated region
    $region94: #{cvae_forward.1} parent=1 // pred_check
      _
    $region95: #{cvae_forward.1} parent=1 // pred_check_branch
      %3342 = sbr.rel (0) target = $region97
    $region96: #{cvae_forward.1} parent=1 // pred_region
      _
    $region97: #{cvae_forward.1} parent=1 // pred_fallthru
      _
    // Predicated region
    $region98: #{cvae_forward.1} parent=1 // pred_check
      _
    $region99: #{cvae_forward.1} parent=1 // pred_check_branch
      %3344 = sbr.rel (0) target = $region101
    $region100: #{cvae_forward.1} parent=1 // pred_region
      _
    $region101: #{cvae_forward.1} parent=1 // pred_fallthru
      _
    // Predicated region
    $region102: #{cvae_forward.1} parent=1 // pred_check
      _
    $region103: #{cvae_forward.1} parent=1 // pred_check_branch
      %3346 = sbr.rel (0) target = $region105
    $region104: #{cvae_forward.1} parent=1 // pred_region
      _
    $region105: #{cvae_forward.1} parent=1 // pred_fallthru
      _
    // Predicated region
    $region106: #{cvae_forward.1} parent=1 // pred_check
      _
    $region107: #{cvae_forward.1} parent=1 // pred_check_branch
      %3348 = sbr.rel (0) target = $region109
    $region108: #{cvae_forward.1} parent=1 // pred_region
      _
    $region109: #{cvae_forward.1} parent=1 // pred_fallthru
      _
    %3349 = vsyncpa [#allocation5], 1
    %3350 = vsyncpa [#allocation7], 1
    %3351 = vsyncpa [#allocation10], 1
    %3352 = vsyncpa [#allocation13], 1
    %3353 = vsyncpa [#allocation16], 1
  %3354 = vsyncmov [#allocation3]
  %s3355 = vpop.sfrf %3354
  %p3356 = scmp.eq.s32.totalorder %s3355, 0
  %p3357 = pneg %p3356
  %3359 = shalt.err (%p3357)

</llo_original>
